<compile_context>
chip_gen: v6e
topology: v6e:2x2x1
jax: 0.10.0
libtpu: 0.0.40
codegen_flags: <defaults>
</compile_context>

<pallas_src>
import math
from functools import partial

import jax
import jax.numpy as jnp
from jax.experimental import pallas as pl
from jax.experimental.pallas import tpu as pltpu

# ---------------- small synthetic configuration ----------------
BATCH = 2
IMG_C, IMG_H, IMG_W = 3, 16, 16          # NCHW image
PATCH = 8
NUM_PATCHES = (IMG_H // PATCH) * (IMG_W // PATCH)   # 4
VISION_WIDTH = 32
TEXT_WIDTH = 32
EMBED_DIM = 16
QUEUE_SIZE = 8                            # queue_size % batch == 0
SEQ_LEN = 8
VOCAB = 50
ENC_TOKEN_ID = 1
TEMP_INIT = 0.07

_QUEUE_TILE = 4096                        # B+Q column tile at production sizes


# ---------------- Pallas helpers ----------------
def _rep_spec(shape):
    """Resident block: same block index at every grid step (1-D grid)."""
    return pl.BlockSpec(shape, lambda k, _n=len(shape): (0,) * _n)


def _dot(a, b):
    return jnp.dot(a, b, preferred_element_type=jnp.float32)


def _dot_nt(a, b):
    """a @ b.T via dot_general contracting last dims (no in-kernel transpose)."""
    return jax.lax.dot_general(a, b, (((1,), (1,)), ((), ())),
                               preferred_element_type=jnp.float32)


def _tile(dim, pref):
    """Largest clean tile <= pref; falls back to the full dim (toy shapes)."""
    if dim <= pref:
        return dim
    return pref if dim % pref == 0 else dim


# ---------------- in-kernel digamma / lgamma (inputs >= 1 in the EDL loss) ----------------
_N_SHIFT = 3   # alpha = relu(sim/temp)+1 >= 1, so 3 recurrence shifts keep |err| < ~1e-6 in f32


def _digamma(x):
    shift = jnp.zeros_like(x)
    z = x
    for _ in range(_N_SHIFT):                 # psi(x) = psi(x+1) - 1/x
        shift = shift + 1.0 / z
        z = z + 1.0
    zi = 1.0 / z
    zi2 = zi * zi
    return (jnp.log(z) - 0.5 * zi - zi2 * (1.0 / 12.0) + zi2 * zi2 * (1.0 / 120.0)
            - zi2 * zi2 * zi2 * (1.0 / 252.0) - shift)


def _lgamma(x):
    shift = jnp.zeros_like(x)
    z = x
    for _ in range(_N_SHIFT):                 # lgamma(x) = lgamma(x+1) - log(x)
        shift = shift + jnp.log(z)
        z = z + 1.0
    zi = 1.0 / z
    zi2 = zi * zi
    series = zi * (1.0 / 12.0) - zi * zi2 * (1.0 / 360.0) + zi * zi2 * zi2 * (1.0 / 1260.0)
    return ((z - 0.5) * jnp.log(z) - z + 0.5 * math.log(2.0 * math.pi)
            + series - shift)


def _edl_tile_stats(logits, y, annealing_coef):
    """Per-row partial sums of the evidential-digamma loss for one column tile.

    digamma(alpha)/lgamma(alpha) are computed ONCE per element; the kl_alpha
    terms are recovered via (1-y) masks since kl_alpha == 1 where y == 1 and
    == alpha where y == 0 (y is 0/1).
    Returns (S, sum_y, sum_ka, lin) each [B, 1].
    """
    alpha = jnp.maximum(logits, 0.0) + 1.0           # relu_evidence + 1
    dg = _digamma(alpha)
    lg = _lgamma(alpha)
    one_m_y = 1.0 - y
    s = jnp.sum(alpha, axis=1, keepdims=True)
    sy = jnp.sum(y, axis=1, keepdims=True)
    ska = jnp.sum((alpha - 1.0) * one_m_y + 1.0, axis=1, keepdims=True)
    lin = jnp.sum(-y * dg + annealing_coef * (one_m_y * ((alpha - 1.0) * dg - lg)),
                  axis=1, keepdims=True)
    return s, sy, ska, lin


def _edl_finalize(s, sy, ska, lin, annealing_coef, lgamma_nc, num_classes_f):
    """Mean-over-rows evidential loss from accumulated row statistics."""
    per_row = (_digamma(s) * sy + lin
               + annealing_coef * (_lgamma(ska) - lgamma_nc
                                   - _digamma(ska) * (ska - num_classes_f)))
    return jnp.sum(per_row, axis=0, keepdims=True) * (1.0 / per_row.shape[0])   # (1, 1)


def _softmax_rows(x):
    m = jnp.max(x, axis=1, keepdims=True)
    e = jnp.exp(x - m)
    return e * pl.reciprocal(jnp.sum(e, axis=1, keepdims=True), approx=True)


# ---------------- kernel 1: tiled linear (patch embed) ----------------
def _linear_kernel(x_ref, w_ref, b_ref, o_ref, acc_ref):
    @pl.when(pl.program_id(2) == 0)
    def _():
        acc_ref[...] = jnp.zeros_like(acc_ref)
    acc_ref[...] += _dot(x_ref[...], w_ref[...])

    @pl.when(pl.program_id(2) == pl.num_programs(2) - 1)
    def _():
        o_ref[...] = acc_ref[...] + b_ref[...]


def pallas_linear(x, w, b):
    M, K = x.shape
    N = w.shape[1]
    tm, tn, tk = _tile(M, 128), _tile(N, 128), _tile(K, 512)
    return pl.pallas_call(
        _linear_kernel,
        out_shape=jax.ShapeDtypeStruct((M, N), jnp.float32),
        grid=(M // tm, N // tn, K // tk),
        in_specs=[pl.BlockSpec((tm, tk), lambda i, j, k: (i, k)),
                  pl.BlockSpec((tk, tn), lambda i, j, k: (k, j)),
                  pl.BlockSpec((1, tn), lambda i, j, k: (0, j))],
        out_specs=pl.BlockSpec((tm, tn), lambda i, j, k: (i, j)),
        scratch_shapes=[pltpu.VMEM((tm, tn), jnp.float32)],
        compiler_params=pltpu.CompilerParams(
            dimension_semantics=("parallel", "parallel", "arbitrary")),
    )(x, w, b.reshape(1, N))


# ---------------- kernel 2: tiled text dense (mode='text'), mask fused ----------------
def _text_dense_kernel(x_ref, w_ref, b_ref, m_ref, o_ref, acc_ref):
    @pl.when(pl.program_id(2) == 0)
    def _():
        acc_ref[...] = jnp.zeros_like(acc_ref)
    acc_ref[...] += _dot(x_ref[...], w_ref[...])

    @pl.when(pl.program_id(2) == pl.num_programs(2) - 1)
    def _():
        o_ref[...] = (acc_ref[...] + b_ref[...]) * m_ref[...]


def pallas_text_dense(emb_flat, mask_flat, w, b):
    M, K = emb_flat.shape
    N = w.shape[1]
    tm, tn, tk = _tile(M, 128), _tile(N, 128), _tile(K, 512)
    return pl.pallas_call(
        _text_dense_kernel,
        out_shape=jax.ShapeDtypeStruct((M, N), jnp.float32),
        grid=(M // tm, N // tn, K // tk),
        in_specs=[pl.BlockSpec((tm, tk), lambda i, j, k: (i, k)),
                  pl.BlockSpec((tk, tn), lambda i, j, k: (k, j)),
                  pl.BlockSpec((1, tn), lambda i, j, k: (0, j)),
                  pl.BlockSpec((tm, 1), lambda i, j, k: (i, 0))],
        out_specs=pl.BlockSpec((tm, tn), lambda i, j, k: (i, j)),
        scratch_shapes=[pltpu.VMEM((tm, tn), jnp.float32)],
        compiler_params=pltpu.CompilerParams(
            dimension_semantics=("parallel", "parallel", "arbitrary")),
    )(emb_flat, w, b.reshape(1, N), mask_flat)


# ---------------- kernel 3: pos+neg text dense with cross context (per-sequence grid) -------
def _text_cross_kernel(emb_ref, mask_ref, ctx_ref, w_ref, b_ref, cw_ref, cb_ref, o_ref):
    h = _dot(emb_ref[0], w_ref[...]) + b_ref[...]            # [L, N]
    h = h * mask_ref[0]                                      # row mask [L, 1]
    ctx = _dot(ctx_ref[0], cw_ref[...]) + cb_ref[...]        # [1, N] cross-modal context
    o_ref[0] = h + ctx                                       # broadcast over the L rows


def pallas_text_dense_cross(emb_seq, mask_seq, ctx_mean, w, b, cw, cb):
    S3, L, K = emb_seq.shape
    N = w.shape[1]
    Dv = ctx_mean.shape[-1]
    return pl.pallas_call(
        _text_cross_kernel,
        out_shape=jax.ShapeDtypeStruct((S3, L, N), jnp.float32),
        grid=(S3,),
        in_specs=[pl.BlockSpec((1, L, K), lambda s: (s, 0, 0)),
                  pl.BlockSpec((1, L, 1), lambda s: (s, 0, 0)),
                  pl.BlockSpec((1, 1, Dv), lambda s: (s, 0, 0)),
                  pl.BlockSpec((K, N), lambda s: (0, 0)),
                  pl.BlockSpec((1, N), lambda s: (0, 0)),
                  pl.BlockSpec((Dv, N), lambda s: (0, 0)),
                  pl.BlockSpec((1, N), lambda s: (0, 0))],
        out_specs=pl.BlockSpec((1, L, N), lambda s: (s, 0, 0)),
        compiler_params=pltpu.CompilerParams(dimension_semantics=("parallel",)),
    )(emb_seq, mask_seq, ctx_mean, w, b.reshape(1, N), cw, cb.reshape(1, N))


# ---------------- kernel 4: fused proj+norm + queue-tiled sims + EDL loss + neg weights ------
def _ita_kernel(annealing_coef, lgamma_nc, num_classes_f,
                tinv_ref,
                xi_ref, wi_ref, bi_ref, xt_ref, wt_ref, bt_ref,
                ysame_ref, tq_ref, iq_ref, yq_ref,
                loss_ref, wi2t_ref, wt2i_ref, imgf_ref, txtf_ref,
                s_i, sy_i, ska_i, lin_i, s_t, sy_t, ska_t, lin_t):
    k = pl.program_id(0)
    tinv = tinv_ref[0, 0]

    @pl.when(k == 0)
    def _init():
        # fused vision/text projection + L2 normalize (F.normalize semantics)
        vi = _dot(xi_ref[...], wi_ref[...]) + bi_ref[...]
        vt = _dot(xt_ref[...], wt_ref[...]) + bt_ref[...]
        ni = jnp.sqrt(jnp.sum(vi * vi, axis=-1, keepdims=True))
        nt = jnp.sqrt(jnp.sum(vt * vt, axis=-1, keepdims=True))
        img = vi / jnp.maximum(ni, 1e-12)
        txt = vt / jnp.maximum(nt, 1e-12)
        imgf_ref[...] = img                                  # resident outputs, reused per tile
        txtf_ref[...] = txt

        # local [B, B] sims == first B columns of both queue-augmented sims (f32, exact)
        sim_i2t_loc = _dot_nt(img, txt) * tinv
        # NOTE: mathematically sim_i2t_loc.T; a second tiny MXU pass is kept for
        #       lowering robustness at B=2 (swap for an XLU transpose at real B).
        sim_t2i_loc = _dot_nt(txt, img) * tinv
        ysame = ysame_ref[...]

        # negative-sampling softmax weights with masked_fill on same-idx pairs
        wi2t_ref[...] = jnp.where(ysame > 0.5, 0.0, _softmax_rows(sim_i2t_loc))
        wt2i_ref[...] = jnp.where(ysame > 0.5, 0.0, _softmax_rows(sim_t2i_loc))

        # init per-row EDL accumulators with the local-column contribution
        s, sy, ska, lin = _edl_tile_stats(sim_i2t_loc, ysame, annealing_coef)
        s_i[...], sy_i[...], ska_i[...], lin_i[...] = s, sy, ska, lin
        s, sy, ska, lin = _edl_tile_stats(sim_t2i_loc, ysame, annealing_coef)
        s_t[...], sy_t[...], ska_t[...], lin_t[...] = s, sy, ska, lin

    # ---- queue column tile for this grid step (bf16 stream, f32 accumulate) ----
    img_bf = imgf_ref[...].astype(jnp.bfloat16)
    txt_bf = txtf_ref[...].astype(jnp.bfloat16)
    yq = yq_ref[...]
    sim_i2t_q = _dot(img_bf, tq_ref[...]) * tinv             # [B, tq]
    sim_t2i_q = _dot(txt_bf, iq_ref[...]) * tinv
    s, sy, ska, lin = _edl_tile_stats(sim_i2t_q, yq, annealing_coef)
    s_i[...] += s; sy_i[...] += sy; ska_i[...] += ska; lin_i[...] += lin
    s, sy, ska, lin = _edl_tile_stats(sim_t2i_q, yq, annealing_coef)
    s_t[...] += s; sy_t[...] += sy; ska_t[...] += ska; lin_t[...] += lin

    @pl.when(k == pl.num_programs(0) - 1)
    def _finalize():
        li2t = _edl_finalize(s_i[...], sy_i[...], ska_i[...], lin_i[...],
                             annealing_coef, lgamma_nc, num_classes_f)
        lt2i = _edl_finalize(s_t[...], sy_t[...], ska_t[...], lin_t[...],
                             annealing_coef, lgamma_nc, num_classes_f)
        loss_ref[...] = (li2t + lt2i) * 0.5


def pallas_ita(temp_inv, xi_cls, wi, bi, xt_cls, wt, bt,
               mask_same, text_queue_bf, image_queue_bf, y_queue,
               *, epoch_num, num_classes, annealing_step):
    B, Dv = xi_cls.shape
    Dt = xt_cls.shape[1]
    E = wi.shape[1]
    Q = text_queue_bf.shape[1]
    tq = Q if (Q <= _QUEUE_TILE or Q % _QUEUE_TILE != 0) else _QUEUE_TILE
    nq = Q // tq
    annealing_coef = min(1.0, float(epoch_num) / float(annealing_step))
    kern = partial(_ita_kernel, annealing_coef, math.lgamma(num_classes), float(num_classes))

    loss, wi2t, wt2i, image_feat, text_feat = pl.pallas_call(
        kern,
        grid=(nq,),
        in_specs=[pl.BlockSpec(memory_space=pltpu.MemorySpace.SMEM),   # 1/temp scalar
                  _rep_spec((B, Dv)), _rep_spec((Dv, E)), _rep_spec((1, E)),
                  _rep_spec((B, Dt)), _rep_spec((Dt, E)), _rep_spec((1, E)),
                  _rep_spec((B, B)),
                  pl.BlockSpec((E, tq), lambda k: (0, k)),             # text_queue (bf16)
                  pl.BlockSpec((E, tq), lambda k: (0, k)),             # image_queue (bf16)
                  pl.BlockSpec((B, tq), lambda k: (0, k))],            # queue targets
        out_specs=(_rep_spec((1, 1)), _rep_spec((B, B)), _rep_spec((B, B)),
                   _rep_spec((B, E)), _rep_spec((B, E))),
        out_shape=(jax.ShapeDtypeStruct((1, 1), jnp.float32),
                   jax.ShapeDtypeStruct((B, B), jnp.float32),
                   jax.ShapeDtypeStruct((B, B), jnp.float32),
                   jax.ShapeDtypeStruct((B, E), jnp.float32),
                   jax.ShapeDtypeStruct((B, E), jnp.float32)),
        scratch_shapes=[pltpu.VMEM((B, 1), jnp.float32)] * 8,
        compiler_params=pltpu.CompilerParams(dimension_semantics=("arbitrary",)),
    )(temp_inv, xi_cls, wi, bi.reshape(1, E), xt_cls, wt, bt.reshape(1, E),
      mask_same, text_queue_bf, image_queue_bf, y_queue)
    return loss[0, 0], wi2t, wt2i, image_feat, text_feat


# ---------------- kernel 5: fused ITM head + cross entropy (lane-dense padded classes) ------
def _itm_ce_kernel(num_pos, num_classes, x_ref, w_ref, b_ref, o_ref):
    logits = _dot(x_ref[...], w_ref[...]) + b_ref[...]        # [3B, 128], stays in vregs
    M, C = logits.shape
    row = jax.lax.broadcasted_iota(jnp.int32, (M, C), 0)
    col = jax.lax.broadcasted_iota(jnp.int32, (M, C), 1)
    logits = jnp.where(col < num_classes, logits, -1e30)      # mask padded classes
    labels = jnp.where(row < num_pos, 1, 0)                   # [1]*B ++ [0]*2B
    onehot = (col == labels).astype(jnp.float32)
    m = jnp.max(logits, axis=1, keepdims=True)
    lse = m + jnp.log(jnp.sum(jnp.exp(logits - m), axis=1, keepdims=True))
    nll = lse - jnp.sum(onehot * logits, axis=1, keepdims=True)       # [3B, 1]
    o_ref[...] = jnp.sum(nll, axis=0, keepdims=True) * (1.0 / M)


def pallas_itm_ce(vl_embeddings, w, b, num_pos):
    Dt, C = w.shape
    CP = 128                                                  # lane-dense padded class dim
    w_pad = jnp.zeros((Dt, CP), jnp.float32).at[:, :C].set(w)
    b_pad = jnp.zeros((1, CP), jnp.float32).at[:, :C].set(b.reshape(1, C))
    out = pl.pallas_call(
        partial(_itm_ce_kernel, num_pos, C),
        out_shape=jax.ShapeDtypeStruct((1, 1), jnp.float32),
    )(vl_embeddings, w_pad, b_pad)
    return out[0, 0]


# ---------------- deterministic parameter init ----------------
def init_params(key):
    ks = jax.random.split(key, 10)

    def lin(k, fan_in, fan_out):
        kw, kb = jax.random.split(k)
        s = 1.0 / math.sqrt(fan_in)
        return (jax.random.uniform(kw, (fan_in, fan_out), jnp.float32, -s, s),
                jax.random.uniform(kb, (fan_out,), jnp.float32, -s, s))

    p = {}
    p['patch_w'], p['patch_b'] = lin(ks[0], IMG_C * PATCH * PATCH, VISION_WIDTH)
    p['cls_token'] = 0.02 * jax.random.normal(ks[1], (VISION_WIDTH,), jnp.float32)
    p['tok_emb'] = 0.02 * jax.random.normal(ks[2], (VOCAB, TEXT_WIDTH), jnp.float32)
    p['text_enc_w'], p['text_enc_b'] = lin(ks[3], TEXT_WIDTH, TEXT_WIDTH)
    p['cross_w'], p['cross_b'] = lin(ks[4], VISION_WIDTH, TEXT_WIDTH)
    p['vision_proj_w'], p['vision_proj_b'] = lin(ks[5], VISION_WIDTH, EMBED_DIM)
    p['text_proj_w'], p['text_proj_b'] = lin(ks[6], TEXT_WIDTH, EMBED_DIM)
    p['itm_w'], p['itm_b'] = lin(ks[7], TEXT_WIDTH, 2)
    iq = jax.random.normal(ks[8], (EMBED_DIM, QUEUE_SIZE), jnp.float32)
    tq = jax.random.normal(ks[9], (EMBED_DIM, QUEUE_SIZE), jnp.float32)
    p['image_queue'] = iq / jnp.linalg.norm(iq, axis=0, keepdims=True)
    p['text_queue'] = tq / jnp.linalg.norm(tq, axis=0, keepdims=True)
    p['idx_queue'] = jnp.full((1, QUEUE_SIZE), -100, jnp.int32)
    p['temp'] = jnp.asarray(TEMP_INIT, jnp.float32)
    return p


# ---------------- forward pass ----------------
def blip_retrieval_forward(params, image, input_ids, attention_mask, alpha, idx, key):
    del alpha  # unused by the reference forward pass as well
    B = image.shape[0]
    temp = jnp.clip(params['temp'], 0.001, 0.5)               # self.temp.clamp_(0.001, 0.5)
    temp_inv = (1.0 / temp).reshape(1, 1)                     # scalar reciprocal, once

    # ---- visual encoder (simplified ViT: Pallas patch-embed + learned CLS) ----
    # TODO(synk): image_feat from this stub is input-independent (learned CLS only).
    patches = image.reshape(B, IMG_C, IMG_H // PATCH, PATCH, IMG_W // PATCH, PATCH)
    patches = patches.transpose(0, 2, 4, 1, 3, 5).reshape(B, NUM_PATCHES, IMG_C * PATCH * PATCH)
    pe = pallas_linear(patches.reshape(B * NUM_PATCHES, -1),
                       params['patch_w'], params['patch_b'])
    pe = pe.reshape(B, NUM_PATCHES, VISION_WIDTH)
    cls = jnp.broadcast_to(params['cls_token'][None, None, :], (B, 1, VISION_WIDTH))
    image_embeds = jnp.concatenate([cls, pe], axis=1)                 # [B, 1+P, Dv]
    image_atts = jnp.ones(image_embeds.shape[:-1], jnp.int32)

    # ---- text encoder, mode='text' (simplified BERT: embed + fused dense*mask) ----
    emb_txt = jnp.take(params['tok_emb'], input_ids, axis=0)          # [B, L, Dt]
    mask_txt = attention_mask.astype(jnp.float32).reshape(B * SEQ_LEN, 1)
    text_hidden = pallas_text_dense(emb_txt.reshape(B * SEQ_LEN, TEXT_WIDTH), mask_txt,
                                    params['text_enc_w'], params['text_enc_b'])
    text_hidden = text_hidden.reshape(B, SEQ_LEN, TEXT_WIDTH)

    # ---- ITA loss: proj+norm, queue-tiled sims, EDL loss, negative weights — ONE kernel ----
    idx2 = idx.reshape(-1, 1)
    mask_same = (idx2 == idx2.T).astype(jnp.float32)                  # local pos_idx / fill mask
    y_queue = (idx2 == params['idx_queue']).astype(jnp.float32)       # [B, Q] queue targets
    num_classes = B + QUEUE_SIZE

    loss_ita, weights_i2t, weights_t2i, image_feat, text_feat = pallas_ita(
        temp_inv,
        image_embeds[:, 0, :], params['vision_proj_w'], params['vision_proj_b'],
        text_hidden[:, 0, :], params['text_proj_w'], params['text_proj_b'],
        mask_same,
        params['text_queue'].astype(jnp.bfloat16),                    # bf16 HBM stream
        params['image_queue'].astype(jnp.bfloat16),
        y_queue,
        epoch_num=1, num_classes=num_classes, annealing_step=1000)

    image_feat_m = jax.lax.stop_gradient(image_feat)
    text_feat_m = jax.lax.stop_gradient(text_feat)

    # ---- queue update (functional; world_size == 1 so all_gather is identity) ----
    ptr = 0
    new_image_queue = jax.lax.dynamic_update_slice(params['image_queue'], image_feat_m.T, (0, ptr))
    new_text_queue = jax.lax.dynamic_update_slice(params['text_queue'], text_feat_m.T, (0, ptr))
    new_idx_queue = jax.lax.dynamic_update_slice(params['idx_queue'],
                                                 idx2.T.astype(jnp.int32), (0, ptr))

    # ---- ITM loss ----
    encoder_input_ids = input_ids.at[:, 0].set(ENC_TOKEN_ID)
    # TODO(synk): torch.multinomial is stochastic; sampled with a fixed JAX key instead.
    k1, k2 = jax.random.split(key)
    neg_img = jax.random.categorical(k1, jnp.log(weights_t2i + 1e-20), axis=1)
    neg_txt = jax.random.categorical(k2, jnp.log(weights_i2t + 1e-20), axis=1)

    image_embeds_neg = image_embeds[neg_img]
    text_ids_neg = encoder_input_ids[neg_txt]
    text_atts_neg = attention_mask[neg_txt]

    text_ids_all = jnp.concatenate([encoder_input_ids, text_ids_neg], axis=0)       # [2B, L]
    text_atts_all = jnp.concatenate([attention_mask, text_atts_neg], axis=0)
    image_embeds_all = jnp.concatenate([image_embeds_neg, image_embeds], axis=0)    # [2B, 1+P, Dv]
    _image_atts_all = jnp.concatenate([image_atts, image_atts], axis=0)  # kept for fidelity

    # batched pos+neg cross-modal text encoder: 3B sequences, ctx broadcast in-kernel
    ids_cat = jnp.concatenate([encoder_input_ids, text_ids_all], axis=0)            # [3B, L]
    atts_cat = jnp.concatenate([attention_mask, text_atts_all], axis=0)             # [3B, L]
    enc_hidden_cat = jnp.concatenate([image_embeds, image_embeds_all], axis=0)      # [3B, 1+P, Dv]

    emb_cat = jnp.take(params['tok_emb'], ids_cat, axis=0)                          # [3B, L, Dt]
    mask_cat = atts_cat.astype(jnp.float32)[:, :, None]                             # [3B, L, 1]
    ctx_mean = jnp.mean(enc_hidden_cat, axis=1)[:, None, :]                         # [3B, 1, Dv]

    hidden_cat = pallas_text_dense_cross(emb_cat, mask_cat, ctx_mean,
                                         params['text_enc_w'], params['text_enc_b'],
                                         params['cross_w'], params['cross_b'])      # [3B, L, Dt]

    # rows 0..B-1 are output_pos, rows B..3B-1 are output_neg → CLS tokens in order
    vl_embeddings = hidden_cat[:, 0, :]                                             # [3B, Dt]
    loss_itm = pallas_itm_ce(vl_embeddings, params['itm_w'], params['itm_b'], num_pos=B)

    new_state = dict(image_queue=new_image_queue, text_queue=new_text_queue,
                     idx_queue=new_idx_queue, ptr=(ptr + B) % QUEUE_SIZE)
    return loss_ita, loss_itm, new_state


if __name__ == "__main__":
    key = jax.random.PRNGKey(0)
    k_param, k_img, k_ids, k_samp = jax.random.split(key, 4)

    params = init_params(k_param)
    image = jax.random.normal(k_img, (BATCH, IMG_C, IMG_H, IMG_W), jnp.float32)
    # TODO(synk): BertTokenizer on raw caption strings is external; deterministic token ids used.
    input_ids = jax.random.randint(k_ids, (BATCH, SEQ_LEN), 2, VOCAB, dtype=jnp.int32)
    input_ids = input_ids.at[:, 0].set(0)                 # CLS-like token at position 0
    attention_mask = jnp.ones((BATCH, SEQ_LEN), jnp.int32)
    alpha = 0.4
    idx = jnp.arange(BATCH, dtype=jnp.int32)

    loss_ita, loss_itm, _ = jax.jit(blip_retrieval_forward)(
        params, image, input_ids, attention_mask, alpha, idx, k_samp)
    jax.block_until_ready((loss_ita, loss_itm))
    print("KERNEL_OK")
</pallas_src>

<mosaic_0001>
module attributes {stable_mosaic.version = 11 : i64} {
  func.func @_text_dense_kernel(%arg0: i32, %arg1: i32, %arg2: i32, %arg3: memref<16x32xf32, #tpu.memory_space<vmem>>, %arg4: memref<32x32xf32, #tpu.memory_space<vmem>>, %arg5: memref<1x32xf32, #tpu.memory_space<vmem>>, %arg6: memref<16x1xf32, #tpu.memory_space<vmem>>, %arg7: memref<16x32xf32, #tpu.memory_space<vmem>>, %arg8: memref<16x32xf32, #tpu.memory_space<vmem>>) attributes {dimension_semantics = [#tpu.dimension_semantics<parallel>, #tpu.dimension_semantics<parallel>, #tpu.dimension_semantics<arbitrary>], iteration_bounds = array<i64: 1, 1, 1>, scalar_prefetch = 0 : i64, scratch_operands = 1 : i64, tpu.core_type = #tpu.core_type<tc>, window_params = [{transform_indices = @transform_0, window_bounds = array<i64: 16, 32>}, {transform_indices = @transform_1, window_bounds = array<i64: 32, 32>}, {transform_indices = @transform_2, window_bounds = array<i64: 1, 32>}, {transform_indices = @transform_3, window_bounds = array<i64: 16, 1>}, {transform_indices = @transform_4, window_bounds = array<i64: 16, 32>}]} {
    %c0_i32 = arith.constant 0 : i32
    %0 = arith.cmpi eq, %arg2, %c0_i32 : i32
    %1 = arith.extui %0 : i1 to i32
    %c0_i32_0 = arith.constant 0 : i32
    %2 = arith.cmpi ne, %1, %c0_i32_0 : i32
    scf.if %2 {
      %cst_10 = arith.constant 0.000000e+00 : f32
      %12 = vector.broadcast %cst_10 : f32 to vector<16x32xf32>
      %c0_11 = arith.constant 0 : index
      %c0_12 = arith.constant 0 : index
      %13 = vector.load %arg8[%c0_11, %c0_12] : memref<16x32xf32, #tpu.memory_space<vmem>>, vector<16x32xf32>
      tpu.vector_store %arg8[%c0_11, %c0_12], %12 {strides = array<i32>} : memref<16x32xf32, #tpu.memory_space<vmem>>, vector<16x32xf32>,
    } else {
    }
    %c0 = arith.constant 0 : index
    %c0_1 = arith.constant 0 : index
    %3 = vector.load %arg8[%c0, %c0_1] : memref<16x32xf32, #tpu.memory_space<vmem>>, vector<16x32xf32>
    %c0_2 = arith.constant 0 : index
    %c0_3 = arith.constant 0 : index
    %4 = vector.load %arg3[%c0_2, %c0_3] : memref<16x32xf32, #tpu.memory_space<vmem>>, vector<16x32xf32>
    %c0_4 = arith.constant 0 : index
    %c0_5 = arith.constant 0 : index
    %5 = vector.load %arg4[%c0_4, %c0_5] : memref<32x32xf32, #tpu.memory_space<vmem>>, vector<32x32xf32>
    %cst = arith.constant dense<0.000000e+00> : vector<16x32xf32>
    %6 = tpu.matmul %4, %5, %cst {dimension_numbers = #tpu.dot_dimension_numbers<[1], [0], [0], [1], [0, 0, 1, 1], [], []>} : vector<16x32xf32>, vector<32x32xf32>, vector<16x32xf32> -> vector<16x32xf32>
    %7 = arith.addf %3, %6 : vector<16x32xf32>
    %c0_6 = arith.constant 0 : index
    %c0_7 = arith.constant 0 : index
    %8 = vector.load %arg8[%c0_6, %c0_7] : memref<16x32xf32, #tpu.memory_space<vmem>>, vector<16x32xf32>
    tpu.vector_store %arg8[%c0_6, %c0_7], %7 {strides = array<i32>} : memref<16x32xf32, #tpu.memory_space<vmem>>, vector<16x32xf32>,
    %c0_i32_8 = arith.constant 0 : i32
    %9 = arith.cmpi eq, %arg2, %c0_i32_8 : i32
    %10 = arith.extui %9 : i1 to i32
    %c0_i32_9 = arith.constant 0 : i32
    %11 = arith.cmpi ne, %10, %c0_i32_9 : i32
    scf.if %11 {
      %c0_10 = arith.constant 0 : index
      %c0_11 = arith.constant 0 : index
      %12 = vector.load %arg8[%c0_10, %c0_11] : memref<16x32xf32, #tpu.memory_space<vmem>>, vector<16x32xf32>
      %c0_12 = arith.constant 0 : index
      %c0_13 = arith.constant 0 : index
      %13 = vector.load %arg5[%c0_12, %c0_13] : memref<1x32xf32, #tpu.memory_space<vmem>>, vector<1x32xf32>
      %14 = vector.broadcast %13 : vector<1x32xf32> to vector<16x32xf32>
      %15 = arith.addf %12, %14 : vector<16x32xf32>
      %c0_14 = arith.constant 0 : index
      %c0_15 = arith.constant 0 : index
      %16 = vector.load %arg6[%c0_14, %c0_15] : memref<16x1xf32, #tpu.memory_space<vmem>>, vector<16x1xf32>
      %17 = vector.broadcast %16 : vector<16x1xf32> to vector<16x32xf32>
      %18 = arith.mulf %15, %17 : vector<16x32xf32>
      %c0_16 = arith.constant 0 : index
      %c0_17 = arith.constant 0 : index
      %19 = vector.load %arg7[%c0_16, %c0_17] : memref<16x32xf32, #tpu.memory_space<vmem>>, vector<16x32xf32>
      tpu.vector_store %arg7[%c0_16, %c0_17], %18 {strides = array<i32>} : memref<16x32xf32, #tpu.memory_space<vmem>>, vector<16x32xf32>,
    } else {
    }
    return
  }
  func.func @transform_0(%arg0: i32, %arg1: i32, %arg2: i32) -> (i32, i32) {
    %c0_i32 = arith.constant 0 : i32
    return %arg0, %arg2 : i32, i32
  }
  func.func @transform_1(%arg0: i32, %arg1: i32, %arg2: i32) -> (i32, i32) {
    %c0_i32 = arith.constant 0 : i32
    return %arg2, %arg1 : i32, i32
  }
  func.func @transform_2(%arg0: i32, %arg1: i32, %arg2: i32) -> (i32, i32) {
    %c0_i32 = arith.constant 0 : i32
    %c0_i32_0 = arith.constant 0 : i32
    return %c0_i32, %arg1 : i32, i32
  }
  func.func @transform_3(%arg0: i32, %arg1: i32, %arg2: i32) -> (i32, i32) {
    %c0_i32 = arith.constant 0 : i32
    %c0_i32_0 = arith.constant 0 : i32
    return %arg0, %c0_i32 : i32, i32
  }
  func.func @transform_4(%arg0: i32, %arg1: i32, %arg2: i32) -> (i32, i32) {
    %c0_i32 = arith.constant 0 : i32
    return %arg0, %arg1 : i32, i32
  }
}

module attributes {stable_mosaic.version = 11 : i64} {
  func.func @_ita_kernel(%arg0: i32, %arg1: memref<1x1xf32, #tpu.memory_space<smem>>, %arg2: memref<2x32xf32, #tpu.memory_space<vmem>>, %arg3: memref<32x16xf32, #tpu.memory_space<vmem>>, %arg4: memref<1x16xf32, #tpu.memory_space<vmem>>, %arg5: memref<2x32xf32, #tpu.memory_space<vmem>>, %arg6: memref<32x16xf32, #tpu.memory_space<vmem>>, %arg7: memref<1x16xf32, #tpu.memory_space<vmem>>, %arg8: memref<2x2xf32, #tpu.memory_space<vmem>>, %arg9: memref<16x8xbf16, #tpu.memory_space<vmem>>, %arg10: memref<16x8xbf16, #tpu.memory_space<vmem>>, %arg11: memref<2x8xf32, #tpu.memory_space<vmem>>, %arg12: memref<1x1xf32, #tpu.memory_space<vmem>>, %arg13: memref<2x2xf32, #tpu.memory_space<vmem>>, %arg14: memref<2x2xf32, #tpu.memory_space<vmem>>, %arg15: memref<2x16xf32, #tpu.memory_space<vmem>>, %arg16: memref<2x16xf32, #tpu.memory_space<vmem>>, %arg17: memref<2x1xf32, #tpu.memory_space<vmem>>, %arg18: memref<2x1xf32, #tpu.memory_space<vmem>>, %arg19: memref<2x1xf32, #tpu.memory_space<vmem>>, %arg20: memref<2x1xf32, #tpu.memory_space<vmem>>, %arg21: memref<2x1xf32, #tpu.memory_space<vmem>>, %arg22: memref<2x1xf32, #tpu.memory_space<vmem>>, %arg23: memref<2x1xf32, #tpu.memory_space<vmem>>, %arg24: memref<2x1xf32, #tpu.memory_space<vmem>>) attributes {dimension_semantics = [#tpu.dimension_semantics<arbitrary>], iteration_bounds = array<i64: 1>, scalar_prefetch = 0 : i64, scratch_operands = 8 : i64, tpu.core_type = #tpu.core_type<tc>, window_params = [{transform_indices = @transform_0, window_bounds = array<i64: 1, 1>}, {pipeline_mode = #tpu.pipeline_mode<synchronous>, transform_indices = @transform_1, window_bounds = array<i64: 2, 32>}, {pipeline_mode = #tpu.pipeline_mode<synchronous>, transform_indices = @transform_2, window_bounds = array<i64: 32, 16>}, {pipeline_mode = #tpu.pipeline_mode<synchronous>, transform_indices = @transform_3, window_bounds = array<i64: 1, 16>}, {pipeline_mode = #tpu.pipeline_mode<synchronous>, transform_indices = @transform_4, window_bounds = array<i64: 2, 32>}, {pipeline_mode = #tpu.pipeline_mode<synchronous>, transform_indices = @transform_5, window_bounds = array<i64: 32, 16>}, {pipeline_mode = #tpu.pipeline_mode<synchronous>, transform_indices = @transform_6, window_bounds = array<i64: 1, 16>}, {pipeline_mode = #tpu.pipeline_mode<synchronous>, transform_indices = @transform_7, window_bounds = array<i64: 2, 2>}, {transform_indices = @transform_8, window_bounds = array<i64: 16, 8>}, {transform_indices = @transform_9, window_bounds = array<i64: 16, 8>}, {transform_indices = @transform_10, window_bounds = array<i64: 2, 8>}, {pipeline_mode = #tpu.pipeline_mode<synchronous>, transform_indices = @transform_11, window_bounds = array<i64: 1, 1>}, {pipeline_mode = #tpu.pipeline_mode<synchronous>, transform_indices = @transform_12, window_bounds = array<i64: 2, 2>}, {pipeline_mode = #tpu.pipeline_mode<synchronous>, transform_indices = @transform_13, window_bounds = array<i64: 2, 2>}, {pipeline_mode = #tpu.pipeline_mode<synchronous>, transform_indices = @transform_14, window_bounds = array<i64: 2, 16>}, {pipeline_mode = #tpu.pipeline_mode<synchronous>, transform_indices = @transform_15, window_bounds = array<i64: 2, 16>}]} {
    %c0 = arith.constant 0 : index
    %c0_0 = arith.constant 0 : index
    %0 = memref.load %arg1[%c0, %c0_0] : memref<1x1xf32, #tpu.memory_space<smem>>
    %c0_i32 = arith.constant 0 : i32
    %1 = arith.cmpi eq, %arg0, %c0_i32 : i32
    %2 = arith.extui %1 : i1 to i32
    %c0_i32_1 = arith.constant 0 : i32
    %3 = arith.cmpi ne, %2, %c0_i32_1 : i32
    scf.if %3 {
      %c0_115 = arith.constant 0 : index
      %c0_116 = arith.constant 0 : index
      %248 = vector.load %arg2[%c0_115, %c0_116] : memref<2x32xf32, #tpu.memory_space<vmem>>, vector<2x32xf32>
      %c0_117 = arith.constant 0 : index
      %c0_118 = arith.constant 0 : index
      %249 = vector.load %arg3[%c0_117, %c0_118] : memref<32x16xf32, #tpu.memory_space<vmem>>, vector<32x16xf32>
      %cst_119 = arith.constant dense<0.000000e+00> : vector<2x16xf32>
      %250 = tpu.matmul %248, %249, %cst_119 {dimension_numbers = #tpu.dot_dimension_numbers<[1], [0], [0], [1], [0, 0, 1, 1], [], []>} : vector<2x32xf32>, vector<32x16xf32>, vector<2x16xf32> -> vector<2x16xf32>
      %c0_120 = arith.constant 0 : index
      %c0_121 = arith.constant 0 : index
      %251 = vector.load %arg4[%c0_120, %c0_121] : memref<1x16xf32, #tpu.memory_space<vmem>>, vector<1x16xf32>
      %252 = vector.broadcast %251 : vector<1x16xf32> to vector<2x16xf32>
      %253 = arith.addf %250, %252 : vector<2x16xf32>
      %c0_122 = arith.constant 0 : index
      %c0_123 = arith.constant 0 : index
      %254 = vector.load %arg5[%c0_122, %c0_123] : memref<2x32xf32, #tpu.memory_space<vmem>>, vector<2x32xf32>
      %c0_124 = arith.constant 0 : index
      %c0_125 = arith.constant 0 : index
      %255 = vector.load %arg6[%c0_124, %c0_125] : memref<32x16xf32, #tpu.memory_space<vmem>>, vector<32x16xf32>
      %cst_126 = arith.constant dense<0.000000e+00> : vector<2x16xf32>
      %256 = tpu.matmul %254, %255, %cst_126 {dimension_numbers = #tpu.dot_dimension_numbers<[1], [0], [0], [1], [0, 0, 1, 1], [], []>} : vector<2x32xf32>, vector<32x16xf32>, vector<2x16xf32> -> vector<2x16xf32>
      %c0_127 = arith.constant 0 : index
      %c0_128 = arith.constant 0 : index
      %257 = vector.load %arg7[%c0_127, %c0_128] : memref<1x16xf32, #tpu.memory_space<vmem>>, vector<1x16xf32>
      %258 = vector.broadcast %257 : vector<1x16xf32> to vector<2x16xf32>
      %259 = arith.addf %256, %258 : vector<2x16xf32>
      %260 = arith.mulf %253, %253 : vector<2x16xf32>
      %cst_129 = arith.constant dense<0.000000e+00> : vector<2xf32>
      %261 = vector.multi_reduction <add>, %260, %cst_129 [1] : vector<2x16xf32> to vector<2xf32>
      %262 = vector.shape_cast %261 : vector<2xf32> to vector<2x1xf32>
      %263 = math.sqrt %262 : vector<2x1xf32>
      %264 = arith.mulf %259, %259 : vector<2x16xf32>
      %cst_130 = arith.constant dense<0.000000e+00> : vector<2xf32>
      %265 = vector.multi_reduction <add>, %264, %cst_130 [1] : vector<2x16xf32> to vector<2xf32>
      %266 = vector.shape_cast %265 : vector<2xf32> to vector<2x1xf32>
      %267 = math.sqrt %266 : vector<2x1xf32>
      %cst_131 = arith.constant 9.99999996E-13 : f32
      %268 = vector.broadcast %cst_131 : f32 to vector<2x1xf32>
      %269 = arith.maximumf %263, %268 : vector<2x1xf32>
      %270 = vector.broadcast %269 : vector<2x1xf32> to vector<2x16xf32>
      %271 = arith.divf %253, %270 : vector<2x16xf32>
      %cst_132 = arith.constant 9.99999996E-13 : f32
      %272 = vector.broadcast %cst_132 : f32 to vector<2x1xf32>
      %273 = arith.maximumf %267, %272 : vector<2x1xf32>
      %274 = vector.broadcast %273 : vector<2x1xf32> to vector<2x16xf32>
      %275 = arith.divf %259, %274 : vector<2x16xf32>
      %c0_133 = arith.constant 0 : index
      %c0_134 = arith.constant 0 : index
      %276 = vector.load %arg15[%c0_133, %c0_134] : memref<2x16xf32, #tpu.memory_space<vmem>>, vector<2x16xf32>
      tpu.vector_store %arg15[%c0_133, %c0_134], %271 {strides = array<i32>} : memref<2x16xf32, #tpu.memory_space<vmem>>, vector<2x16xf32>,
      %c0_135 = arith.constant 0 : index
      %c0_136 = arith.constant 0 : index
      %277 = vector.load %arg16[%c0_135, %c0_136] : memref<2x16xf32, #tpu.memory_space<vmem>>, vector<2x16xf32>
      tpu.vector_store %arg16[%c0_135, %c0_136], %275 {strides = array<i32>} : memref<2x16xf32, #tpu.memory_space<vmem>>, vector<2x16xf32>,
      %cst_137 = arith.constant dense<0.000000e+00> : vector<2x2xf32>
      %278 = tpu.matmul %271, %275, %cst_137 {dimension_numbers = #tpu.dot_dimension_numbers<[1], [1], [0], [0], [0, 0, 1, 0], [], []>} : vector<2x16xf32>, vector<2x16xf32>, vector<2x2xf32> -> vector<2x2xf32>
      %279 = vector.broadcast %0 : f32 to vector<2x2xf32>
      %280 = arith.mulf %278, %279 : vector<2x2xf32>
      %cst_138 = arith.constant dense<0.000000e+00> : vector<2x2xf32>
      %281 = tpu.matmul %275, %271, %cst_138 {dimension_numbers = #tpu.dot_dimension_numbers<[1], [1], [0], [0], [0, 0, 1, 0], [], []>} : vector<2x16xf32>, vector<2x16xf32>, vector<2x2xf32> -> vector<2x2xf32>
      %282 = vector.broadcast %0 : f32 to vector<2x2xf32>
      %283 = arith.mulf %281, %282 : vector<2x2xf32>
      %c0_139 = arith.constant 0 : index
      %c0_140 = arith.constant 0 : index
      %284 = vector.load %arg8[%c0_139, %c0_140] : memref<2x2xf32, #tpu.memory_space<vmem>>, vector<2x2xf32>
      %cst_141 = arith.constant 5.000000e-01 : f32
      %285 = vector.broadcast %cst_141 : f32 to vector<2x2xf32>
      %286 = arith.cmpf ogt, %284, %285 : vector<2x2xf32>
      %cst_142 = arith.constant dense<0xFF800000> : vector<2xf32>
      %287 = vector.multi_reduction <maximumf>, %280, %cst_142 [1] : vector<2x2xf32> to vector<2xf32>
      %288 = vector.shape_cast %287 : vector<2xf32> to vector<2x1xf32>
      %289 = vector.broadcast %288 : vector<2x1xf32> to vector<2x2xf32>
      %290 = arith.subf %280, %289 : vector<2x2xf32>
      %291 = math.exp %290 : vector<2x2xf32>
      %cst_143 = arith.constant dense<0.000000e+00> : vector<2xf32>
      %292 = vector.multi_reduction <add>, %291, %cst_143 [1] : vector<2x2xf32> to vector<2xf32>
      %293 = vector.shape_cast %292 : vector<2xf32> to vector<2x1xf32>
      %294 = tpu.reciprocal %293 {approx = true} : vector<2x1xf32> -> vector<2x1xf32>
      %295 = vector.broadcast %294 : vector<2x1xf32> to vector<2x2xf32>
      %296 = arith.mulf %291, %295 : vector<2x2xf32>
      %cst_144 = arith.constant 0.000000e+00 : f32
      %297 = vector.broadcast %cst_144 : f32 to vector<2x2xf32>
      %298 = arith.select %286, %297, %296 : vector<2x2xi1>, vector<2x2xf32>
      %c0_145 = arith.constant 0 : index
      %c0_146 = arith.constant 0 : index
      %299 = vector.load %arg13[%c0_145, %c0_146] : memref<2x2xf32, #tpu.memory_space<vmem>>, vector<2x2xf32>
      tpu.vector_store %arg13[%c0_145, %c0_146], %298 {strides = array<i32>} : memref<2x2xf32, #tpu.memory_space<vmem>>, vector<2x2xf32>,
      %cst_147 = arith.constant 5.000000e-01 : f32
      %300 = vector.broadcast %cst_147 : f32 to vector<2x2xf32>
      %301 = arith.cmpf ogt, %284, %300 : vector<2x2xf32>
      %cst_148 = arith.constant dense<0xFF800000> : vector<2xf32>
      %302 = vector.multi_reduction <maximumf>, %283, %cst_148 [1] : vector<2x2xf32> to vector<2xf32>
      %303 = vector.shape_cast %302 : vector<2xf32> to vector<2x1xf32>
      %304 = vector.broadcast %303 : vector<2x1xf32> to vector<2x2xf32>
      %305 = arith.subf %283, %304 : vector<2x2xf32>
      %306 = math.exp %305 : vector<2x2xf32>
      %cst_149 = arith.constant dense<0.000000e+00> : vector<2xf32>
      %307 = vector.multi_reduction <add>, %306, %cst_149 [1] : vector<2x2xf32> to vector<2xf32>
      %308 = vector.shape_cast %307 : vector<2xf32> to vector<2x1xf32>
      %309 = tpu.reciprocal %308 {approx = true} : vector<2x1xf32> -> vector<2x1xf32>
      %310 = vector.broadcast %309 : vector<2x1xf32> to vector<2x2xf32>
      %311 = arith.mulf %306, %310 : vector<2x2xf32>
      %cst_150 = arith.constant 0.000000e+00 : f32
      %312 = vector.broadcast %cst_150 : f32 to vector<2x2xf32>
      %313 = arith.select %301, %312, %311 : vector<2x2xi1>, vector<2x2xf32>
      %c0_151 = arith.constant 0 : index
      %c0_152 = arith.constant 0 : index
      %314 = vector.load %arg14[%c0_151, %c0_152] : memref<2x2xf32, #tpu.memory_space<vmem>>, vector<2x2xf32>
      tpu.vector_store %arg14[%c0_151, %c0_152], %313 {strides = array<i32>} : memref<2x2xf32, #tpu.memory_space<vmem>>, vector<2x2xf32>,
      %cst_153 = arith.constant 0.000000e+00 : f32
      %315 = vector.broadcast %cst_153 : f32 to vector<2x2xf32>
      %316 = arith.maximumf %280, %315 : vector<2x2xf32>
      %cst_154 = arith.constant 1.000000e+00 : f32
      %317 = vector.broadcast %cst_154 : f32 to vector<2x2xf32>
      %318 = arith.addf %316, %317 : vector<2x2xf32>
      %cst_155 = arith.constant 0.000000e+00 : f32
      %319 = vector.broadcast %cst_155 : f32 to vector<2x2xf32>
      %cst_156 = arith.constant 1.000000e+00 : f32
      %320 = vector.broadcast %cst_156 : f32 to vector<2x2xf32>
      %321 = arith.divf %320, %318 : vector<2x2xf32>
      %322 = arith.addf %319, %321 : vector<2x2xf32>
      %cst_157 = arith.constant 1.000000e+00 : f32
      %323 = vector.broadcast %cst_157 : f32 to vector<2x2xf32>
      %324 = arith.addf %318, %323 : vector<2x2xf32>
      %cst_158 = arith.constant 1.000000e+00 : f32
      %325 = vector.broadcast %cst_158 : f32 to vector<2x2xf32>
      %326 = arith.divf %325, %324 : vector<2x2xf32>
      %327 = arith.addf %322, %326 : vector<2x2xf32>
      %cst_159 = arith.constant 1.000000e+00 : f32
      %328 = vector.broadcast %cst_159 : f32 to vector<2x2xf32>
      %329 = arith.addf %324, %328 : vector<2x2xf32>
      %cst_160 = arith.constant 1.000000e+00 : f32
      %330 = vector.broadcast %cst_160 : f32 to vector<2x2xf32>
      %331 = arith.divf %330, %329 : vector<2x2xf32>
      %332 = arith.addf %327, %331 : vector<2x2xf32>
      %cst_161 = arith.constant 1.000000e+00 : f32
      %333 = vector.broadcast %cst_161 : f32 to vector<2x2xf32>
      %334 = arith.addf %329, %333 : vector<2x2xf32>
      %cst_162 = arith.constant 1.000000e+00 : f32
      %335 = vector.broadcast %cst_162 : f32 to vector<2x2xf32>
      %336 = arith.divf %335, %334 : vector<2x2xf32>
      %337 = arith.mulf %336, %336 : vector<2x2xf32>
      %338 = math.log %334 : vector<2x2xf32>
      %cst_163 = arith.constant 5.000000e-01 : f32
      %339 = vector.broadcast %cst_163 : f32 to vector<2x2xf32>
      %340 = arith.mulf %339, %336 : vector<2x2xf32>
      %341 = arith.subf %338, %340 : vector<2x2xf32>
      %cst_164 = arith.constant 0.0833333358 : f32
      %342 = vector.broadcast %cst_164 : f32 to vector<2x2xf32>
      %343 = arith.mulf %337, %342 : vector<2x2xf32>
      %344 = arith.subf %341, %343 : vector<2x2xf32>
      %345 = arith.mulf %337, %337 : vector<2x2xf32>
      %cst_165 = arith.constant 0.00833333377 : f32
      %346 = vector.broadcast %cst_165 : f32 to vector<2x2xf32>
      %347 = arith.mulf %345, %346 : vector<2x2xf32>
      %348 = arith.addf %344, %347 : vector<2x2xf32>
      %349 = arith.mulf %337, %337 : vector<2x2xf32>
      %350 = arith.mulf %349, %337 : vector<2x2xf32>
      %cst_166 = arith.constant 0.0039682542 : f32
      %351 = vector.broadcast %cst_166 : f32 to vector<2x2xf32>
      %352 = arith.mulf %350, %351 : vector<2x2xf32>
      %353 = arith.subf %348, %352 : vector<2x2xf32>
      %354 = arith.subf %353, %332 : vector<2x2xf32>
      %cst_167 = arith.constant 0.000000e+00 : f32
      %355 = vector.broadcast %cst_167 : f32 to vector<2x2xf32>
      %356 = math.log %318 : vector<2x2xf32>
      %357 = arith.addf %355, %356 : vector<2x2xf32>
      %cst_168 = arith.constant 1.000000e+00 : f32
      %358 = vector.broadcast %cst_168 : f32 to vector<2x2xf32>
      %359 = arith.addf %318, %358 : vector<2x2xf32>
      %360 = math.log %359 : vector<2x2xf32>
      %361 = arith.addf %357, %360 : vector<2x2xf32>
      %cst_169 = arith.constant 1.000000e+00 : f32
      %362 = vector.broadcast %cst_169 : f32 to vector<2x2xf32>
      %363 = arith.addf %359, %362 : vector<2x2xf32>
      %364 = math.log %363 : vector<2x2xf32>
      %365 = arith.addf %361, %364 : vector<2x2xf32>
      %cst_170 = arith.constant 1.000000e+00 : f32
      %366 = vector.broadcast %cst_170 : f32 to vector<2x2xf32>
      %367 = arith.addf %363, %366 : vector<2x2xf32>
      %cst_171 = arith.constant 1.000000e+00 : f32
      %368 = vector.broadcast %cst_171 : f32 to vector<2x2xf32>
      %369 = arith.divf %368, %367 : vector<2x2xf32>
      %370 = arith.mulf %369, %369 : vector<2x2xf32>
      %cst_172 = arith.constant 0.0833333358 : f32
      %371 = vector.broadcast %cst_172 : f32 to vector<2x2xf32>
      %372 = arith.mulf %369, %371 : vector<2x2xf32>
      %373 = arith.mulf %369, %370 : vector<2x2xf32>
      %cst_173 = arith.constant 0.00277777785 : f32
      %374 = vector.broadcast %cst_173 : f32 to vector<2x2xf32>
      %375 = arith.mulf %373, %374 : vector<2x2xf32>
      %376 = arith.subf %372, %375 : vector<2x2xf32>
      %377 = arith.mulf %369, %370 : vector<2x2xf32>
      %378 = arith.mulf %377, %370 : vector<2x2xf32>
      %cst_174 = arith.constant 7.93650805E-4 : f32
      %379 = vector.broadcast %cst_174 : f32 to vector<2x2xf32>
      %380 = arith.mulf %378, %379 : vector<2x2xf32>
      %381 = arith.addf %376, %380 : vector<2x2xf32>
      %cst_175 = arith.constant 5.000000e-01 : f32
      %382 = vector.broadcast %cst_175 : f32 to vector<2x2xf32>
      %383 = arith.subf %367, %382 : vector<2x2xf32>
      %384 = math.log %367 : vector<2x2xf32>
      %385 = arith.mulf %383, %384 : vector<2x2xf32>
      %386 = arith.subf %385, %367 : vector<2x2xf32>
      %cst_176 = arith.constant 0.918938517 : f32
      %387 = vector.broadcast %cst_176 : f32 to vector<2x2xf32>
      %388 = arith.addf %386, %387 : vector<2x2xf32>
      %389 = arith.addf %388, %381 : vector<2x2xf32>
      %390 = arith.subf %389, %365 : vector<2x2xf32>
      %cst_177 = arith.constant 1.000000e+00 : f32
      %391 = vector.broadcast %cst_177 : f32 to vector<2x2xf32>
      %392 = arith.subf %391, %284 : vector<2x2xf32>
      %cst_178 = arith.constant dense<0.000000e+00> : vector<2xf32>
      %393 = vector.multi_reduction <add>, %318, %cst_178 [1] : vector<2x2xf32> to vector<2xf32>
      %394 = vector.shape_cast %393 : vector<2xf32> to vector<2x1xf32>
      %cst_179 = arith.constant dense<0.000000e+00> : vector<2xf32>
      %395 = vector.multi_reduction <add>, %284, %cst_179 [1] : vector<2x2xf32> to vector<2xf32>
      %396 = vector.shape_cast %395 : vector<2xf32> to vector<2x1xf32>
      %cst_180 = arith.constant 1.000000e+00 : f32
      %397 = vector.broadcast %cst_180 : f32 to vector<2x2xf32>
      %398 = arith.subf %318, %397 : vector<2x2xf32>
      %399 = arith.mulf %398, %392 : vector<2x2xf32>
      %cst_181 = arith.constant 1.000000e+00 : f32
      %400 = vector.broadcast %cst_181 : f32 to vector<2x2xf32>
      %401 = arith.addf %399, %400 : vector<2x2xf32>
      %cst_182 = arith.constant dense<0.000000e+00> : vector<2xf32>
      %402 = vector.multi_reduction <add>, %401, %cst_182 [1] : vector<2x2xf32> to vector<2xf32>
      %403 = vector.shape_cast %402 : vector<2xf32> to vector<2x1xf32>
      %cst_183 = arith.constant 0.000000e+00 : f32
      %404 = vector.broadcast %cst_183 : f32 to vector<2x2xf32>
      %405 = arith.subf %404, %284 : vector<2x2xf32>
      %406 = arith.mulf %405, %354 : vector<2x2xf32>
      %cst_184 = arith.constant 1.000000e+00 : f32
      %407 = vector.broadcast %cst_184 : f32 to vector<2x2xf32>
      %408 = arith.subf %318, %407 : vector<2x2xf32>
      %409 = arith.mulf %408, %354 : vector<2x2xf32>
      %410 = arith.subf %409, %390 : vector<2x2xf32>
      %411 = arith.mulf %392, %410 : vector<2x2xf32>
      %cst_185 = arith.constant 1.000000e-03 : f32
      %412 = vector.broadcast %cst_185 : f32 to vector<2x2xf32>
      %413 = arith.mulf %412, %411 : vector<2x2xf32>
      %414 = arith.addf %406, %413 : vector<2x2xf32>
      %cst_186 = arith.constant dense<0.000000e+00> : vector<2xf32>
      %415 = vector.multi_reduction <add>, %414, %cst_186 [1] : vector<2x2xf32> to vector<2xf32>
      %416 = vector.shape_cast %415 : vector<2xf32> to vector<2x1xf32>
      %c0_187 = arith.constant 0 : index
      %c0_188 = arith.constant 0 : index
      %417 = vector.load %arg17[%c0_187, %c0_188] : memref<2x1xf32, #tpu.memory_space<vmem>>, vector<2x1xf32>
      tpu.vector_store %arg17[%c0_187, %c0_188], %394 {strides = array<i32>} : memref<2x1xf32, #tpu.memory_space<vmem>>, vector<2x1xf32>,
      %c0_189 = arith.constant 0 : index
      %c0_190 = arith.constant 0 : index
      %418 = vector.load %arg18[%c0_189, %c0_190] : memref<2x1xf32, #tpu.memory_space<vmem>>, vector<2x1xf32>
      tpu.vector_store %arg18[%c0_189, %c0_190], %396 {strides = array<i32>} : memref<2x1xf32, #tpu.memory_space<vmem>>, vector<2x1xf32>,
      %c0_191 = arith.constant 0 : index
      %c0_192 = arith.constant 0 : index
      %419 = vector.load %arg19[%c0_191, %c0_192] : memref<2x1xf32, #tpu.memory_space<vmem>>, vector<2x1xf32>
      tpu.vector_store %arg19[%c0_191, %c0_192], %403 {strides = array<i32>} : memref<2x1xf32, #tpu.memory_space<vmem>>, vector<2x1xf32>,
      %c0_193 = arith.constant 0 : index
      %c0_194 = arith.constant 0 : index
      %420 = vector.load %arg20[%c0_193, %c0_194] : memref<2x1xf32, #tpu.memory_space<vmem>>, vector<2x1xf32>
      tpu.vector_store %arg20[%c0_193, %c0_194], %416 {strides = array<i32>} : memref<2x1xf32, #tpu.memory_space<vmem>>, vector<2x1xf32>,
      %cst_195 = arith.constant 0.000000e+00 : f32
      %421 = vector.broadcast %cst_195 : f32 to vector<2x2xf32>
      %422 = arith.maximumf %283, %421 : vector<2x2xf32>
      %cst_196 = arith.constant 1.000000e+00 : f32
      %423 = vector.broadcast %cst_196 : f32 to vector<2x2xf32>
      %424 = arith.addf %422, %423 : vector<2x2xf32>
      %cst_197 = arith.constant 0.000000e+00 : f32
      %425 = vector.broadcast %cst_197 : f32 to vector<2x2xf32>
      %cst_198 = arith.constant 1.000000e+00 : f32
      %426 = vector.broadcast %cst_198 : f32 to vector<2x2xf32>
      %427 = arith.divf %426, %424 : vector<2x2xf32>
      %428 = arith.addf %425, %427 : vector<2x2xf32>
      %cst_199 = arith.constant 1.000000e+00 : f32
      %429 = vector.broadcast %cst_199 : f32 to vector<2x2xf32>
      %430 = arith.addf %424, %429 : vector<2x2xf32>
      %cst_200 = arith.constant 1.000000e+00 : f32
      %431 = vector.broadcast %cst_200 : f32 to vector<2x2xf32>
      %432 = arith.divf %431, %430 : vector<2x2xf32>
      %433 = arith.addf %428, %432 : vector<2x2xf32>
      %cst_201 = arith.constant 1.000000e+00 : f32
      %434 = vector.broadcast %cst_201 : f32 to vector<2x2xf32>
      %435 = arith.addf %430, %434 : vector<2x2xf32>
      %cst_202 = arith.constant 1.000000e+00 : f32
      %436 = vector.broadcast %cst_202 : f32 to vector<2x2xf32>
      %437 = arith.divf %436, %435 : vector<2x2xf32>
      %438 = arith.addf %433, %437 : vector<2x2xf32>
      %cst_203 = arith.constant 1.000000e+00 : f32
      %439 = vector.broadcast %cst_203 : f32 to vector<2x2xf32>
      %440 = arith.addf %435, %439 : vector<2x2xf32>
      %cst_204 = arith.constant 1.000000e+00 : f32
      %441 = vector.broadcast %cst_204 : f32 to vector<2x2xf32>
      %442 = arith.divf %441, %440 : vector<2x2xf32>
      %443 = arith.mulf %442, %442 : vector<2x2xf32>
      %444 = math.log %440 : vector<2x2xf32>
      %cst_205 = arith.constant 5.000000e-01 : f32
      %445 = vector.broadcast %cst_205 : f32 to vector<2x2xf32>
      %446 = arith.mulf %445, %442 : vector<2x2xf32>
      %447 = arith.subf %444, %446 : vector<2x2xf32>
      %cst_206 = arith.constant 0.0833333358 : f32
      %448 = vector.broadcast %cst_206 : f32 to vector<2x2xf32>
      %449 = arith.mulf %443, %448 : vector<2x2xf32>
      %450 = arith.subf %447, %449 : vector<2x2xf32>
      %451 = arith.mulf %443, %443 : vector<2x2xf32>
      %cst_207 = arith.constant 0.00833333377 : f32
      %452 = vector.broadcast %cst_207 : f32 to vector<2x2xf32>
      %453 = arith.mulf %451, %452 : vector<2x2xf32>
      %454 = arith.addf %450, %453 : vector<2x2xf32>
      %455 = arith.mulf %443, %443 : vector<2x2xf32>
      %456 = arith.mulf %455, %443 : vector<2x2xf32>
      %cst_208 = arith.constant 0.0039682542 : f32
      %457 = vector.broadcast %cst_208 : f32 to vector<2x2xf32>
      %458 = arith.mulf %456, %457 : vector<2x2xf32>
      %459 = arith.subf %454, %458 : vector<2x2xf32>
      %460 = arith.subf %459, %438 : vector<2x2xf32>
      %cst_209 = arith.constant 0.000000e+00 : f32
      %461 = vector.broadcast %cst_209 : f32 to vector<2x2xf32>
      %462 = math.log %424 : vector<2x2xf32>
      %463 = arith.addf %461, %462 : vector<2x2xf32>
      %cst_210 = arith.constant 1.000000e+00 : f32
      %464 = vector.broadcast %cst_210 : f32 to vector<2x2xf32>
      %465 = arith.addf %424, %464 : vector<2x2xf32>
      %466 = math.log %465 : vector<2x2xf32>
      %467 = arith.addf %463, %466 : vector<2x2xf32>
      %cst_211 = arith.constant 1.000000e+00 : f32
      %468 = vector.broadcast %cst_211 : f32 to vector<2x2xf32>
      %469 = arith.addf %465, %468 : vector<2x2xf32>
      %470 = math.log %469 : vector<2x2xf32>
      %471 = arith.addf %467, %470 : vector<2x2xf32>
      %cst_212 = arith.constant 1.000000e+00 : f32
      %472 = vector.broadcast %cst_212 : f32 to vector<2x2xf32>
      %473 = arith.addf %469, %472 : vector<2x2xf32>
      %cst_213 = arith.constant 1.000000e+00 : f32
      %474 = vector.broadcast %cst_213 : f32 to vector<2x2xf32>
      %475 = arith.divf %474, %473 : vector<2x2xf32>
      %476 = arith.mulf %475, %475 : vector<2x2xf32>
      %cst_214 = arith.constant 0.0833333358 : f32
      %477 = vector.broadcast %cst_214 : f32 to vector<2x2xf32>
      %478 = arith.mulf %475, %477 : vector<2x2xf32>
      %479 = arith.mulf %475, %476 : vector<2x2xf32>
      %cst_215 = arith.constant 0.00277777785 : f32
      %480 = vector.broadcast %cst_215 : f32 to vector<2x2xf32>
      %481 = arith.mulf %479, %480 : vector<2x2xf32>
      %482 = arith.subf %478, %481 : vector<2x2xf32>
      %483 = arith.mulf %475, %476 : vector<2x2xf32>
      %484 = arith.mulf %483, %476 : vector<2x2xf32>
      %cst_216 = arith.constant 7.93650805E-4 : f32
      %485 = vector.broadcast %cst_216 : f32 to vector<2x2xf32>
      %486 = arith.mulf %484, %485 : vector<2x2xf32>
      %487 = arith.addf %482, %486 : vector<2x2xf32>
      %cst_217 = arith.constant 5.000000e-01 : f32
      %488 = vector.broadcast %cst_217 : f32 to vector<2x2xf32>
      %489 = arith.subf %473, %488 : vector<2x2xf32>
      %490 = math.log %473 : vector<2x2xf32>
      %491 = arith.mulf %489, %490 : vector<2x2xf32>
      %492 = arith.subf %491, %473 : vector<2x2xf32>
      %cst_218 = arith.constant 0.918938517 : f32
      %493 = vector.broadcast %cst_218 : f32 to vector<2x2xf32>
      %494 = arith.addf %492, %493 : vector<2x2xf32>
      %495 = arith.addf %494, %487 : vector<2x2xf32>
      %496 = arith.subf %495, %471 : vector<2x2xf32>
      %cst_219 = arith.constant 1.000000e+00 : f32
      %497 = vector.broadcast %cst_219 : f32 to vector<2x2xf32>
      %498 = arith.subf %497, %284 : vector<2x2xf32>
      %cst_220 = arith.constant dense<0.000000e+00> : vector<2xf32>
      %499 = vector.multi_reduction <add>, %424, %cst_220 [1] : vector<2x2xf32> to vector<2xf32>
      %500 = vector.shape_cast %499 : vector<2xf32> to vector<2x1xf32>
      %cst_221 = arith.constant dense<0.000000e+00> : vector<2xf32>
      %501 = vector.multi_reduction <add>, %284, %cst_221 [1] : vector<2x2xf32> to vector<2xf32>
      %502 = vector.shape_cast %501 : vector<2xf32> to vector<2x1xf32>
      %cst_222 = arith.constant 1.000000e+00 : f32
      %503 = vector.broadcast %cst_222 : f32 to vector<2x2xf32>
      %504 = arith.subf %424, %503 : vector<2x2xf32>
      %505 = arith.mulf %504, %498 : vector<2x2xf32>
      %cst_223 = arith.constant 1.000000e+00 : f32
      %506 = vector.broadcast %cst_223 : f32 to vector<2x2xf32>
      %507 = arith.addf %505, %506 : vector<2x2xf32>
      %cst_224 = arith.constant dense<0.000000e+00> : vector<2xf32>
      %508 = vector.multi_reduction <add>, %507, %cst_224 [1] : vector<2x2xf32> to vector<2xf32>
      %509 = vector.shape_cast %508 : vector<2xf32> to vector<2x1xf32>
      %cst_225 = arith.constant 0.000000e+00 : f32
      %510 = vector.broadcast %cst_225 : f32 to vector<2x2xf32>
      %511 = arith.subf %510, %284 : vector<2x2xf32>
      %512 = arith.mulf %511, %460 : vector<2x2xf32>
      %cst_226 = arith.constant 1.000000e+00 : f32
      %513 = vector.broadcast %cst_226 : f32 to vector<2x2xf32>
      %514 = arith.subf %424, %513 : vector<2x2xf32>
      %515 = arith.mulf %514, %460 : vector<2x2xf32>
      %516 = arith.subf %515, %496 : vector<2x2xf32>
      %517 = arith.mulf %498, %516 : vector<2x2xf32>
      %cst_227 = arith.constant 1.000000e-03 : f32
      %518 = vector.broadcast %cst_227 : f32 to vector<2x2xf32>
      %519 = arith.mulf %518, %517 : vector<2x2xf32>
      %520 = arith.addf %512, %519 : vector<2x2xf32>
      %cst_228 = arith.constant dense<0.000000e+00> : vector<2xf32>
      %521 = vector.multi_reduction <add>, %520, %cst_228 [1] : vector<2x2xf32> to vector<2xf32>
      %522 = vector.shape_cast %521 : vector<2xf32> to vector<2x1xf32>
      %c0_229 = arith.constant 0 : index
      %c0_230 = arith.constant 0 : index
      %523 = vector.load %arg21[%c0_229, %c0_230] : memref<2x1xf32, #tpu.memory_space<vmem>>, vector<2x1xf32>
      tpu.vector_store %arg21[%c0_229, %c0_230], %500 {strides = array<i32>} : memref<2x1xf32, #tpu.memory_space<vmem>>, vector<2x1xf32>,
      %c0_231 = arith.constant 0 : index
      %c0_232 = arith.constant 0 : index
      %524 = vector.load %arg22[%c0_231, %c0_232] : memref<2x1xf32, #tpu.memory_space<vmem>>, vector<2x1xf32>
      tpu.vector_store %arg22[%c0_231, %c0_232], %502 {strides = array<i32>} : memref<2x1xf32, #tpu.memory_space<vmem>>, vector<2x1xf32>,
      %c0_233 = arith.constant 0 : index
      %c0_234 = arith.constant 0 : index
      %525 = vector.load %arg23[%c0_233, %c0_234] : memref<2x1xf32, #tpu.memory_space<vmem>>, vector<2x1xf32>
      tpu.vector_store %arg23[%c0_233, %c0_234], %509 {strides = array<i32>} : memref<2x1xf32, #tpu.memory_space<vmem>>, vector<2x1xf32>,
      %c0_235 = arith.constant 0 : index
      %c0_236 = arith.constant 0 : index
      %526 = vector.load %arg24[%c0_235, %c0_236] : memref<2x1xf32, #tpu.memory_space<vmem>>, vector<2x1xf32>
      tpu.vector_store %arg24[%c0_235, %c0_236], %522 {strides = array<i32>} : memref<2x1xf32, #tpu.memory_space<vmem>>, vector<2x1xf32>,
    } else {
    }
    %c0_2 = arith.constant 0 : index
    %c0_3 = arith.constant 0 : index
    %4 = vector.load %arg15[%c0_2, %c0_3] : memref<2x16xf32, #tpu.memory_space<vmem>>, vector<2x16xf32>
    %5 = arith.truncf %4 : vector<2x16xf32> to vector<2x16xbf16>
    %c0_4 = arith.constant 0 : index
    %c0_5 = arith.constant 0 : index
    %6 = vector.load %arg16[%c0_4, %c0_5] : memref<2x16xf32, #tpu.memory_space<vmem>>, vector<2x16xf32>
    %7 = arith.truncf %6 : vector<2x16xf32> to vector<2x16xbf16>
    %c0_6 = arith.constant 0 : index
    %c0_7 = arith.constant 0 : index
    %8 = vector.load %arg11[%c0_6, %c0_7] : memref<2x8xf32, #tpu.memory_space<vmem>>, vector<2x8xf32>
    %c0_8 = arith.constant 0 : index
    %c0_9 = arith.constant 0 : index
    %9 = vector.load %arg9[%c0_8, %c0_9] : memref<16x8xbf16, #tpu.memory_space<vmem>>, vector<16x8xbf16>
    %cst = arith.constant dense<0.000000e+00> : vector<2x8xf32>
    %10 = tpu.matmul %5, %9, %cst {dimension_numbers = #tpu.dot_dimension_numbers<[1], [0], [0], [1], [0, 0, 1, 1], [], []>} : vector<2x16xbf16>, vector<16x8xbf16>, vector<2x8xf32> -> vector<2x8xf32>
    %11 = vector.broadcast %0 : f32 to vector<2x8xf32>
    %12 = arith.mulf %10, %11 : vector<2x8xf32>
    %c0_10 = arith.constant 0 : index
    %c0_11 = arith.constant 0 : index
    %13 = vector.load %arg10[%c0_10, %c0_11] : memref<16x8xbf16, #tpu.memory_space<vmem>>, vector<16x8xbf16>
    %cst_12 = arith.constant dense<0.000000e+00> : vector<2x8xf32>
    %14 = tpu.matmul %7, %13, %cst_12 {dimension_numbers = #tpu.dot_dimension_numbers<[1], [0], [0], [1], [0, 0, 1, 1], [], []>} : vector<2x16xbf16>, vector<16x8xbf16>, vector<2x8xf32> -> vector<2x8xf32>
    %15 = vector.broadcast %0 : f32 to vector<2x8xf32>
    %16 = arith.mulf %14, %15 : vector<2x8xf32>
    %cst_13 = arith.constant 0.000000e+00 : f32
    %17 = vector.broadcast %cst_13 : f32 to vector<2x8xf32>
    %18 = arith.maximumf %12, %17 : vector<2x8xf32>
    %cst_14 = arith.constant 1.000000e+00 : f32
    %19 = vector.broadcast %cst_14 : f32 to vector<2x8xf32>
    %20 = arith.addf %18, %19 : vector<2x8xf32>
    %cst_15 = arith.constant 0.000000e+00 : f32
    %21 = vector.broadcast %cst_15 : f32 to vector<2x8xf32>
    %cst_16 = arith.constant 1.000000e+00 : f32
    %22 = vector.broadcast %cst_16 : f32 to vector<2x8xf32>
    %23 = arith.divf %22, %20 : vector<2x8xf32>
    %24 = arith.addf %21, %23 : vector<2x8xf32>
    %cst_17 = arith.constant 1.000000e+00 : f32
    %25 = vector.broadcast %cst_17 : f32 to vector<2x8xf32>
    %26 = arith.addf %20, %25 : vector<2x8xf32>
    %cst_18 = arith.constant 1.000000e+00 : f32
    %27 = vector.broadcast %cst_18 : f32 to vector<2x8xf32>
    %28 = arith.divf %27, %26 : vector<2x8xf32>
    %29 = arith.addf %24, %28 : vector<2x8xf32>
    %cst_19 = arith.constant 1.000000e+00 : f32
    %30 = vector.broadcast %cst_19 : f32 to vector<2x8xf32>
    %31 = arith.addf %26, %30 : vector<2x8xf32>
    %cst_20 = arith.constant 1.000000e+00 : f32
    %32 = vector.broadcast %cst_20 : f32 to vector<2x8xf32>
    %33 = arith.divf %32, %31 : vector<2x8xf32>
    %34 = arith.addf %29, %33 : vector<2x8xf32>
    %cst_21 = arith.constant 1.000000e+00 : f32
    %35 = vector.broadcast %cst_21 : f32 to vector<2x8xf32>
    %36 = arith.addf %31, %35 : vector<2x8xf32>
    %cst_22 = arith.constant 1.000000e+00 : f32
    %37 = vector.broadcast %cst_22 : f32 to vector<2x8xf32>
    %38 = arith.divf %37, %36 : vector<2x8xf32>
    %39 = arith.mulf %38, %38 : vector<2x8xf32>
    %40 = math.log %36 : vector<2x8xf32>
    %cst_23 = arith.constant 5.000000e-01 : f32
    %41 = vector.broadcast %cst_23 : f32 to vector<2x8xf32>
    %42 = arith.mulf %41, %38 : vector<2x8xf32>
    %43 = arith.subf %40, %42 : vector<2x8xf32>
    %cst_24 = arith.constant 0.0833333358 : f32
    %44 = vector.broadcast %cst_24 : f32 to vector<2x8xf32>
    %45 = arith.mulf %39, %44 : vector<2x8xf32>
    %46 = arith.subf %43, %45 : vector<2x8xf32>
    %47 = arith.mulf %39, %39 : vector<2x8xf32>
    %cst_25 = arith.constant 0.00833333377 : f32
    %48 = vector.broadcast %cst_25 : f32 to vector<2x8xf32>
    %49 = arith.mulf %47, %48 : vector<2x8xf32>
    %50 = arith.addf %46, %49 : vector<2x8xf32>
    %51 = arith.mulf %39, %39 : vector<2x8xf32>
    %52 = arith.mulf %51, %39 : vector<2x8xf32>
    %cst_26 = arith.constant 0.0039682542 : f32
    %53 = vector.broadcast %cst_26 : f32 to vector<2x8xf32>
    %54 = arith.mulf %52, %53 : vector<2x8xf32>
    %55 = arith.subf %50, %54 : vector<2x8xf32>
    %56 = arith.subf %55, %34 : vector<2x8xf32>
    %cst_27 = arith.constant 0.000000e+00 : f32
    %57 = vector.broadcast %cst_27 : f32 to vector<2x8xf32>
    %58 = math.log %20 : vector<2x8xf32>
    %59 = arith.addf %57, %58 : vector<2x8xf32>
    %cst_28 = arith.constant 1.000000e+00 : f32
    %60 = vector.broadcast %cst_28 : f32 to vector<2x8xf32>
    %61 = arith.addf %20, %60 : vector<2x8xf32>
    %62 = math.log %61 : vector<2x8xf32>
    %63 = arith.addf %59, %62 : vector<2x8xf32>
    %cst_29 = arith.constant 1.000000e+00 : f32
    %64 = vector.broadcast %cst_29 : f32 to vector<2x8xf32>
    %65 = arith.addf %61, %64 : vector<2x8xf32>
    %66 = math.log %65 : vector<2x8xf32>
    %67 = arith.addf %63, %66 : vector<2x8xf32>
    %cst_30 = arith.constant 1.000000e+00 : f32
    %68 = vector.broadcast %cst_30 : f32 to vector<2x8xf32>
    %69 = arith.addf %65, %68 : vector<2x8xf32>
    %cst_31 = arith.constant 1.000000e+00 : f32
    %70 = vector.broadcast %cst_31 : f32 to vector<2x8xf32>
    %71 = arith.divf %70, %69 : vector<2x8xf32>
    %72 = arith.mulf %71, %71 : vector<2x8xf32>
    %cst_32 = arith.constant 0.0833333358 : f32
    %73 = vector.broadcast %cst_32 : f32 to vector<2x8xf32>
    %74 = arith.mulf %71, %73 : vector<2x8xf32>
    %75 = arith.mulf %71, %72 : vector<2x8xf32>
    %cst_33 = arith.constant 0.00277777785 : f32
    %76 = vector.broadcast %cst_33 : f32 to vector<2x8xf32>
    %77 = arith.mulf %75, %76 : vector<2x8xf32>
    %78 = arith.subf %74, %77 : vector<2x8xf32>
    %79 = arith.mulf %71, %72 : vector<2x8xf32>
    %80 = arith.mulf %79, %72 : vector<2x8xf32>
    %cst_34 = arith.constant 7.93650805E-4 : f32
    %81 = vector.broadcast %cst_34 : f32 to vector<2x8xf32>
    %82 = arith.mulf %80, %81 : vector<2x8xf32>
    %83 = arith.addf %78, %82 : vector<2x8xf32>
    %cst_35 = arith.constant 5.000000e-01 : f32
    %84 = vector.broadcast %cst_35 : f32 to vector<2x8xf32>
    %85 = arith.subf %69, %84 : vector<2x8xf32>
    %86 = math.log %69 : vector<2x8xf32>
    %87 = arith.mulf %85, %86 : vector<2x8xf32>
    %88 = arith.subf %87, %69 : vector<2x8xf32>
    %cst_36 = arith.constant 0.918938517 : f32
    %89 = vector.broadcast %cst_36 : f32 to vector<2x8xf32>
    %90 = arith.addf %88, %89 : vector<2x8xf32>
    %91 = arith.addf %90, %83 : vector<2x8xf32>
    %92 = arith.subf %91, %67 : vector<2x8xf32>
    %cst_37 = arith.constant 1.000000e+00 : f32
    %93 = vector.broadcast %cst_37 : f32 to vector<2x8xf32>
    %94 = arith.subf %93, %8 : vector<2x8xf32>
    %cst_38 = arith.constant dense<0.000000e+00> : vector<2xf32>
    %95 = vector.multi_reduction <add>, %20, %cst_38 [1] : vector<2x8xf32> to vector<2xf32>
    %96 = vector.shape_cast %95 : vector<2xf32> to vector<2x1xf32>
    %cst_39 = arith.constant dense<0.000000e+00> : vector<2xf32>
    %97 = vector.multi_reduction <add>, %8, %cst_39 [1] : vector<2x8xf32> to vector<2xf32>
    %98 = vector.shape_cast %97 : vector<2xf32> to vector<2x1xf32>
    %cst_40 = arith.constant 1.000000e+00 : f32
    %99 = vector.broadcast %cst_40 : f32 to vector<2x8xf32>
    %100 = arith.subf %20, %99 : vector<2x8xf32>
    %101 = arith.mulf %100, %94 : vector<2x8xf32>
    %cst_41 = arith.constant 1.000000e+00 : f32
    %102 = vector.broadcast %cst_41 : f32 to vector<2x8xf32>
    %103 = arith.addf %101, %102 : vector<2x8xf32>
    %cst_42 = arith.constant dense<0.000000e+00> : vector<2xf32>
    %104 = vector.multi_reduction <add>, %103, %cst_42 [1] : vector<2x8xf32> to vector<2xf32>
    %105 = vector.shape_cast %104 : vector<2xf32> to vector<2x1xf32>
    %cst_43 = arith.constant 0.000000e+00 : f32
    %106 = vector.broadcast %cst_43 : f32 to vector<2x8xf32>
    %107 = arith.subf %106, %8 : vector<2x8xf32>
    %108 = arith.mulf %107, %56 : vector<2x8xf32>
    %cst_44 = arith.constant 1.000000e+00 : f32
    %109 = vector.broadcast %cst_44 : f32 to vector<2x8xf32>
    %110 = arith.subf %20, %109 : vector<2x8xf32>
    %111 = arith.mulf %110, %56 : vector<2x8xf32>
    %112 = arith.subf %111, %92 : vector<2x8xf32>
    %113 = arith.mulf %94, %112 : vector<2x8xf32>
    %cst_45 = arith.constant 1.000000e-03 : f32
    %114 = vector.broadcast %cst_45 : f32 to vector<2x8xf32>
    %115 = arith.mulf %114, %113 : vector<2x8xf32>
    %116 = arith.addf %108, %115 : vector<2x8xf32>
    %cst_46 = arith.constant dense<0.000000e+00> : vector<2xf32>
    %117 = vector.multi_reduction <add>, %116, %cst_46 [1] : vector<2x8xf32> to vector<2xf32>
    %118 = vector.shape_cast %117 : vector<2xf32> to vector<2x1xf32>
    %c0_47 = arith.constant 0 : index
    %c0_48 = arith.constant 0 : index
    %119 = vector.load %arg17[%c0_47, %c0_48] : memref<2x1xf32, #tpu.memory_space<vmem>>, vector<2x1xf32>
    %120 = arith.addf %119, %96 : vector<2x1xf32>
    %c0_49 = arith.constant 0 : index
    %c0_50 = arith.constant 0 : index
    %121 = vector.load %arg17[%c0_49, %c0_50] : memref<2x1xf32, #tpu.memory_space<vmem>>, vector<2x1xf32>
    tpu.vector_store %arg17[%c0_49, %c0_50], %120 {strides = array<i32>} : memref<2x1xf32, #tpu.memory_space<vmem>>, vector<2x1xf32>,
    %c0_51 = arith.constant 0 : index
    %c0_52 = arith.constant 0 : index
    %122 = vector.load %arg18[%c0_51, %c0_52] : memref<2x1xf32, #tpu.memory_space<vmem>>, vector<2x1xf32>
    %123 = arith.addf %122, %98 : vector<2x1xf32>
    %c0_53 = arith.constant 0 : index
    %c0_54 = arith.constant 0 : index
    %124 = vector.load %arg18[%c0_53, %c0_54] : memref<2x1xf32, #tpu.memory_space<vmem>>, vector<2x1xf32>
    tpu.vector_store %arg18[%c0_53, %c0_54], %123 {strides = array<i32>} : memref<2x1xf32, #tpu.memory_space<vmem>>, vector<2x1xf32>,
    %c0_55 = arith.constant 0 : index
    %c0_56 = arith.constant 0 : index
    %125 = vector.load %arg19[%c0_55, %c0_56] : memref<2x1xf32, #tpu.memory_space<vmem>>, vector<2x1xf32>
    %126 = arith.addf %125, %105 : vector<2x1xf32>
    %c0_57 = arith.constant 0 : index
    %c0_58 = arith.constant 0 : index
    %127 = vector.load %arg19[%c0_57, %c0_58] : memref<2x1xf32, #tpu.memory_space<vmem>>, vector<2x1xf32>
    tpu.vector_store %arg19[%c0_57, %c0_58], %126 {strides = array<i32>} : memref<2x1xf32, #tpu.memory_space<vmem>>, vector<2x1xf32>,
    %c0_59 = arith.constant 0 : index
    %c0_60 = arith.constant 0 : index
    %128 = vector.load %arg20[%c0_59, %c0_60] : memref<2x1xf32, #tpu.memory_space<vmem>>, vector<2x1xf32>
    %129 = arith.addf %128, %118 : vector<2x1xf32>
    %c0_61 = arith.constant 0 : index
    %c0_62 = arith.constant 0 : index
    %130 = vector.load %arg20[%c0_61, %c0_62] : memref<2x1xf32, #tpu.memory_space<vmem>>, vector<2x1xf32>
    tpu.vector_store %arg20[%c0_61, %c0_62], %129 {strides = array<i32>} : memref<2x1xf32, #tpu.memory_space<vmem>>, vector<2x1xf32>,
    %cst_63 = arith.constant 0.000000e+00 : f32
    %131 = vector.broadcast %cst_63 : f32 to vector<2x8xf32>
    %132 = arith.maximumf %16, %131 : vector<2x8xf32>
    %cst_64 = arith.constant 1.000000e+00 : f32
    %133 = vector.broadcast %cst_64 : f32 to vector<2x8xf32>
    %134 = arith.addf %132, %133 : vector<2x8xf32>
    %cst_65 = arith.constant 0.000000e+00 : f32
    %135 = vector.broadcast %cst_65 : f32 to vector<2x8xf32>
    %cst_66 = arith.constant 1.000000e+00 : f32
    %136 = vector.broadcast %cst_66 : f32 to vector<2x8xf32>
    %137 = arith.divf %136, %134 : vector<2x8xf32>
    %138 = arith.addf %135, %137 : vector<2x8xf32>
    %cst_67 = arith.constant 1.000000e+00 : f32
    %139 = vector.broadcast %cst_67 : f32 to vector<2x8xf32>
    %140 = arith.addf %134, %139 : vector<2x8xf32>
    %cst_68 = arith.constant 1.000000e+00 : f32
    %141 = vector.broadcast %cst_68 : f32 to vector<2x8xf32>
    %142 = arith.divf %141, %140 : vector<2x8xf32>
    %143 = arith.addf %138, %142 : vector<2x8xf32>
    %cst_69 = arith.constant 1.000000e+00 : f32
    %144 = vector.broadcast %cst_69 : f32 to vector<2x8xf32>
    %145 = arith.addf %140, %144 : vector<2x8xf32>
    %cst_70 = arith.constant 1.000000e+00 : f32
    %146 = vector.broadcast %cst_70 : f32 to vector<2x8xf32>
    %147 = arith.divf %146, %145 : vector<2x8xf32>
    %148 = arith.addf %143, %147 : vector<2x8xf32>
    %cst_71 = arith.constant 1.000000e+00 : f32
    %149 = vector.broadcast %cst_71 : f32 to vector<2x8xf32>
    %150 = arith.addf %145, %149 : vector<2x8xf32>
    %cst_72 = arith.constant 1.000000e+00 : f32
    %151 = vector.broadcast %cst_72 : f32 to vector<2x8xf32>
    %152 = arith.divf %151, %150 : vector<2x8xf32>
    %153 = arith.mulf %152, %152 : vector<2x8xf32>
    %154 = math.log %150 : vector<2x8xf32>
    %cst_73 = arith.constant 5.000000e-01 : f32
    %155 = vector.broadcast %cst_73 : f32 to vector<2x8xf32>
    %156 = arith.mulf %155, %152 : vector<2x8xf32>
    %157 = arith.subf %154, %156 : vector<2x8xf32>
    %cst_74 = arith.constant 0.0833333358 : f32
    %158 = vector.broadcast %cst_74 : f32 to vector<2x8xf32>
    %159 = arith.mulf %153, %158 : vector<2x8xf32>
    %160 = arith.subf %157, %159 : vector<2x8xf32>
    %161 = arith.mulf %153, %153 : vector<2x8xf32>
    %cst_75 = arith.constant 0.00833333377 : f32
    %162 = vector.broadcast %cst_75 : f32 to vector<2x8xf32>
    %163 = arith.mulf %161, %162 : vector<2x8xf32>
    %164 = arith.addf %160, %163 : vector<2x8xf32>
    %165 = arith.mulf %153, %153 : vector<2x8xf32>
    %166 = arith.mulf %165, %153 : vector<2x8xf32>
    %cst_76 = arith.constant 0.0039682542 : f32
    %167 = vector.broadcast %cst_76 : f32 to vector<2x8xf32>
    %168 = arith.mulf %166, %167 : vector<2x8xf32>
    %169 = arith.subf %164, %168 : vector<2x8xf32>
    %170 = arith.subf %169, %148 : vector<2x8xf32>
    %cst_77 = arith.constant 0.000000e+00 : f32
    %171 = vector.broadcast %cst_77 : f32 to vector<2x8xf32>
    %172 = math.log %134 : vector<2x8xf32>
    %173 = arith.addf %171, %172 : vector<2x8xf32>
    %cst_78 = arith.constant 1.000000e+00 : f32
    %174 = vector.broadcast %cst_78 : f32 to vector<2x8xf32>
    %175 = arith.addf %134, %174 : vector<2x8xf32>
    %176 = math.log %175 : vector<2x8xf32>
    %177 = arith.addf %173, %176 : vector<2x8xf32>
    %cst_79 = arith.constant 1.000000e+00 : f32
    %178 = vector.broadcast %cst_79 : f32 to vector<2x8xf32>
    %179 = arith.addf %175, %178 : vector<2x8xf32>
    %180 = math.log %179 : vector<2x8xf32>
    %181 = arith.addf %177, %180 : vector<2x8xf32>
    %cst_80 = arith.constant 1.000000e+00 : f32
    %182 = vector.broadcast %cst_80 : f32 to vector<2x8xf32>
    %183 = arith.addf %179, %182 : vector<2x8xf32>
    %cst_81 = arith.constant 1.000000e+00 : f32
    %184 = vector.broadcast %cst_81 : f32 to vector<2x8xf32>
    %185 = arith.divf %184, %183 : vector<2x8xf32>
    %186 = arith.mulf %185, %185 : vector<2x8xf32>
    %cst_82 = arith.constant 0.0833333358 : f32
    %187 = vector.broadcast %cst_82 : f32 to vector<2x8xf32>
    %188 = arith.mulf %185, %187 : vector<2x8xf32>
    %189 = arith.mulf %185, %186 : vector<2x8xf32>
    %cst_83 = arith.constant 0.00277777785 : f32
    %190 = vector.broadcast %cst_83 : f32 to vector<2x8xf32>
    %191 = arith.mulf %189, %190 : vector<2x8xf32>
    %192 = arith.subf %188, %191 : vector<2x8xf32>
    %193 = arith.mulf %185, %186 : vector<2x8xf32>
    %194 = arith.mulf %193, %186 : vector<2x8xf32>
    %cst_84 = arith.constant 7.93650805E-4 : f32
    %195 = vector.broadcast %cst_84 : f32 to vector<2x8xf32>
    %196 = arith.mulf %194, %195 : vector<2x8xf32>
    %197 = arith.addf %192, %196 : vector<2x8xf32>
    %cst_85 = arith.constant 5.000000e-01 : f32
    %198 = vector.broadcast %cst_85 : f32 to vector<2x8xf32>
    %199 = arith.subf %183, %198 : vector<2x8xf32>
    %200 = math.log %183 : vector<2x8xf32>
    %201 = arith.mulf %199, %200 : vector<2x8xf32>
    %202 = arith.subf %201, %183 : vector<2x8xf32>
    %cst_86 = arith.constant 0.918938517 : f32
    %203 = vector.broadcast %cst_86 : f32 to vector<2x8xf32>
    %204 = arith.addf %202, %203 : vector<2x8xf32>
    %205 = arith.addf %204, %197 : vector<2x8xf32>
    %206 = arith.subf %205, %181 : vector<2x8xf32>
    %cst_87 = arith.constant 1.000000e+00 : f32
    %207 = vector.broadcast %cst_87 : f32 to vector<2x8xf32>
    %208 = arith.subf %207, %8 : vector<2x8xf32>
    %cst_88 = arith.constant dense<0.000000e+00> : vector<2xf32>
    %209 = vector.multi_reduction <add>, %134, %cst_88 [1] : vector<2x8xf32> to vector<2xf32>
    %210 = vector.shape_cast %209 : vector<2xf32> to vector<2x1xf32>
    %cst_89 = arith.constant dense<0.000000e+00> : vector<2xf32>
    %211 = vector.multi_reduction <add>, %8, %cst_89 [1] : vector<2x8xf32> to vector<2xf32>
    %212 = vector.shape_cast %211 : vector<2xf32> to vector<2x1xf32>
    %cst_90 = arith.constant 1.000000e+00 : f32
    %213 = vector.broadcast %cst_90 : f32 to vector<2x8xf32>
    %214 = arith.subf %134, %213 : vector<2x8xf32>
    %215 = arith.mulf %214, %208 : vector<2x8xf32>
    %cst_91 = arith.constant 1.000000e+00 : f32
    %216 = vector.broadcast %cst_91 : f32 to vector<2x8xf32>
    %217 = arith.addf %215, %216 : vector<2x8xf32>
    %cst_92 = arith.constant dense<0.000000e+00> : vector<2xf32>
    %218 = vector.multi_reduction <add>, %217, %cst_92 [1] : vector<2x8xf32> to vector<2xf32>
    %219 = vector.shape_cast %218 : vector<2xf32> to vector<2x1xf32>
    %cst_93 = arith.constant 0.000000e+00 : f32
    %220 = vector.broadcast %cst_93 : f32 to vector<2x8xf32>
    %221 = arith.subf %220, %8 : vector<2x8xf32>
    %222 = arith.mulf %221, %170 : vector<2x8xf32>
    %cst_94 = arith.constant 1.000000e+00 : f32
    %223 = vector.broadcast %cst_94 : f32 to vector<2x8xf32>
    %224 = arith.subf %134, %223 : vector<2x8xf32>
    %225 = arith.mulf %224, %170 : vector<2x8xf32>
    %226 = arith.subf %225, %206 : vector<2x8xf32>
    %227 = arith.mulf %208, %226 : vector<2x8xf32>
    %cst_95 = arith.constant 1.000000e-03 : f32
    %228 = vector.broadcast %cst_95 : f32 to vector<2x8xf32>
    %229 = arith.mulf %228, %227 : vector<2x8xf32>
    %230 = arith.addf %222, %229 : vector<2x8xf32>
    %cst_96 = arith.constant dense<0.000000e+00> : vector<2xf32>
    %231 = vector.multi_reduction <add>, %230, %cst_96 [1] : vector<2x8xf32> to vector<2xf32>
    %232 = vector.shape_cast %231 : vector<2xf32> to vector<2x1xf32>
    %c0_97 = arith.constant 0 : index
    %c0_98 = arith.constant 0 : index
    %233 = vector.load %arg21[%c0_97, %c0_98] : memref<2x1xf32, #tpu.memory_space<vmem>>, vector<2x1xf32>
    %234 = arith.addf %233, %210 : vector<2x1xf32>
    %c0_99 = arith.constant 0 : index
    %c0_100 = arith.constant 0 : index
    %235 = vector.load %arg21[%c0_99, %c0_100] : memref<2x1xf32, #tpu.memory_space<vmem>>, vector<2x1xf32>
    tpu.vector_store %arg21[%c0_99, %c0_100], %234 {strides = array<i32>} : memref<2x1xf32, #tpu.memory_space<vmem>>, vector<2x1xf32>,
    %c0_101 = arith.constant 0 : index
    %c0_102 = arith.constant 0 : index
    %236 = vector.load %arg22[%c0_101, %c0_102] : memref<2x1xf32, #tpu.memory_space<vmem>>, vector<2x1xf32>
    %237 = arith.addf %236, %212 : vector<2x1xf32>
    %c0_103 = arith.constant 0 : index
    %c0_104 = arith.constant 0 : index
    %238 = vector.load %arg22[%c0_103, %c0_104] : memref<2x1xf32, #tpu.memory_space<vmem>>, vector<2x1xf32>
    tpu.vector_store %arg22[%c0_103, %c0_104], %237 {strides = array<i32>} : memref<2x1xf32, #tpu.memory_space<vmem>>, vector<2x1xf32>,
    %c0_105 = arith.constant 0 : index
    %c0_106 = arith.constant 0 : index
    %239 = vector.load %arg23[%c0_105, %c0_106] : memref<2x1xf32, #tpu.memory_space<vmem>>, vector<2x1xf32>
    %240 = arith.addf %239, %219 : vector<2x1xf32>
    %c0_107 = arith.constant 0 : index
    %c0_108 = arith.constant 0 : index
    %241 = vector.load %arg23[%c0_107, %c0_108] : memref<2x1xf32, #tpu.memory_space<vmem>>, vector<2x1xf32>
    tpu.vector_store %arg23[%c0_107, %c0_108], %240 {strides = array<i32>} : memref<2x1xf32, #tpu.memory_space<vmem>>, vector<2x1xf32>,
    %c0_109 = arith.constant 0 : index
    %c0_110 = arith.constant 0 : index
    %242 = vector.load %arg24[%c0_109, %c0_110] : memref<2x1xf32, #tpu.memory_space<vmem>>, vector<2x1xf32>
    %243 = arith.addf %242, %232 : vector<2x1xf32>
    %c0_111 = arith.constant 0 : index
    %c0_112 = arith.constant 0 : index
    %244 = vector.load %arg24[%c0_111, %c0_112] : memref<2x1xf32, #tpu.memory_space<vmem>>, vector<2x1xf32>
    tpu.vector_store %arg24[%c0_111, %c0_112], %243 {strides = array<i32>} : memref<2x1xf32, #tpu.memory_space<vmem>>, vector<2x1xf32>,
    %c0_i32_113 = arith.constant 0 : i32
    %245 = arith.cmpi eq, %arg0, %c0_i32_113 : i32
    %246 = arith.extui %245 : i1 to i32
    %c0_i32_114 = arith.constant 0 : i32
    %247 = arith.cmpi ne, %246, %c0_i32_114 : i32
    scf.if %247 {
      %c0_115 = arith.constant 0 : index
      %c0_116 = arith.constant 0 : index
      %248 = vector.load %arg17[%c0_115, %c0_116] : memref<2x1xf32, #tpu.memory_space<vmem>>, vector<2x1xf32>
      %c0_117 = arith.constant 0 : index
      %c0_118 = arith.constant 0 : index
      %249 = vector.load %arg18[%c0_117, %c0_118] : memref<2x1xf32, #tpu.memory_space<vmem>>, vector<2x1xf32>
      %c0_119 = arith.constant 0 : index
      %c0_120 = arith.constant 0 : index
      %250 = vector.load %arg19[%c0_119, %c0_120] : memref<2x1xf32, #tpu.memory_space<vmem>>, vector<2x1xf32>
      %c0_121 = arith.constant 0 : index
      %c0_122 = arith.constant 0 : index
      %251 = vector.load %arg20[%c0_121, %c0_122] : memref<2x1xf32, #tpu.memory_space<vmem>>, vector<2x1xf32>
      %cst_123 = arith.constant 0.000000e+00 : f32
      %252 = vector.broadcast %cst_123 : f32 to vector<2x1xf32>
      %cst_124 = arith.constant 1.000000e+00 : f32
      %253 = vector.broadcast %cst_124 : f32 to vector<2x1xf32>
      %254 = arith.divf %253, %248 : vector<2x1xf32>
      %255 = arith.addf %252, %254 : vector<2x1xf32>
      %cst_125 = arith.constant 1.000000e+00 : f32
      %256 = vector.broadcast %cst_125 : f32 to vector<2x1xf32>
      %257 = arith.addf %248, %256 : vector<2x1xf32>
      %cst_126 = arith.constant 1.000000e+00 : f32
      %258 = vector.broadcast %cst_126 : f32 to vector<2x1xf32>
      %259 = arith.divf %258, %257 : vector<2x1xf32>
      %260 = arith.addf %255, %259 : vector<2x1xf32>
      %cst_127 = arith.constant 1.000000e+00 : f32
      %261 = vector.broadcast %cst_127 : f32 to vector<2x1xf32>
      %262 = arith.addf %257, %261 : vector<2x1xf32>
      %cst_128 = arith.constant 1.000000e+00 : f32
      %263 = vector.broadcast %cst_128 : f32 to vector<2x1xf32>
      %264 = arith.divf %263, %262 : vector<2x1xf32>
      %265 = arith.addf %260, %264 : vector<2x1xf32>
      %cst_129 = arith.constant 1.000000e+00 : f32
      %266 = vector.broadcast %cst_129 : f32 to vector<2x1xf32>
      %267 = arith.addf %262, %266 : vector<2x1xf32>
      %cst_130 = arith.constant 1.000000e+00 : f32
      %268 = vector.broadcast %cst_130 : f32 to vector<2x1xf32>
      %269 = arith.divf %268, %267 : vector<2x1xf32>
      %270 = arith.mulf %269, %269 : vector<2x1xf32>
      %271 = math.log %267 : vector<2x1xf32>
      %cst_131 = arith.constant 5.000000e-01 : f32
      %272 = vector.broadcast %cst_131 : f32 to vector<2x1xf32>
      %273 = arith.mulf %272, %269 : vector<2x1xf32>
      %274 = arith.subf %271, %273 : vector<2x1xf32>
      %cst_132 = arith.constant 0.0833333358 : f32
      %275 = vector.broadcast %cst_132 : f32 to vector<2x1xf32>
      %276 = arith.mulf %270, %275 : vector<2x1xf32>
      %277 = arith.subf %274, %276 : vector<2x1xf32>
      %278 = arith.mulf %270, %270 : vector<2x1xf32>
      %cst_133 = arith.constant 0.00833333377 : f32
      %279 = vector.broadcast %cst_133 : f32 to vector<2x1xf32>
      %280 = arith.mulf %278, %279 : vector<2x1xf32>
      %281 = arith.addf %277, %280 : vector<2x1xf32>
      %282 = arith.mulf %270, %270 : vector<2x1xf32>
      %283 = arith.mulf %282, %270 : vector<2x1xf32>
      %cst_134 = arith.constant 0.0039682542 : f32
      %284 = vector.broadcast %cst_134 : f32 to vector<2x1xf32>
      %285 = arith.mulf %283, %284 : vector<2x1xf32>
      %286 = arith.subf %281, %285 : vector<2x1xf32>
      %287 = arith.subf %286, %265 : vector<2x1xf32>
      %288 = arith.mulf %287, %249 : vector<2x1xf32>
      %289 = arith.addf %288, %251 : vector<2x1xf32>
      %cst_135 = arith.constant 0.000000e+00 : f32
      %290 = vector.broadcast %cst_135 : f32 to vector<2x1xf32>
      %291 = math.log %250 : vector<2x1xf32>
      %292 = arith.addf %290, %291 : vector<2x1xf32>
      %cst_136 = arith.constant 1.000000e+00 : f32
      %293 = vector.broadcast %cst_136 : f32 to vector<2x1xf32>
      %294 = arith.addf %250, %293 : vector<2x1xf32>
      %295 = math.log %294 : vector<2x1xf32>
      %296 = arith.addf %292, %295 : vector<2x1xf32>
      %cst_137 = arith.constant 1.000000e+00 : f32
      %297 = vector.broadcast %cst_137 : f32 to vector<2x1xf32>
      %298 = arith.addf %294, %297 : vector<2x1xf32>
      %299 = math.log %298 : vector<2x1xf32>
      %300 = arith.addf %296, %299 : vector<2x1xf32>
      %cst_138 = arith.constant 1.000000e+00 : f32
      %301 = vector.broadcast %cst_138 : f32 to vector<2x1xf32>
      %302 = arith.addf %298, %301 : vector<2x1xf32>
      %cst_139 = arith.constant 1.000000e+00 : f32
      %303 = vector.broadcast %cst_139 : f32 to vector<2x1xf32>
      %304 = arith.divf %303, %302 : vector<2x1xf32>
      %305 = arith.mulf %304, %304 : vector<2x1xf32>
      %cst_140 = arith.constant 0.0833333358 : f32
      %306 = vector.broadcast %cst_140 : f32 to vector<2x1xf32>
      %307 = arith.mulf %304, %306 : vector<2x1xf32>
      %308 = arith.mulf %304, %305 : vector<2x1xf32>
      %cst_141 = arith.constant 0.00277777785 : f32
      %309 = vector.broadcast %cst_141 : f32 to vector<2x1xf32>
      %310 = arith.mulf %308, %309 : vector<2x1xf32>
      %311 = arith.subf %307, %310 : vector<2x1xf32>
      %312 = arith.mulf %304, %305 : vector<2x1xf32>
      %313 = arith.mulf %312, %305 : vector<2x1xf32>
      %cst_142 = arith.constant 7.93650805E-4 : f32
      %314 = vector.broadcast %cst_142 : f32 to vector<2x1xf32>
      %315 = arith.mulf %313, %314 : vector<2x1xf32>
      %316 = arith.addf %311, %315 : vector<2x1xf32>
      %cst_143 = arith.constant 5.000000e-01 : f32
      %317 = vector.broadcast %cst_143 : f32 to vector<2x1xf32>
      %318 = arith.subf %302, %317 : vector<2x1xf32>
      %319 = math.log %302 : vector<2x1xf32>
      %320 = arith.mulf %318, %319 : vector<2x1xf32>
      %321 = arith.subf %320, %302 : vector<2x1xf32>
      %cst_144 = arith.constant 0.918938517 : f32
      %322 = vector.broadcast %cst_144 : f32 to vector<2x1xf32>
      %323 = arith.addf %321, %322 : vector<2x1xf32>
      %324 = arith.addf %323, %316 : vector<2x1xf32>
      %325 = arith.subf %324, %300 : vector<2x1xf32>
      %cst_145 = arith.constant 12.8018274 : f32
      %326 = vector.broadcast %cst_145 : f32 to vector<2x1xf32>
      %327 = arith.subf %325, %326 : vector<2x1xf32>
      %cst_146 = arith.constant 0.000000e+00 : f32
      %328 = vector.broadcast %cst_146 : f32 to vector<2x1xf32>
      %cst_147 = arith.constant 1.000000e+00 : f32
      %329 = vector.broadcast %cst_147 : f32 to vector<2x1xf32>
      %330 = arith.divf %329, %250 : vector<2x1xf32>
      %331 = arith.addf %328, %330 : vector<2x1xf32>
      %cst_148 = arith.constant 1.000000e+00 : f32
      %332 = vector.broadcast %cst_148 : f32 to vector<2x1xf32>
      %333 = arith.addf %250, %332 : vector<2x1xf32>
      %cst_149 = arith.constant 1.000000e+00 : f32
      %334 = vector.broadcast %cst_149 : f32 to vector<2x1xf32>
      %335 = arith.divf %334, %333 : vector<2x1xf32>
      %336 = arith.addf %331, %335 : vector<2x1xf32>
      %cst_150 = arith.constant 1.000000e+00 : f32
      %337 = vector.broadcast %cst_150 : f32 to vector<2x1xf32>
      %338 = arith.addf %333, %337 : vector<2x1xf32>
      %cst_151 = arith.constant 1.000000e+00 : f32
      %339 = vector.broadcast %cst_151 : f32 to vector<2x1xf32>
      %340 = arith.divf %339, %338 : vector<2x1xf32>
      %341 = arith.addf %336, %340 : vector<2x1xf32>
      %cst_152 = arith.constant 1.000000e+00 : f32
      %342 = vector.broadcast %cst_152 : f32 to vector<2x1xf32>
      %343 = arith.addf %338, %342 : vector<2x1xf32>
      %cst_153 = arith.constant 1.000000e+00 : f32
      %344 = vector.broadcast %cst_153 : f32 to vector<2x1xf32>
      %345 = arith.divf %344, %343 : vector<2x1xf32>
      %346 = arith.mulf %345, %345 : vector<2x1xf32>
      %347 = math.log %343 : vector<2x1xf32>
      %cst_154 = arith.constant 5.000000e-01 : f32
      %348 = vector.broadcast %cst_154 : f32 to vector<2x1xf32>
      %349 = arith.mulf %348, %345 : vector<2x1xf32>
      %350 = arith.subf %347, %349 : vector<2x1xf32>
      %cst_155 = arith.constant 0.0833333358 : f32
      %351 = vector.broadcast %cst_155 : f32 to vector<2x1xf32>
      %352 = arith.mulf %346, %351 : vector<2x1xf32>
      %353 = arith.subf %350, %352 : vector<2x1xf32>
      %354 = arith.mulf %346, %346 : vector<2x1xf32>
      %cst_156 = arith.constant 0.00833333377 : f32
      %355 = vector.broadcast %cst_156 : f32 to vector<2x1xf32>
      %356 = arith.mulf %354, %355 : vector<2x1xf32>
      %357 = arith.addf %353, %356 : vector<2x1xf32>
      %358 = arith.mulf %346, %346 : vector<2x1xf32>
      %359 = arith.mulf %358, %346 : vector<2x1xf32>
      %cst_157 = arith.constant 0.0039682542 : f32
      %360 = vector.broadcast %cst_157 : f32 to vector<2x1xf32>
      %361 = arith.mulf %359, %360 : vector<2x1xf32>
      %362 = arith.subf %357, %361 : vector<2x1xf32>
      %363 = arith.subf %362, %341 : vector<2x1xf32>
      %cst_158 = arith.constant 1.000000e+01 : f32
      %364 = vector.broadcast %cst_158 : f32 to vector<2x1xf32>
      %365 = arith.subf %250, %364 : vector<2x1xf32>
      %366 = arith.mulf %363, %365 : vector<2x1xf32>
      %367 = arith.subf %327, %366 : vector<2x1xf32>
      %cst_159 = arith.constant 1.000000e-03 : f32
      %368 = vector.broadcast %cst_159 : f32 to vector<2x1xf32>
      %369 = arith.mulf %368, %367 : vector<2x1xf32>
      %370 = arith.addf %289, %369 : vector<2x1xf32>
      %cst_160 = arith.constant dense<0.000000e+00> : vector<1xf32>
      %371 = vector.multi_reduction <add>, %370, %cst_160 [0] : vector<2x1xf32> to vector<1xf32>
      %372 = vector.shape_cast %371 : vector<1xf32> to vector<1x1xf32>
      %cst_161 = arith.constant 5.000000e-01 : f32
      %373 = vector.broadcast %cst_161 : f32 to vector<1x1xf32>
      %374 = arith.mulf %372, %373 : vector<1x1xf32>
      %c0_162 = arith.constant 0 : index
      %c0_163 = arith.constant 0 : index
      %375 = vector.load %arg21[%c0_162, %c0_163] : memref<2x1xf32, #tpu.memory_space<vmem>>, vector<2x1xf32>
      %c0_164 = arith.constant 0 : index
      %c0_165 = arith.constant 0 : index
      %376 = vector.load %arg22[%c0_164, %c0_165] : memref<2x1xf32, #tpu.memory_space<vmem>>, vector<2x1xf32>
      %c0_166 = arith.constant 0 : index
      %c0_167 = arith.constant 0 : index
      %377 = vector.load %arg23[%c0_166, %c0_167] : memref<2x1xf32, #tpu.memory_space<vmem>>, vector<2x1xf32>
      %c0_168 = arith.constant 0 : index
      %c0_169 = arith.constant 0 : index
      %378 = vector.load %arg24[%c0_168, %c0_169] : memref<2x1xf32, #tpu.memory_space<vmem>>, vector<2x1xf32>
      %cst_170 = arith.constant 0.000000e+00 : f32
      %379 = vector.broadcast %cst_170 : f32 to vector<2x1xf32>
      %cst_171 = arith.constant 1.000000e+00 : f32
      %380 = vector.broadcast %cst_171 : f32 to vector<2x1xf32>
      %381 = arith.divf %380, %375 : vector<2x1xf32>
      %382 = arith.addf %379, %381 : vector<2x1xf32>
      %cst_172 = arith.constant 1.000000e+00 : f32
      %383 = vector.broadcast %cst_172 : f32 to vector<2x1xf32>
      %384 = arith.addf %375, %383 : vector<2x1xf32>
      %cst_173 = arith.constant 1.000000e+00 : f32
      %385 = vector.broadcast %cst_173 : f32 to vector<2x1xf32>
      %386 = arith.divf %385, %384 : vector<2x1xf32>
      %387 = arith.addf %382, %386 : vector<2x1xf32>
      %cst_174 = arith.constant 1.000000e+00 : f32
      %388 = vector.broadcast %cst_174 : f32 to vector<2x1xf32>
      %389 = arith.addf %384, %388 : vector<2x1xf32>
      %cst_175 = arith.constant 1.000000e+00 : f32
      %390 = vector.broadcast %cst_175 : f32 to vector<2x1xf32>
      %391 = arith.divf %390, %389 : vector<2x1xf32>
      %392 = arith.addf %387, %391 : vector<2x1xf32>
      %cst_176 = arith.constant 1.000000e+00 : f32
      %393 = vector.broadcast %cst_176 : f32 to vector<2x1xf32>
      %394 = arith.addf %389, %393 : vector<2x1xf32>
      %cst_177 = arith.constant 1.000000e+00 : f32
      %395 = vector.broadcast %cst_177 : f32 to vector<2x1xf32>
      %396 = arith.divf %395, %394 : vector<2x1xf32>
      %397 = arith.mulf %396, %396 : vector<2x1xf32>
      %398 = math.log %394 : vector<2x1xf32>
      %cst_178 = arith.constant 5.000000e-01 : f32
      %399 = vector.broadcast %cst_178 : f32 to vector<2x1xf32>
      %400 = arith.mulf %399, %396 : vector<2x1xf32>
      %401 = arith.subf %398, %400 : vector<2x1xf32>
      %cst_179 = arith.constant 0.0833333358 : f32
      %402 = vector.broadcast %cst_179 : f32 to vector<2x1xf32>
      %403 = arith.mulf %397, %402 : vector<2x1xf32>
      %404 = arith.subf %401, %403 : vector<2x1xf32>
      %405 = arith.mulf %397, %397 : vector<2x1xf32>
      %cst_180 = arith.constant 0.00833333377 : f32
      %406 = vector.broadcast %cst_180 : f32 to vector<2x1xf32>
      %407 = arith.mulf %405, %406 : vector<2x1xf32>
      %408 = arith.addf %404, %407 : vector<2x1xf32>
      %409 = arith.mulf %397, %397 : vector<2x1xf32>
      %410 = arith.mulf %409, %397 : vector<2x1xf32>
      %cst_181 = arith.constant 0.0039682542 : f32
      %411 = vector.broadcast %cst_181 : f32 to vector<2x1xf32>
      %412 = arith.mulf %410, %411 : vector<2x1xf32>
      %413 = arith.subf %408, %412 : vector<2x1xf32>
      %414 = arith.subf %413, %392 : vector<2x1xf32>
      %415 = arith.mulf %414, %376 : vector<2x1xf32>
      %416 = arith.addf %415, %378 : vector<2x1xf32>
      %cst_182 = arith.constant 0.000000e+00 : f32
      %417 = vector.broadcast %cst_182 : f32 to vector<2x1xf32>
      %418 = math.log %377 : vector<2x1xf32>
      %419 = arith.addf %417, %418 : vector<2x1xf32>
      %cst_183 = arith.constant 1.000000e+00 : f32
      %420 = vector.broadcast %cst_183 : f32 to vector<2x1xf32>
      %421 = arith.addf %377, %420 : vector<2x1xf32>
      %422 = math.log %421 : vector<2x1xf32>
      %423 = arith.addf %419, %422 : vector<2x1xf32>
      %cst_184 = arith.constant 1.000000e+00 : f32
      %424 = vector.broadcast %cst_184 : f32 to vector<2x1xf32>
      %425 = arith.addf %421, %424 : vector<2x1xf32>
      %426 = math.log %425 : vector<2x1xf32>
      %427 = arith.addf %423, %426 : vector<2x1xf32>
      %cst_185 = arith.constant 1.000000e+00 : f32
      %428 = vector.broadcast %cst_185 : f32 to vector<2x1xf32>
      %429 = arith.addf %425, %428 : vector<2x1xf32>
      %cst_186 = arith.constant 1.000000e+00 : f32
      %430 = vector.broadcast %cst_186 : f32 to vector<2x1xf32>
      %431 = arith.divf %430, %429 : vector<2x1xf32>
      %432 = arith.mulf %431, %431 : vector<2x1xf32>
      %cst_187 = arith.constant 0.0833333358 : f32
      %433 = vector.broadcast %cst_187 : f32 to vector<2x1xf32>
      %434 = arith.mulf %431, %433 : vector<2x1xf32>
      %435 = arith.mulf %431, %432 : vector<2x1xf32>
      %cst_188 = arith.constant 0.00277777785 : f32
      %436 = vector.broadcast %cst_188 : f32 to vector<2x1xf32>
      %437 = arith.mulf %435, %436 : vector<2x1xf32>
      %438 = arith.subf %434, %437 : vector<2x1xf32>
      %439 = arith.mulf %431, %432 : vector<2x1xf32>
      %440 = arith.mulf %439, %432 : vector<2x1xf32>
      %cst_189 = arith.constant 7.93650805E-4 : f32
      %441 = vector.broadcast %cst_189 : f32 to vector<2x1xf32>
      %442 = arith.mulf %440, %441 : vector<2x1xf32>
      %443 = arith.addf %438, %442 : vector<2x1xf32>
      %cst_190 = arith.constant 5.000000e-01 : f32
      %444 = vector.broadcast %cst_190 : f32 to vector<2x1xf32>
      %445 = arith.subf %429, %444 : vector<2x1xf32>
      %446 = math.log %429 : vector<2x1xf32>
      %447 = arith.mulf %445, %446 : vector<2x1xf32>
      %448 = arith.subf %447, %429 : vector<2x1xf32>
      %cst_191 = arith.constant 0.918938517 : f32
      %449 = vector.broadcast %cst_191 : f32 to vector<2x1xf32>
      %450 = arith.addf %448, %449 : vector<2x1xf32>
      %451 = arith.addf %450, %443 : vector<2x1xf32>
      %452 = arith.subf %451, %427 : vector<2x1xf32>
      %cst_192 = arith.constant 12.8018274 : f32
      %453 = vector.broadcast %cst_192 : f32 to vector<2x1xf32>
      %454 = arith.subf %452, %453 : vector<2x1xf32>
      %cst_193 = arith.constant 0.000000e+00 : f32
      %455 = vector.broadcast %cst_193 : f32 to vector<2x1xf32>
      %cst_194 = arith.constant 1.000000e+00 : f32
      %456 = vector.broadcast %cst_194 : f32 to vector<2x1xf32>
      %457 = arith.divf %456, %377 : vector<2x1xf32>
      %458 = arith.addf %455, %457 : vector<2x1xf32>
      %cst_195 = arith.constant 1.000000e+00 : f32
      %459 = vector.broadcast %cst_195 : f32 to vector<2x1xf32>
      %460 = arith.addf %377, %459 : vector<2x1xf32>
      %cst_196 = arith.constant 1.000000e+00 : f32
      %461 = vector.broadcast %cst_196 : f32 to vector<2x1xf32>
      %462 = arith.divf %461, %460 : vector<2x1xf32>
      %463 = arith.addf %458, %462 : vector<2x1xf32>
      %cst_197 = arith.constant 1.000000e+00 : f32
      %464 = vector.broadcast %cst_197 : f32 to vector<2x1xf32>
      %465 = arith.addf %460, %464 : vector<2x1xf32>
      %cst_198 = arith.constant 1.000000e+00 : f32
      %466 = vector.broadcast %cst_198 : f32 to vector<2x1xf32>
      %467 = arith.divf %466, %465 : vector<2x1xf32>
      %468 = arith.addf %463, %467 : vector<2x1xf32>
      %cst_199 = arith.constant 1.000000e+00 : f32
      %469 = vector.broadcast %cst_199 : f32 to vector<2x1xf32>
      %470 = arith.addf %465, %469 : vector<2x1xf32>
      %cst_200 = arith.constant 1.000000e+00 : f32
      %471 = vector.broadcast %cst_200 : f32 to vector<2x1xf32>
      %472 = arith.divf %471, %470 : vector<2x1xf32>
      %473 = arith.mulf %472, %472 : vector<2x1xf32>
      %474 = math.log %470 : vector<2x1xf32>
      %cst_201 = arith.constant 5.000000e-01 : f32
      %475 = vector.broadcast %cst_201 : f32 to vector<2x1xf32>
      %476 = arith.mulf %475, %472 : vector<2x1xf32>
      %477 = arith.subf %474, %476 : vector<2x1xf32>
      %cst_202 = arith.constant 0.0833333358 : f32
      %478 = vector.broadcast %cst_202 : f32 to vector<2x1xf32>
      %479 = arith.mulf %473, %478 : vector<2x1xf32>
      %480 = arith.subf %477, %479 : vector<2x1xf32>
      %481 = arith.mulf %473, %473 : vector<2x1xf32>
      %cst_203 = arith.constant 0.00833333377 : f32
      %482 = vector.broadcast %cst_203 : f32 to vector<2x1xf32>
      %483 = arith.mulf %481, %482 : vector<2x1xf32>
      %484 = arith.addf %480, %483 : vector<2x1xf32>
      %485 = arith.mulf %473, %473 : vector<2x1xf32>
      %486 = arith.mulf %485, %473 : vector<2x1xf32>
      %cst_204 = arith.constant 0.0039682542 : f32
      %487 = vector.broadcast %cst_204 : f32 to vector<2x1xf32>
      %488 = arith.mulf %486, %487 : vector<2x1xf32>
      %489 = arith.subf %484, %488 : vector<2x1xf32>
      %490 = arith.subf %489, %468 : vector<2x1xf32>
      %cst_205 = arith.constant 1.000000e+01 : f32
      %491 = vector.broadcast %cst_205 : f32 to vector<2x1xf32>
      %492 = arith.subf %377, %491 : vector<2x1xf32>
      %493 = arith.mulf %490, %492 : vector<2x1xf32>
      %494 = arith.subf %454, %493 : vector<2x1xf32>
      %cst_206 = arith.constant 1.000000e-03 : f32
      %495 = vector.broadcast %cst_206 : f32 to vector<2x1xf32>
      %496 = arith.mulf %495, %494 : vector<2x1xf32>
      %497 = arith.addf %416, %496 : vector<2x1xf32>
      %cst_207 = arith.constant dense<0.000000e+00> : vector<1xf32>
      %498 = vector.multi_reduction <add>, %497, %cst_207 [0] : vector<2x1xf32> to vector<1xf32>
      %499 = vector.shape_cast %498 : vector<1xf32> to vector<1x1xf32>
      %cst_208 = arith.constant 5.000000e-01 : f32
      %500 = vector.broadcast %cst_208 : f32 to vector<1x1xf32>
      %501 = arith.mulf %499, %500 : vector<1x1xf32>
      %502 = arith.addf %374, %501 : vector<1x1xf32>
      %cst_209 = arith.constant 5.000000e-01 : f32
      %503 = vector.broadcast %cst_209 : f32 to vector<1x1xf32>
      %504 = arith.mulf %502, %503 : vector<1x1xf32>
      %c0_210 = arith.constant 0 : index
      %c0_211 = arith.constant 0 : index
      %505 = vector.load %arg12[%c0_210, %c0_211] : memref<1x1xf32, #tpu.memory_space<vmem>>, vector<1x1xf32>
      tpu.vector_store %arg12[%c0_210, %c0_211], %504 {strides = array<i32>} : memref<1x1xf32, #tpu.memory_space<vmem>>, vector<1x1xf32>,
    } else {
    }
    return
  }
  func.func @transform_0(%arg0: i32) -> (i32, i32) {
    %c0_i32 = arith.constant 0 : i32
    %c0_i32_0 = arith.constant 0 : i32
    %c0_i32_1 = arith.constant 0 : i32
    return %c0_i32, %c0_i32_0 : i32, i32
  }
  func.func @transform_1(%arg0: i32) -> (i32, i32) {
    %c0_i32 = arith.constant 0 : i32
    %c0_i32_0 = arith.constant 0 : i32
    %c0_i32_1 = arith.constant 0 : i32
    return %c0_i32, %c0_i32_0 : i32, i32
  }
  func.func @transform_2(%arg0: i32) -> (i32, i32) {
    %c0_i32 = arith.constant 0 : i32
    %c0_i32_0 = arith.constant 0 : i32
    %c0_i32_1 = arith.constant 0 : i32
    return %c0_i32, %c0_i32_0 : i32, i32
  }
  func.func @transform_3(%arg0: i32) -> (i32, i32) {
    %c0_i32 = arith.constant 0 : i32
    %c0_i32_0 = arith.constant 0 : i32
    %c0_i32_1 = arith.constant 0 : i32
    return %c0_i32, %c0_i32_0 : i32, i32
  }
  func.func @transform_4(%arg0: i32) -> (i32, i32) {
    %c0_i32 = arith.constant 0 : i32
    %c0_i32_0 = arith.constant 0 : i32
    %c0_i32_1 = arith.constant 0 : i32
    return %c0_i32, %c0_i32_0 : i32, i32
  }
  func.func @transform_5(%arg0: i32) -> (i32, i32) {
    %c0_i32 = arith.constant 0 : i32
    %c0_i32_0 = arith.constant 0 : i32
    %c0_i32_1 = arith.constant 0 : i32
    return %c0_i32, %c0_i32_0 : i32, i32
  }
  func.func @transform_6(%arg0: i32) -> (i32, i32) {
    %c0_i32 = arith.constant 0 : i32
    %c0_i32_0 = arith.constant 0 : i32
    %c0_i32_1 = arith.constant 0 : i32
    return %c0_i32, %c0_i32_0 : i32, i32
  }
  func.func @transform_7(%arg0: i32) -> (i32, i32) {
    %c0_i32 = arith.constant 0 : i32
    %c0_i32_0 = arith.constant 0 : i32
    %c0_i32_1 = arith.constant 0 : i32
    return %c0_i32, %c0_i32_0 : i32, i32
  }
  func.func @transform_8(%arg0: i32) -> (i32, i32) {
    %c0_i32 = arith.constant 0 : i32
    %c0_i32_0 = arith.constant 0 : i32
    return %c0_i32, %arg0 : i32, i32
  }
  func.func @transform_9(%arg0: i32) -> (i32, i32) {
    %c0_i32 = arith.constant 0 : i32
    %c0_i32_0 = arith.constant 0 : i32
    return %c0_i32, %arg0 : i32, i32
  }
  func.func @transform_10(%arg0: i32) -> (i32, i32) {
    %c0_i32 = arith.constant 0 : i32
    %c0_i32_0 = arith.constant 0 : i32
    return %c0_i32, %arg0 : i32, i32
  }
  func.func @transform_11(%arg0: i32) -> (i32, i32) {
    %c0_i32 = arith.constant 0 : i32
    %c0_i32_0 = arith.constant 0 : i32
    %c0_i32_1 = arith.constant 0 : i32
    return %c0_i32, %c0_i32_0 : i32, i32
  }
  func.func @transform_12(%arg0: i32) -> (i32, i32) {
    %c0_i32 = arith.constant 0 : i32
    %c0_i32_0 = arith.constant 0 : i32
    %c0_i32_1 = arith.constant 0 : i32
    return %c0_i32, %c0_i32_0 : i32, i32
  }
  func.func @transform_13(%arg0: i32) -> (i32, i32) {
    %c0_i32 = arith.constant 0 : i32
    %c0_i32_0 = arith.constant 0 : i32
    %c0_i32_1 = arith.constant 0 : i32
    return %c0_i32, %c0_i32_0 : i32, i32
  }
  func.func @transform_14(%arg0: i32) -> (i32, i32) {
    %c0_i32 = arith.constant 0 : i32
    %c0_i32_0 = arith.constant 0 : i32
    %c0_i32_1 = arith.constant 0 : i32
    return %c0_i32, %c0_i32_0 : i32, i32
  }
  func.func @transform_15(%arg0: i32) -> (i32, i32) {
    %c0_i32 = arith.constant 0 : i32
    %c0_i32_0 = arith.constant 0 : i32
    %c0_i32_1 = arith.constant 0 : i32
    return %c0_i32, %c0_i32_0 : i32, i32
  }
}

module attributes {stable_mosaic.version = 11 : i64} {
  func.func @_linear_kernel(%arg0: i32, %arg1: i32, %arg2: i32, %arg3: memref<8x192xf32, #tpu.memory_space<vmem>>, %arg4: memref<192x32xf32, #tpu.memory_space<vmem>>, %arg5: memref<1x32xf32, #tpu.memory_space<vmem>>, %arg6: memref<8x32xf32, #tpu.memory_space<vmem>>, %arg7: memref<8x32xf32, #tpu.memory_space<vmem>>) attributes {dimension_semantics = [#tpu.dimension_semantics<parallel>, #tpu.dimension_semantics<parallel>, #tpu.dimension_semantics<arbitrary>], iteration_bounds = array<i64: 1, 1, 1>, scalar_prefetch = 0 : i64, scratch_operands = 1 : i64, tpu.core_type = #tpu.core_type<tc>, window_params = [{transform_indices = @transform_0, window_bounds = array<i64: 8, 192>}, {transform_indices = @transform_1, window_bounds = array<i64: 192, 32>}, {transform_indices = @transform_2, window_bounds = array<i64: 1, 32>}, {transform_indices = @transform_3, window_bounds = array<i64: 8, 32>}]} {
    %c0_i32 = arith.constant 0 : i32
    %0 = arith.cmpi eq, %arg2, %c0_i32 : i32
    %1 = arith.extui %0 : i1 to i32
    %c0_i32_0 = arith.constant 0 : i32
    %2 = arith.cmpi ne, %1, %c0_i32_0 : i32
    scf.if %2 {
      %cst_10 = arith.constant 0.000000e+00 : f32
      %12 = vector.broadcast %cst_10 : f32 to vector<8x32xf32>
      %c0_11 = arith.constant 0 : index
      %c0_12 = arith.constant 0 : index
      %13 = vector.load %arg7[%c0_11, %c0_12] : memref<8x32xf32, #tpu.memory_space<vmem>>, vector<8x32xf32>
      tpu.vector_store %arg7[%c0_11, %c0_12], %12 {strides = array<i32>} : memref<8x32xf32, #tpu.memory_space<vmem>>, vector<8x32xf32>,
    } else {
    }
    %c0 = arith.constant 0 : index
    %c0_1 = arith.constant 0 : index
    %3 = vector.load %arg7[%c0, %c0_1] : memref<8x32xf32, #tpu.memory_space<vmem>>, vector<8x32xf32>
    %c0_2 = arith.constant 0 : index
    %c0_3 = arith.constant 0 : index
    %4 = vector.load %arg3[%c0_2, %c0_3] : memref<8x192xf32, #tpu.memory_space<vmem>>, vector<8x192xf32>
    %c0_4 = arith.constant 0 : index
    %c0_5 = arith.constant 0 : index
    %5 = vector.load %arg4[%c0_4, %c0_5] : memref<192x32xf32, #tpu.memory_space<vmem>>, vector<192x32xf32>
    %cst = arith.constant dense<0.000000e+00> : vector<8x32xf32>
    %6 = tpu.matmul %4, %5, %cst {dimension_numbers = #tpu.dot_dimension_numbers<[1], [0], [0], [1], [0, 0, 1, 1], [], []>} : vector<8x192xf32>, vector<192x32xf32>, vector<8x32xf32> -> vector<8x32xf32>
    %7 = arith.addf %3, %6 : vector<8x32xf32>
    %c0_6 = arith.constant 0 : index
    %c0_7 = arith.constant 0 : index
    %8 = vector.load %arg7[%c0_6, %c0_7] : memref<8x32xf32, #tpu.memory_space<vmem>>, vector<8x32xf32>
    tpu.vector_store %arg7[%c0_6, %c0_7], %7 {strides = array<i32>} : memref<8x32xf32, #tpu.memory_space<vmem>>, vector<8x32xf32>,
    %c0_i32_8 = arith.constant 0 : i32
    %9 = arith.cmpi eq, %arg2, %c0_i32_8 : i32
    %10 = arith.extui %9 : i1 to i32
    %c0_i32_9 = arith.constant 0 : i32
    %11 = arith.cmpi ne, %10, %c0_i32_9 : i32
    scf.if %11 {
      %c0_10 = arith.constant 0 : index
      %c0_11 = arith.constant 0 : index
      %12 = vector.load %arg7[%c0_10, %c0_11] : memref<8x32xf32, #tpu.memory_space<vmem>>, vector<8x32xf32>
      %c0_12 = arith.constant 0 : index
      %c0_13 = arith.constant 0 : index
      %13 = vector.load %arg5[%c0_12, %c0_13] : memref<1x32xf32, #tpu.memory_space<vmem>>, vector<1x32xf32>
      %14 = vector.broadcast %13 : vector<1x32xf32> to vector<8x32xf32>
      %15 = arith.addf %12, %14 : vector<8x32xf32>
      %c0_14 = arith.constant 0 : index
      %c0_15 = arith.constant 0 : index
      %16 = vector.load %arg6[%c0_14, %c0_15] : memref<8x32xf32, #tpu.memory_space<vmem>>, vector<8x32xf32>
      tpu.vector_store %arg6[%c0_14, %c0_15], %15 {strides = array<i32>} : memref<8x32xf32, #tpu.memory_space<vmem>>, vector<8x32xf32>,
    } else {
    }
    return
  }
  func.func @transform_0(%arg0: i32, %arg1: i32, %arg2: i32) -> (i32, i32) {
    %c0_i32 = arith.constant 0 : i32
    return %arg0, %arg2 : i32, i32
  }
  func.func @transform_1(%arg0: i32, %arg1: i32, %arg2: i32) -> (i32, i32) {
    %c0_i32 = arith.constant 0 : i32
    return %arg2, %arg1 : i32, i32
  }
  func.func @transform_2(%arg0: i32, %arg1: i32, %arg2: i32) -> (i32, i32) {
    %c0_i32 = arith.constant 0 : i32
    %c0_i32_0 = arith.constant 0 : i32
    return %c0_i32, %arg1 : i32, i32
  }
  func.func @transform_3(%arg0: i32, %arg1: i32, %arg2: i32) -> (i32, i32) {
    %c0_i32 = arith.constant 0 : i32
    return %arg0, %arg1 : i32, i32
  }
}

module attributes {stable_mosaic.version = 11 : i64} {
  func.func @_text_cross_kernel(%arg0: i32, %arg1: memref<1x8x32xf32, #tpu.memory_space<vmem>>, %arg2: memref<1x8x1xf32, #tpu.memory_space<vmem>>, %arg3: memref<1x1x32xf32, #tpu.memory_space<vmem>>, %arg4: memref<32x32xf32, #tpu.memory_space<vmem>>, %arg5: memref<1x32xf32, #tpu.memory_space<vmem>>, %arg6: memref<32x32xf32, #tpu.memory_space<vmem>>, %arg7: memref<1x32xf32, #tpu.memory_space<vmem>>, %arg8: memref<1x8x32xf32, #tpu.memory_space<vmem>>) attributes {dimension_semantics = [#tpu.dimension_semantics<parallel>], iteration_bounds = array<i64: 6>, scalar_prefetch = 0 : i64, scratch_operands = 0 : i64, tpu.core_type = #tpu.core_type<tc>, window_params = [{transform_indices = @transform_0, window_bounds = array<i64: 1, 8, 32>}, {transform_indices = @transform_1, window_bounds = array<i64: 1, 8, 1>}, {transform_indices = @transform_2, window_bounds = array<i64: 1, 1, 32>}, {pipeline_mode = #tpu.pipeline_mode<synchronous>, transform_indices = @transform_3, window_bounds = array<i64: 32, 32>}, {pipeline_mode = #tpu.pipeline_mode<synchronous>, transform_indices = @transform_4, window_bounds = array<i64: 1, 32>}, {pipeline_mode = #tpu.pipeline_mode<synchronous>, transform_indices = @transform_5, window_bounds = array<i64: 32, 32>}, {pipeline_mode = #tpu.pipeline_mode<synchronous>, transform_indices = @transform_6, window_bounds = array<i64: 1, 32>}, {transform_indices = @transform_7, window_bounds = array<i64: 1, 8, 32>}]} {
    %c0 = arith.constant 0 : index
    %c0_0 = arith.constant 0 : index
    %c0_1 = arith.constant 0 : index
    %0 = vector.load %arg1[%c0, %c0_0, %c0_1] : memref<1x8x32xf32, #tpu.memory_space<vmem>>, vector<1x8x32xf32>
    %1 = vector.shape_cast %0 : vector<1x8x32xf32> to vector<8x32xf32>
    %c0_2 = arith.constant 0 : index
    %c0_3 = arith.constant 0 : index
    %2 = vector.load %arg4[%c0_2, %c0_3] : memref<32x32xf32, #tpu.memory_space<vmem>>, vector<32x32xf32>
    %cst = arith.constant dense<0.000000e+00> : vector<8x32xf32>
    %3 = tpu.matmul %1, %2, %cst {dimension_numbers = #tpu.dot_dimension_numbers<[1], [0], [0], [1], [0, 0, 1, 1], [], []>} : vector<8x32xf32>, vector<32x32xf32>, vector<8x32xf32> -> vector<8x32xf32>
    %c0_4 = arith.constant 0 : index
    %c0_5 = arith.constant 0 : index
    %4 = vector.load %arg5[%c0_4, %c0_5] : memref<1x32xf32, #tpu.memory_space<vmem>>, vector<1x32xf32>
    %5 = vector.broadcast %4 : vector<1x32xf32> to vector<8x32xf32>
    %6 = arith.addf %3, %5 : vector<8x32xf32>
    %c0_6 = arith.constant 0 : index
    %c0_7 = arith.constant 0 : index
    %c0_8 = arith.constant 0 : index
    %7 = vector.load %arg2[%c0_6, %c0_7, %c0_8] : memref<1x8x1xf32, #tpu.memory_space<vmem>>, vector<1x8x1xf32>
    %8 = vector.shape_cast %7 : vector<1x8x1xf32> to vector<8x1xf32>
    %9 = vector.broadcast %8 : vector<8x1xf32> to vector<8x32xf32>
    %10 = arith.mulf %6, %9 : vector<8x32xf32>
    %c0_9 = arith.constant 0 : index
    %c0_10 = arith.constant 0 : index
    %c0_11 = arith.constant 0 : index
    %11 = vector.load %arg3[%c0_9, %c0_10, %c0_11] : memref<1x1x32xf32, #tpu.memory_space<vmem>>, vector<1x1x32xf32>
    %12 = vector.shape_cast %11 : vector<1x1x32xf32> to vector<1x32xf32>
    %c0_12 = arith.constant 0 : index
    %c0_13 = arith.constant 0 : index
    %13 = vector.load %arg6[%c0_12, %c0_13] : memref<32x32xf32, #tpu.memory_space<vmem>>, vector<32x32xf32>
    %cst_14 = arith.constant dense<0.000000e+00> : vector<1x32xf32>
    %14 = tpu.matmul %12, %13, %cst_14 {dimension_numbers = #tpu.dot_dimension_numbers<[1], [0], [0], [1], [0, 0, 1, 1], [], []>} : vector<1x32xf32>, vector<32x32xf32>, vector<1x32xf32> -> vector<1x32xf32>
    %c0_15 = arith.constant 0 : index
    %c0_16 = arith.constant 0 : index
    %15 = vector.load %arg7[%c0_15, %c0_16] : memref<1x32xf32, #tpu.memory_space<vmem>>, vector<1x32xf32>
    %16 = arith.addf %14, %15 : vector<1x32xf32>
    %17 = vector.broadcast %16 : vector<1x32xf32> to vector<8x32xf32>
    %18 = arith.addf %10, %17 : vector<8x32xf32>
    %c0_17 = arith.constant 0 : index
    %c0_18 = arith.constant 0 : index
    %c0_19 = arith.constant 0 : index
    %19 = vector.load %arg8[%c0_17, %c0_18, %c0_19] : memref<1x8x32xf32, #tpu.memory_space<vmem>>, vector<1x8x32xf32>
    %20 = vector.shape_cast %19 : vector<1x8x32xf32> to vector<8x32xf32>
    %21 = vector.shape_cast %18 : vector<8x32xf32> to vector<1x8x32xf32>
    tpu.vector_store %arg8[%c0_17, %c0_18, %c0_19], %21 {strides = array<i32>} : memref<1x8x32xf32, #tpu.memory_space<vmem>>, vector<1x8x32xf32>,
    return
  }
  func.func @transform_0(%arg0: i32) -> (i32, i32, i32) {
    %c0_i32 = arith.constant 0 : i32
    %c0_i32_0 = arith.constant 0 : i32
    %c0_i32_1 = arith.constant 0 : i32
    return %arg0, %c0_i32, %c0_i32_0 : i32, i32, i32
  }
  func.func @transform_1(%arg0: i32) -> (i32, i32, i32) {
    %c0_i32 = arith.constant 0 : i32
    %c0_i32_0 = arith.constant 0 : i32
    %c0_i32_1 = arith.constant 0 : i32
    return %arg0, %c0_i32, %c0_i32_0 : i32, i32, i32
  }
  func.func @transform_2(%arg0: i32) -> (i32, i32, i32) {
    %c0_i32 = arith.constant 0 : i32
    %c0_i32_0 = arith.constant 0 : i32
    %c0_i32_1 = arith.constant 0 : i32
    return %arg0, %c0_i32, %c0_i32_0 : i32, i32, i32
  }
  func.func @transform_3(%arg0: i32) -> (i32, i32) {
    %c0_i32 = arith.constant 0 : i32
    %c0_i32_0 = arith.constant 0 : i32
    %c0_i32_1 = arith.constant 0 : i32
    return %c0_i32, %c0_i32_0 : i32, i32
  }
  func.func @transform_4(%arg0: i32) -> (i32, i32) {
    %c0_i32 = arith.constant 0 : i32
    %c0_i32_0 = arith.constant 0 : i32
    %c0_i32_1 = arith.constant 0 : i32
    return %c0_i32, %c0_i32_0 : i32, i32
  }
  func.func @transform_5(%arg0: i32) -> (i32, i32) {
    %c0_i32 = arith.constant 0 : i32
    %c0_i32_0 = arith.constant 0 : i32
    %c0_i32_1 = arith.constant 0 : i32
    return %c0_i32, %c0_i32_0 : i32, i32
  }
  func.func @transform_6(%arg0: i32) -> (i32, i32) {
    %c0_i32 = arith.constant 0 : i32
    %c0_i32_0 = arith.constant 0 : i32
    %c0_i32_1 = arith.constant 0 : i32
    return %c0_i32, %c0_i32_0 : i32, i32
  }
  func.func @transform_7(%arg0: i32) -> (i32, i32, i32) {
    %c0_i32 = arith.constant 0 : i32
    %c0_i32_0 = arith.constant 0 : i32
    %c0_i32_1 = arith.constant 0 : i32
    return %arg0, %c0_i32, %c0_i32_0 : i32, i32, i32
  }
}

module attributes {stable_mosaic.version = 11 : i64} {
  func.func @_itm_ce_kernel(%arg0: memref<6x32xf32, #tpu.memory_space<vmem>>, %arg1: memref<32x128xf32, #tpu.memory_space<vmem>>, %arg2: memref<1x128xf32, #tpu.memory_space<vmem>>, %arg3: memref<1x1xf32, #tpu.memory_space<vmem>>) attributes {dimension_semantics = [], scalar_prefetch = 0 : i64, scratch_operands = 0 : i64, tpu.core_type = #tpu.core_type<tc>} {
    %c0 = arith.constant 0 : index
    %c0_0 = arith.constant 0 : index
    %0 = vector.load %arg0[%c0, %c0_0] : memref<6x32xf32, #tpu.memory_space<vmem>>, vector<6x32xf32>
    %c0_1 = arith.constant 0 : index
    %c0_2 = arith.constant 0 : index
    %1 = vector.load %arg1[%c0_1, %c0_2] : memref<32x128xf32, #tpu.memory_space<vmem>>, vector<32x128xf32>
    %cst = arith.constant dense<0.000000e+00> : vector<6x128xf32>
    %2 = tpu.matmul %0, %1, %cst {dimension_numbers = #tpu.dot_dimension_numbers<[1], [0], [0], [1], [0, 0, 1, 1], [], []>} : vector<6x32xf32>, vector<32x128xf32>, vector<6x128xf32> -> vector<6x128xf32>
    %c0_3 = arith.constant 0 : index
    %c0_4 = arith.constant 0 : index
    %3 = vector.load %arg2[%c0_3, %c0_4] : memref<1x128xf32, #tpu.memory_space<vmem>>, vector<1x128xf32>
    %4 = vector.broadcast %3 : vector<1x128xf32> to vector<6x128xf32>
    %5 = arith.addf %2, %4 : vector<6x128xf32>
    %6 = tpu.iota {dimensions = array<i32: 0>} : vector<6x128xi32>
    %7 = tpu.iota {dimensions = array<i32: 1>} : vector<6x128xi32>
    %c2_i32 = arith.constant 2 : i32
    %8 = vector.broadcast %c2_i32 : i32 to vector<6x128xi32>
    %9 = arith.cmpi slt, %7, %8 : vector<6x128xi32>
    %cst_5 = arith.constant -1.000000e+30 : f32
    %10 = vector.broadcast %cst_5 : f32 to vector<6x128xf32>
    %11 = arith.select %9, %5, %10 : vector<6x128xi1>, vector<6x128xf32>
    %c2_i32_6 = arith.constant 2 : i32
    %12 = vector.broadcast %c2_i32_6 : i32 to vector<6x128xi32>
    %13 = arith.cmpi slt, %6, %12 : vector<6x128xi32>
    %c1_i32 = arith.constant 1 : i32
    %c0_i32 = arith.constant 0 : i32
    %14 = vector.broadcast %c1_i32 : i32 to vector<6x128xi32>
    %15 = vector.broadcast %c0_i32 : i32 to vector<6x128xi32>
    %16 = arith.select %13, %14, %15 : vector<6x128xi1>, vector<6x128xi32>
    %17 = arith.cmpi eq, %7, %16 : vector<6x128xi32>
    %18 = arith.extui %17 : vector<6x128xi1> to vector<6x128xi32>
    %19 = arith.sitofp %18 : vector<6x128xi32> to vector<6x128xf32>
    %cst_7 = arith.constant dense<0xFF800000> : vector<6xf32>
    %20 = vector.multi_reduction <maximumf>, %11, %cst_7 [1] : vector<6x128xf32> to vector<6xf32>
    %21 = vector.shape_cast %20 : vector<6xf32> to vector<6x1xf32>
    %22 = vector.broadcast %21 : vector<6x1xf32> to vector<6x128xf32>
    %23 = arith.subf %11, %22 : vector<6x128xf32>
    %24 = math.exp %23 : vector<6x128xf32>
    %cst_8 = arith.constant dense<0.000000e+00> : vector<6xf32>
    %25 = vector.multi_reduction <add>, %24, %cst_8 [1] : vector<6x128xf32> to vector<6xf32>
    %26 = vector.shape_cast %25 : vector<6xf32> to vector<6x1xf32>
    %27 = math.log %26 : vector<6x1xf32>
    %28 = arith.addf %21, %27 : vector<6x1xf32>
    %29 = arith.mulf %19, %11 : vector<6x128xf32>
    %cst_9 = arith.constant dense<0.000000e+00> : vector<6xf32>
    %30 = vector.multi_reduction <add>, %29, %cst_9 [1] : vector<6x128xf32> to vector<6xf32>
    %31 = vector.shape_cast %30 : vector<6xf32> to vector<6x1xf32>
    %32 = arith.subf %28, %31 : vector<6x1xf32>
    %cst_10 = arith.constant dense<0.000000e+00> : vector<1xf32>
    %33 = vector.multi_reduction <add>, %32, %cst_10 [0] : vector<6x1xf32> to vector<1xf32>
    %34 = vector.shape_cast %33 : vector<1xf32> to vector<1x1xf32>
    %cst_11 = arith.constant 0.166666672 : f32
    %35 = vector.broadcast %cst_11 : f32 to vector<1x1xf32>
    %36 = arith.mulf %34, %35 : vector<1x1xf32>
    %c0_12 = arith.constant 0 : index
    %c0_13 = arith.constant 0 : index
    %37 = vector.load %arg3[%c0_12, %c0_13] : memref<1x1xf32, #tpu.memory_space<vmem>>, vector<1x1xf32>
    tpu.vector_store %arg3[%c0_12, %c0_13], %36 {strides = array<i32>} : memref<1x1xf32, #tpu.memory_space<vmem>>, vector<1x1xf32>,
    return
  }
}

</mosaic_0001>

<llo_original>
// kernel: blip_retrieval_forward.5
$region0: #{blip_retrieval_forward.5}
  #allocation0 [shape = 'u32[]', space=smem, size = 0x4, offset = 0x4, fixed_abs, tag = 'smem constant byte address 0x4 - core index']
  #allocation1 [shape = 'u32[144,128]{1,0:T(1,128)}', space=vmem, size = 0x12000, scoped, tag = 'internal scratch']
  #allocation2 [shape = 'f32[16,32]{1,0:T(8,128)}', space=vmem, size = 0x2000, scoped, tag = 'scratch operand']
  %s0 = inlined_call_operand.vmem [shape: f32[16,32], index: 0, kind: input, shape index: {}]
  %s1 = inlined_call_operand.vmem [shape: f32[32,32], index: 1, kind: input, shape index: {}]
  %s2 = inlined_call_operand.vmem [shape: f32[1,32], index: 2, kind: input, shape index: {}]
  %s3 = inlined_call_operand.vmem [shape: f32[16,1], index: 3, kind: input, shape index: {}]
  %s4 = inlined_call_operand.vmem [shape: f32[16,32], index: 4, kind: output, shape index: {}]
  %s5 = sld [smem:[#allocation0]]
  $region34: #{blip_retrieval_forward.5} parent=0
    _
  %s7 = ssub.s32 1, %s5
  %s8 = scalar_select 0, %s7, %s5
  // Predicated region
  $region2: #{blip_retrieval_forward.5} parent=0 // pred_check
    _
  $region3: #{blip_retrieval_forward.5} parent=0 // pred_check_branch
    %10 = sbr.rel (0) target = $region5
  $region4: #{blip_retrieval_forward.5} parent=0 // pred_region
    _
  $region5: #{blip_retrieval_forward.5} parent=0 // pred_fallthru
    _
  // Predicated region
  $region6: #{blip_retrieval_forward.5} parent=0 // pred_check
    _
  $region7: #{blip_retrieval_forward.5} parent=0 // pred_check_branch
    %12 = sbr.rel (0) target = $region9
  $region8: #{blip_retrieval_forward.5} parent=0 // pred_region
    _
  $region9: #{blip_retrieval_forward.5} parent=0 // pred_fallthru
    _
  // Predicated region
  $region10: #{blip_retrieval_forward.5} parent=0 // pred_check
    _
  $region11: #{blip_retrieval_forward.5} parent=0 // pred_check_branch
    %14 = sbr.rel (0) target = $region13
  $region12: #{blip_retrieval_forward.5} parent=0 // pred_region
    _
  $region13: #{blip_retrieval_forward.5} parent=0 // pred_fallthru
    _
  // Predicated region
  $region14: #{blip_retrieval_forward.5} parent=0 // pred_check
    _
  $region15: #{blip_retrieval_forward.5} parent=0 // pred_check_branch
    %16 = sbr.rel (0) target = $region17
  $region16: #{blip_retrieval_forward.5} parent=0 // pred_region
    _
  $region17: #{blip_retrieval_forward.5} parent=0 // pred_fallthru
    _
  %p17 = scmp.eq.s32.totalorder 0, 0
  // Predicated region
  $region18: #{blip_retrieval_forward.5} parent=0 // pred_check
    %p18 = pneg %p17
  $region19: #{blip_retrieval_forward.5} parent=0 // pred_check_branch
    %20 = sbr.rel (%p18) target = $region21
  $region20: #{blip_retrieval_forward.5} parent=0 // pred_region
    %vm21 = vcmask 261120
    %22 = vst.msk [vmem:[#allocation2] sm:$0xff] %vm21, 0.0
    %23 = vst.msk [vmem:[#allocation2 + $0x8] sm:$0xff] %vm21, 0.0
  $region21: #{blip_retrieval_forward.5} parent=0 // pred_fallthru
    _
  %v24 = vld [vmem:[#allocation2] sm:$0xff]
  %v25 = vld [vmem:[#allocation2 + $0x8] sm:$0xff]
  %v26 = vld [vmem:[%s0] sm:$0xff]
  %v27 = vld [vmem:[%s0 + $0x8] sm:$0xff]
  %v28 = vld [vmem:[%s1] sm:$0xff]
  %v29 = vld [vmem:[%s1 + $0x8] sm:$0xff]
  %v30 = vld [vmem:[%s1 + $0x10] sm:$0xff]
  %v31 = vld [vmem:[%s1 + $0x18] sm:$0xff]
  %vm32 = vcmask 261120
  %v34 = vsel %vm32, %v26, 0
  %v37 = vsel %vm32, %v27, 0
  %39 = vmatprep.subr.mxu0 0.0
  %40 = vmatpush1.msra.mxu0 0.0
  %41 = vmatprep.subr.mxu0 0.0
  %42 = vmatpush1.msra.mxu0 0.0
  %43 = vmatprep.subr.mxu0 0.0
  %44 = vmatpush1.msra.mxu0 0.0
  %45 = vmatprep.subr.mxu0 0.0
  %46 = vmatpush1.msra.mxu0 0.0
  %47 = vmatprep.subr.mxu0 0.0
  %48 = vmatpush1.msra.mxu0 0.0
  %49 = vmatprep.subr.mxu0 0.0
  %50 = vmatpush1.msra.mxu0 0.0
  %51 = vmatprep.subr.mxu0 0.0
  %52 = vmatpush1.msra.mxu0 0.0
  %53 = vmatprep.subr.mxu0 0.0
  %54 = vmatpush1.msra.mxu0 0.0
  %55 = vmatprep.subr.mxu0 0.0
  %56 = vmatpush1.msra.mxu0 0.0
  %57 = vmatprep.subr.mxu0 0.0
  %58 = vmatpush1.msra.mxu0 0.0
  %59 = vmatprep.subr.mxu0 0.0
  %60 = vmatpush1.msra.mxu0 0.0
  %61 = vmatprep.subr.mxu0 0.0
  %62 = vmatpush1.msra.mxu0 0.0
  %63 = vmatprep.subr.mxu0 0.0
  %64 = vmatpush1.msra.mxu0 %v31
  %65 = vmatprep.subr.mxu0 0.0
  %66 = vmatpush1.msra.mxu0 %v30
  %67 = vmatprep.subr.mxu0 0.0
  %68 = vmatpush1.msra.mxu0 %v29
  %69 = vmatprep.subr.mxu0 0.0
  %70 = vmatpush1.msra.mxu0 %v28
  %71 = vmatprep.subr.mxu0 0.0
  %72 = vmatpush2.msra.mxu0 0.0
  %73 = vmatprep.subr.mxu0 0.0
  %74 = vmatpush2.msra.mxu0 0.0
  %75 = vmatprep.subr.mxu0 0.0
  %76 = vmatpush2.msra.mxu0 0.0
  %77 = vmatprep.subr.mxu0 0.0
  %78 = vmatpush2.msra.mxu0 0.0
  %79 = vmatprep.subr.mxu0 0.0
  %80 = vmatpush2.msra.mxu0 0.0
  %81 = vmatprep.subr.mxu0 0.0
  %82 = vmatpush2.msra.mxu0 0.0
  %83 = vmatprep.subr.mxu0 0.0
  %84 = vmatpush2.msra.mxu0 0.0
  %85 = vmatprep.subr.mxu0 0.0
  %86 = vmatpush2.msra.mxu0 0.0
  %87 = vmatprep.subr.mxu0 0.0
  %88 = vmatpush2.msra.mxu0 0.0
  %89 = vmatprep.subr.mxu0 0.0
  %90 = vmatpush2.msra.mxu0 0.0
  %91 = vmatprep.subr.mxu0 0.0
  %92 = vmatpush2.msra.mxu0 0.0
  %93 = vmatprep.subr.mxu0 0.0
  %94 = vmatpush2.msra.mxu0 0.0
  %95 = vmatprep.subr.mxu0 0.0
  %96 = vmatpush2.msra.mxu0 0.0
  %97 = vmatprep.subr.mxu0 0.0
  %98 = vmatpush2.msra.mxu0 0.0
  %99 = vmatprep.subr.mxu0 0.0
  %100 = vmatpush2.msra.mxu0 0.0
  %101 = vmatprep.subr.mxu0 0.0
  %102 = vmatpush2.msra.mxu0 0.0
  %103 = vmatprep.mubr.f32.mxu0 0.0
  %104 = vmatmul.mubr.f32.gmra.mxu0 %v34
  %v105 = vpop.f32.mrf.mxu0
  %v106 = vadd.f32 0.0, %v105
  %v107 = vpop.f32.mrf.mxu0
  %108 = vmatprep.mubr.f32.mxu0 0.0
  %109 = vmatmul.mubr.f32.gmra.mxu0 %v37
  %v110 = vpop.f32.mrf.mxu0
  %v111 = vadd.f32 0.0, %v110
  %v112 = vpop.f32.mrf.mxu0
  %113 = vdwg.mxu0
  %v114 = vadd.f32 %v24, %v106
  %v115 = vadd.f32 %v25, %v111
  %116 = vst.msk [vmem:[#allocation2] sm:$0xff] %vm32, %v114
  %117 = vst.msk [vmem:[#allocation2 + $0x8] sm:$0xff] %vm32, %v115
  // Predicated region
  $region22: #{blip_retrieval_forward.5} parent=0 // pred_check
    %p118 = pneg %p17
  $region23: #{blip_retrieval_forward.5} parent=0 // pred_check_branch
    %120 = sbr.rel (%p118) target = $region25
  $region24: #{blip_retrieval_forward.5} parent=0 // pred_region
    %v121 = vld [vmem:[#allocation2] sm:$0xff]
    %v122 = vld [vmem:[#allocation2 + $0x8] sm:$0xff]
    %v123 = vld [vmem:[%s2] sm:$0x1]
    %v125 = vlaneseq
    %v126 = vshrl.u32 %v125, 7
    %v127 = vsub.s32 0, %v126
    %v128 = vrot.slane %v123, %v127
    %v130 = vadd.f32 %v121, %v128
    %v131 = vadd.f32 %v122, %v128
    %v132 = vld [vmem:[%s3] sm:$0xff]
    %v133 = vld [vmem:[%s3 + $0x8] sm:$0xff]
    %135 = vset.pattern.permute.xlu0 0
    %136 = vperm.xlu0 %135, %v132
    %v137 = vpop.permute.xlu0 %136
    %140 = vset.pattern.permute.xlu0 0
    %141 = vperm.xlu0 %140, %v133
    %v142 = vpop.permute.xlu0 %141
    %v144 = vmul.f32 %v130, %v137
    %v145 = vmul.f32 %v131, %v142
    %146 = vst.msk [vmem:[%s4] sm:$0xff] %vm32, %v144
    %147 = vst.msk [vmem:[%s4 + $0x8] sm:$0xff] %vm32, %v145
  $region25: #{blip_retrieval_forward.5} parent=0 // pred_fallthru
    _
  // Predicated region
  $region26: #{blip_retrieval_forward.5} parent=0 // pred_check
    _
  $region27: #{blip_retrieval_forward.5} parent=0 // pred_check_branch
    %149 = sbr.rel (0) target = $region29
  $region28: #{blip_retrieval_forward.5} parent=0 // pred_region
    _
  $region29: #{blip_retrieval_forward.5} parent=0 // pred_fallthru
    _
  // Predicated region
  $region30: #{blip_retrieval_forward.5} parent=0 // pred_check
    _
  $region31: #{blip_retrieval_forward.5} parent=0 // pred_check_branch
    %151 = sbr.rel (0) target = $region33
  $region32: #{blip_retrieval_forward.5} parent=0 // pred_region
    _
  $region33: #{blip_retrieval_forward.5} parent=0 // pred_fallthru
    _

// kernel: blip_retrieval_forward.6
$region0: #{blip_retrieval_forward.6}
  #allocation0 [shape = 'u32[]', space=smem, size = 0x4, offset = 0x4, fixed_abs, tag = 'smem constant byte address 0x4 - core index']
  #allocation1 [shape = 'u32[144,128]{1,0:T(1,128)}', space=vmem, size = 0x12000, scoped, tag = 'internal scratch']
  #allocation2 [shape = 'f32[2,1]{1,0:T(2,128)}', space=vmem, size = 0x400, scoped, tag = 'scratch operand']
  #allocation3 [shape = 'f32[2,1]{1,0:T(2,128)}', space=vmem, size = 0x400, scoped, tag = 'scratch operand']
  #allocation4 [shape = 'f32[2,1]{1,0:T(2,128)}', space=vmem, size = 0x400, scoped, tag = 'scratch operand']
  #allocation5 [shape = 'f32[2,1]{1,0:T(2,128)}', space=vmem, size = 0x400, scoped, tag = 'scratch operand']
  #allocation6 [shape = 'f32[2,1]{1,0:T(2,128)}', space=vmem, size = 0x400, scoped, tag = 'scratch operand']
  #allocation7 [shape = 'f32[2,1]{1,0:T(2,128)}', space=vmem, size = 0x400, scoped, tag = 'scratch operand']
  #allocation8 [shape = 'f32[2,1]{1,0:T(2,128)}', space=vmem, size = 0x400, scoped, tag = 'scratch operand']
  #allocation9 [shape = 'f32[2,1]{1,0:T(2,128)}', space=vmem, size = 0x400, scoped, tag = 'scratch operand']
  #allocation10 [shape = 'f32[1,1]{1,0:T(1,128)S(6)}', space=smem, size = 0x200, scoped, tag = 'scoped memory for blip_retrieval_forward.6']
  %s0 = inlined_call_operand.<no memory space> [shape: f32[1,1], index: 0, kind: input, shape index: {}]
  %s1 = inlined_call_operand.vmem [shape: f32[2,32], index: 1, kind: input, shape index: {}]
  %s2 = inlined_call_operand.vmem [shape: f32[32,16], index: 2, kind: input, shape index: {}]
  %s3 = inlined_call_operand.vmem [shape: f32[1,16], index: 3, kind: input, shape index: {}]
  %s4 = inlined_call_operand.vmem [shape: f32[2,32], index: 4, kind: input, shape index: {}]
  %s5 = inlined_call_operand.vmem [shape: f32[32,16], index: 5, kind: input, shape index: {}]
  %s6 = inlined_call_operand.vmem [shape: f32[1,16], index: 6, kind: input, shape index: {}]
  %s7 = inlined_call_operand.vmem [shape: f32[2,2], index: 7, kind: input, shape index: {}]
  %s8 = inlined_call_operand.vmem [shape: bf16[16,8], index: 8, kind: input, shape index: {}]
  %s9 = inlined_call_operand.vmem [shape: bf16[16,8], index: 9, kind: input, shape index: {}]
  %s10 = inlined_call_operand.vmem [shape: f32[2,8], index: 10, kind: input, shape index: {}]
  %s11 = inlined_call_operand.hbm [shape: f32[1,1], index: 11, kind: output, shape index: {0}]
  %s12 = inlined_call_operand.vmem [shape: f32[2,2], index: 12, kind: output, shape index: {1}]
  %s13 = inlined_call_operand.vmem [shape: f32[2,2], index: 13, kind: output, shape index: {2}]
  %s14 = inlined_call_operand.vmem [shape: f32[2,16], index: 14, kind: output, shape index: {3}]
  %s15 = inlined_call_operand.vmem [shape: f32[2,16], index: 15, kind: output, shape index: {4}]
  %16 = xla_tuple %s11, %s12, %s13, %s14, %s15
  %s17 = sld [smem:[#allocation0]]
  $region94: #{blip_retrieval_forward.6} parent=0
    _
  %s19 = ssub.s32 1, %s17
  %s20 = scalar_select 0, %s19, %s17
  %21 = sst [smem:[#allocation10]] %s0
  $region1: #{blip_retrieval_forward.6} parent=0
    #allocation11 [shape = 'u8[512]{0}', space=vmem, size = 0x400, scoped, tag = 'output window, operand 0, single buffered']
    #allocation12 [shape = 's32[1]{0}', space=sflag, size = 0x4, scoped, tag = 'scoped memory for blip_retrieval_forward.6']
    %22 = vsyncpa [#allocation12], 0
    // Predicated region
    $region2: #{blip_retrieval_forward.6} parent=1 // pred_check
      _
    $region3: #{blip_retrieval_forward.6} parent=1 // pred_check_branch
      %24 = sbr.rel (0) target = $region5
    $region4: #{blip_retrieval_forward.6} parent=1 // pred_region
      _
    $region5: #{blip_retrieval_forward.6} parent=1 // pred_fallthru
      _
    // Predicated region
    $region6: #{blip_retrieval_forward.6} parent=1 // pred_check
      _
    $region7: #{blip_retrieval_forward.6} parent=1 // pred_check_branch
      %26 = sbr.rel (0) target = $region9
    $region8: #{blip_retrieval_forward.6} parent=1 // pred_region
      _
    $region9: #{blip_retrieval_forward.6} parent=1 // pred_fallthru
      _
    // Predicated region
    $region10: #{blip_retrieval_forward.6} parent=1 // pred_check
      _
    $region11: #{blip_retrieval_forward.6} parent=1 // pred_check_branch
      %28 = sbr.rel (0) target = $region13
    $region12: #{blip_retrieval_forward.6} parent=1 // pred_region
      _
    $region13: #{blip_retrieval_forward.6} parent=1 // pred_fallthru
      _
    // Predicated region
    $region14: #{blip_retrieval_forward.6} parent=1 // pred_check
      _
    $region15: #{blip_retrieval_forward.6} parent=1 // pred_check_branch
      %30 = sbr.rel (0) target = $region17
    $region16: #{blip_retrieval_forward.6} parent=1 // pred_region
      _
    $region17: #{blip_retrieval_forward.6} parent=1 // pred_fallthru
      _
    // Predicated region
    $region18: #{blip_retrieval_forward.6} parent=1 // pred_check
      _
    $region19: #{blip_retrieval_forward.6} parent=1 // pred_check_branch
      %32 = sbr.rel (0) target = $region21
    $region20: #{blip_retrieval_forward.6} parent=1 // pred_region
      _
    $region21: #{blip_retrieval_forward.6} parent=1 // pred_fallthru
      _
    // Predicated region
    $region22: #{blip_retrieval_forward.6} parent=1 // pred_check
      _
    $region23: #{blip_retrieval_forward.6} parent=1 // pred_check_branch
      %34 = sbr.rel (0) target = $region25
    $region24: #{blip_retrieval_forward.6} parent=1 // pred_region
      _
    $region25: #{blip_retrieval_forward.6} parent=1 // pred_fallthru
      _
    // Predicated region
    $region26: #{blip_retrieval_forward.6} parent=1 // pred_check
      _
    $region27: #{blip_retrieval_forward.6} parent=1 // pred_check_branch
      %36 = sbr.rel (0) target = $region29
    $region28: #{blip_retrieval_forward.6} parent=1 // pred_region
      _
    $region29: #{blip_retrieval_forward.6} parent=1 // pred_fallthru
      _
    // Predicated region
    $region30: #{blip_retrieval_forward.6} parent=1 // pred_check
      _
    $region31: #{blip_retrieval_forward.6} parent=1 // pred_check_branch
      %38 = sbr.rel (0) target = $region33
    $region32: #{blip_retrieval_forward.6} parent=1 // pred_region
      _
    $region33: #{blip_retrieval_forward.6} parent=1 // pred_fallthru
      _
    // Predicated region
    $region34: #{blip_retrieval_forward.6} parent=1 // pred_check
      _
    $region35: #{blip_retrieval_forward.6} parent=1 // pred_check_branch
      %40 = sbr.rel (0) target = $region37
    $region36: #{blip_retrieval_forward.6} parent=1 // pred_region
      _
    $region37: #{blip_retrieval_forward.6} parent=1 // pred_fallthru
      _
    // Predicated region
    $region38: #{blip_retrieval_forward.6} parent=1 // pred_check
      _
    $region39: #{blip_retrieval_forward.6} parent=1 // pred_check_branch
      %42 = sbr.rel (0) target = $region41
    $region40: #{blip_retrieval_forward.6} parent=1 // pred_region
      _
    $region41: #{blip_retrieval_forward.6} parent=1 // pred_fallthru
      _
    // Predicated region
    $region42: #{blip_retrieval_forward.6} parent=1 // pred_check
      _
    $region43: #{blip_retrieval_forward.6} parent=1 // pred_check_branch
      %44 = sbr.rel (0) target = $region45
    $region44: #{blip_retrieval_forward.6} parent=1 // pred_region
      _
    $region45: #{blip_retrieval_forward.6} parent=1 // pred_fallthru
      _
    %s46 = sld [smem:[#allocation10]]
    %p47 = scmp.eq.s32.totalorder 0, 0
    // Predicated region
    $region46: #{blip_retrieval_forward.6} parent=1 // pred_check
      %p48 = pneg %p47
    $region47: #{blip_retrieval_forward.6} parent=1 // pred_check_branch
      %50 = sbr.rel (%p48) target = $region49
    $region48: #{blip_retrieval_forward.6} parent=1 // pred_region
      %v51 = vld [vmem:[%s1] sm:$0x3]
      %v52 = vld [vmem:[%s2] sm:$0xff]
      %v53 = vld [vmem:[%s2 + $0x8] sm:$0xff]
      %v54 = vld [vmem:[%s2 + $0x10] sm:$0xff]
      %v55 = vld [vmem:[%s2 + $0x18] sm:$0xff]
      %v56 = vld [vmem:[%s3] sm:$0x1]
      %v58 = vlaneseq
      %v59 = vshrl.u32 %v58, 7
      %v60 = vsub.s32 0, %v59
      %v61 = vrot.slane %v56, %v60
      %vm63 = vcmask 261120
      %v65 = vsel %vm63, %v51, 0
      %67 = vmatprep.subr.mxu0 0.0
      %68 = vmatpush1.msra.mxu0 0.0
      %69 = vmatprep.subr.mxu0 0.0
      %70 = vmatpush1.msra.mxu0 0.0
      %71 = vmatprep.subr.mxu0 0.0
      %72 = vmatpush1.msra.mxu0 0.0
      %73 = vmatprep.subr.mxu0 0.0
      %74 = vmatpush1.msra.mxu0 0.0
      %75 = vmatprep.subr.mxu0 0.0
      %76 = vmatpush1.msra.mxu0 0.0
      %77 = vmatprep.subr.mxu0 0.0
      %78 = vmatpush1.msra.mxu0 0.0
      %79 = vmatprep.subr.mxu0 0.0
      %80 = vmatpush1.msra.mxu0 0.0
      %81 = vmatprep.subr.mxu0 0.0
      %82 = vmatpush1.msra.mxu0 0.0
      %83 = vmatprep.subr.mxu0 0.0
      %84 = vmatpush1.msra.mxu0 0.0
      %85 = vmatprep.subr.mxu0 0.0
      %86 = vmatpush1.msra.mxu0 0.0
      %87 = vmatprep.subr.mxu0 0.0
      %88 = vmatpush1.msra.mxu0 0.0
      %89 = vmatprep.subr.mxu0 0.0
      %90 = vmatpush1.msra.mxu0 0.0
      %91 = vmatprep.subr.mxu0 0.0
      %92 = vmatpush1.msra.mxu0 %v55
      %93 = vmatprep.subr.mxu0 0.0
      %94 = vmatpush1.msra.mxu0 %v54
      %95 = vmatprep.subr.mxu0 0.0
      %96 = vmatpush1.msra.mxu0 %v53
      %97 = vmatprep.subr.mxu0 0.0
      %98 = vmatpush1.msra.mxu0 %v52
      %99 = vmatprep.subr.mxu0 0.0
      %100 = vmatpush2.msra.mxu0 0.0
      %101 = vmatprep.subr.mxu0 0.0
      %102 = vmatpush2.msra.mxu0 0.0
      %103 = vmatprep.subr.mxu0 0.0
      %104 = vmatpush2.msra.mxu0 0.0
      %105 = vmatprep.subr.mxu0 0.0
      %106 = vmatpush2.msra.mxu0 0.0
      %107 = vmatprep.subr.mxu0 0.0
      %108 = vmatpush2.msra.mxu0 0.0
      %109 = vmatprep.subr.mxu0 0.0
      %110 = vmatpush2.msra.mxu0 0.0
      %111 = vmatprep.subr.mxu0 0.0
      %112 = vmatpush2.msra.mxu0 0.0
      %113 = vmatprep.subr.mxu0 0.0
      %114 = vmatpush2.msra.mxu0 0.0
      %115 = vmatprep.subr.mxu0 0.0
      %116 = vmatpush2.msra.mxu0 0.0
      %117 = vmatprep.subr.mxu0 0.0
      %118 = vmatpush2.msra.mxu0 0.0
      %119 = vmatprep.subr.mxu0 0.0
      %120 = vmatpush2.msra.mxu0 0.0
      %121 = vmatprep.subr.mxu0 0.0
      %122 = vmatpush2.msra.mxu0 0.0
      %123 = vmatprep.subr.mxu0 0.0
      %124 = vmatpush2.msra.mxu0 0.0
      %125 = vmatprep.subr.mxu0 0.0
      %126 = vmatpush2.msra.mxu0 0.0
      %127 = vmatprep.subr.mxu0 0.0
      %128 = vmatpush2.msra.mxu0 0.0
      %129 = vmatprep.subr.mxu0 0.0
      %130 = vmatpush2.msra.mxu0 0.0
      %131 = vmatprep.mubr.f32.mxu0 0.0
      %132 = vmatmul.mubr.f32.gmra.mxu0 %v65
      %v133 = vpop.f32.mrf.mxu0
      %v134 = vadd.f32 %v61, %v133
      %v135 = vpop.f32.mrf.mxu0
      %136 = vdwg.mxu0
      %v137 = vld [vmem:[%s4] sm:$0x3]
      %v138 = vld [vmem:[%s5] sm:$0xff]
      %v139 = vld [vmem:[%s5 + $0x8] sm:$0xff]
      %v140 = vld [vmem:[%s5 + $0x10] sm:$0xff]
      %v141 = vld [vmem:[%s5 + $0x18] sm:$0xff]
      %v142 = vld [vmem:[%s6] sm:$0x1]
      %v144 = vlaneseq
      %v145 = vshrl.u32 %v144, 7
      %v146 = vsub.s32 0, %v145
      %v147 = vrot.slane %v142, %v146
      %v150 = vsel %vm63, %v137, 0
      %152 = vmatprep.subr.mxu0 0.0
      %153 = vmatpush1.msra.mxu0 0.0
      %154 = vmatprep.subr.mxu0 0.0
      %155 = vmatpush1.msra.mxu0 0.0
      %156 = vmatprep.subr.mxu0 0.0
      %157 = vmatpush1.msra.mxu0 0.0
      %158 = vmatprep.subr.mxu0 0.0
      %159 = vmatpush1.msra.mxu0 0.0
      %160 = vmatprep.subr.mxu0 0.0
      %161 = vmatpush1.msra.mxu0 0.0
      %162 = vmatprep.subr.mxu0 0.0
      %163 = vmatpush1.msra.mxu0 0.0
      %164 = vmatprep.subr.mxu0 0.0
      %165 = vmatpush1.msra.mxu0 0.0
      %166 = vmatprep.subr.mxu0 0.0
      %167 = vmatpush1.msra.mxu0 0.0
      %168 = vmatprep.subr.mxu0 0.0
      %169 = vmatpush1.msra.mxu0 0.0
      %170 = vmatprep.subr.mxu0 0.0
      %171 = vmatpush1.msra.mxu0 0.0
      %172 = vmatprep.subr.mxu0 0.0
      %173 = vmatpush1.msra.mxu0 0.0
      %174 = vmatprep.subr.mxu0 0.0
      %175 = vmatpush1.msra.mxu0 0.0
      %176 = vmatprep.subr.mxu0 0.0
      %177 = vmatpush1.msra.mxu0 %v141
      %178 = vmatprep.subr.mxu0 0.0
      %179 = vmatpush1.msra.mxu0 %v140
      %180 = vmatprep.subr.mxu0 0.0
      %181 = vmatpush1.msra.mxu0 %v139
      %182 = vmatprep.subr.mxu0 0.0
      %183 = vmatpush1.msra.mxu0 %v138
      %184 = vmatprep.subr.mxu0 0.0
      %185 = vmatpush2.msra.mxu0 0.0
      %186 = vmatprep.subr.mxu0 0.0
      %187 = vmatpush2.msra.mxu0 0.0
      %188 = vmatprep.subr.mxu0 0.0
      %189 = vmatpush2.msra.mxu0 0.0
      %190 = vmatprep.subr.mxu0 0.0
      %191 = vmatpush2.msra.mxu0 0.0
      %192 = vmatprep.subr.mxu0 0.0
      %193 = vmatpush2.msra.mxu0 0.0
      %194 = vmatprep.subr.mxu0 0.0
      %195 = vmatpush2.msra.mxu0 0.0
      %196 = vmatprep.subr.mxu0 0.0
      %197 = vmatpush2.msra.mxu0 0.0
      %198 = vmatprep.subr.mxu0 0.0
      %199 = vmatpush2.msra.mxu0 0.0
      %200 = vmatprep.subr.mxu0 0.0
      %201 = vmatpush2.msra.mxu0 0.0
      %202 = vmatprep.subr.mxu0 0.0
      %203 = vmatpush2.msra.mxu0 0.0
      %204 = vmatprep.subr.mxu0 0.0
      %205 = vmatpush2.msra.mxu0 0.0
      %206 = vmatprep.subr.mxu0 0.0
      %207 = vmatpush2.msra.mxu0 0.0
      %208 = vmatprep.subr.mxu0 0.0
      %209 = vmatpush2.msra.mxu0 0.0
      %210 = vmatprep.subr.mxu0 0.0
      %211 = vmatpush2.msra.mxu0 0.0
      %212 = vmatprep.subr.mxu0 0.0
      %213 = vmatpush2.msra.mxu0 0.0
      %214 = vmatprep.subr.mxu0 0.0
      %215 = vmatpush2.msra.mxu0 0.0
      %216 = vmatprep.mubr.f32.mxu0 0.0
      %217 = vmatmul.mubr.f32.gmra.mxu0 %v150
      %v218 = vpop.f32.mrf.mxu0
      %v219 = vadd.f32 %v147, %v218
      %v220 = vpop.f32.mrf.mxu0
      %221 = vdwg.mxu0
      %v222 = vmul.f32 %v134, %v134
      %vm223 = vcmask 123904
      %v224 = vsel %vm223, %v222, 0.0
      %225 = vadd.xlane.f32.xlu0 %v224
      %v226 = vpop.xlane.xlu0 %225
      %v227 = vrsqrt.pop %v226
      %v228 = vmul.f32 %v226, %v227
      %vm229 = vcmp.eq.f32.partialorder %v226, inf
      %v230 = vsel %vm229, %v226, %v228
      %vm231 = vcmp.eq.f32.partialorder %v226, 0.0
      %v232 = vand.u32 %v226, 2147483648
      %v233 = vsel %vm231, %v232, %v230
      %v234 = vmul.f32 %v219, %v219
      %v235 = vsel %vm223, %v234, 0.0
      %236 = vadd.xlane.f32.xlu0 %v235
      %v237 = vpop.xlane.xlu0 %236
      %v238 = vrsqrt.pop %v237
      %v239 = vmul.f32 %v237, %v238
      %vm240 = vcmp.eq.f32.partialorder %v237, inf
      %v241 = vsel %vm240, %v237, %v239
      %vm242 = vcmp.eq.f32.partialorder %v237, 0.0
      %v243 = vand.u32 %v237, 2147483648
      %v244 = vsel %vm242, %v243, %v241
      %v245 = vmax.f32 %v233, 1e-12
      %v246 = vrcp.pop %v245
      %v247 = vmul.f32 %v134, %v246
      %v248 = vmax.f32 %v244, 1e-12
      %v249 = vrcp.pop %v248
      %v250 = vmul.f32 %v219, %v249
      %251 = vst.msk [vmem:[%s14] sm:$0x3] %vm223, %v247
      %252 = vst.msk [vmem:[%s15] sm:$0x3] %vm223, %v250
      %vm253 = vcmask 130048
      %v255 = vsel %vm253, %v247, 0
      %v258 = vsel %vm253, %v250, 0
      %260 = vmatprep.subr.mxu0 0.0
      %261 = vmatpush1.xpose.msra.mxu0 0.0
      %262 = vmatprep.subr.mxu0 0.0
      %263 = vmatpush1.xpose.msra.mxu0 0.0
      %264 = vmatprep.subr.mxu0 0.0
      %265 = vmatpush1.xpose.msra.mxu0 0.0
      %266 = vmatprep.subr.mxu0 0.0
      %267 = vmatpush1.xpose.msra.mxu0 0.0
      %268 = vmatprep.subr.mxu0 0.0
      %269 = vmatpush1.xpose.msra.mxu0 0.0
      %270 = vmatprep.subr.mxu0 0.0
      %271 = vmatpush1.xpose.msra.mxu0 0.0
      %272 = vmatprep.subr.mxu0 0.0
      %273 = vmatpush1.xpose.msra.mxu0 0.0
      %274 = vmatprep.subr.mxu0 0.0
      %275 = vmatpush1.xpose.msra.mxu0 0.0
      %276 = vmatprep.subr.mxu0 0.0
      %277 = vmatpush1.xpose.msra.mxu0 0.0
      %278 = vmatprep.subr.mxu0 0.0
      %279 = vmatpush1.xpose.msra.mxu0 0.0
      %280 = vmatprep.subr.mxu0 0.0
      %281 = vmatpush1.xpose.msra.mxu0 0.0
      %282 = vmatprep.subr.mxu0 0.0
      %283 = vmatpush1.xpose.msra.mxu0 0.0
      %284 = vmatprep.subr.mxu0 0.0
      %285 = vmatpush1.xpose.msra.mxu0 0.0
      %286 = vmatprep.subr.mxu0 0.0
      %287 = vmatpush1.xpose.msra.mxu0 0.0
      %288 = vmatprep.subr.mxu0 0.0
      %289 = vmatpush1.xpose.msra.mxu0 0.0
      %290 = vmatprep.subr.mxu0 0.0
      %291 = vmatpush1.xpose.msra.mxu0 %v258
      %292 = vmatprep.subr.mxu0 0.0
      %293 = vmatpush2.xpose.msra.mxu0 0.0
      %294 = vmatprep.subr.mxu0 0.0
      %295 = vmatpush2.xpose.msra.mxu0 0.0
      %296 = vmatprep.subr.mxu0 0.0
      %297 = vmatpush2.xpose.msra.mxu0 0.0
      %298 = vmatprep.subr.mxu0 0.0
      %299 = vmatpush2.xpose.msra.mxu0 0.0
      %300 = vmatprep.subr.mxu0 0.0
      %301 = vmatpush2.xpose.msra.mxu0 0.0
      %302 = vmatprep.subr.mxu0 0.0
      %303 = vmatpush2.xpose.msra.mxu0 0.0
      %304 = vmatprep.subr.mxu0 0.0
      %305 = vmatpush2.xpose.msra.mxu0 0.0
      %306 = vmatprep.subr.mxu0 0.0
      %307 = vmatpush2.xpose.msra.mxu0 0.0
      %308 = vmatprep.subr.mxu0 0.0
      %309 = vmatpush2.xpose.msra.mxu0 0.0
      %310 = vmatprep.subr.mxu0 0.0
      %311 = vmatpush2.xpose.msra.mxu0 0.0
      %312 = vmatprep.subr.mxu0 0.0
      %313 = vmatpush2.xpose.msra.mxu0 0.0
      %314 = vmatprep.subr.mxu0 0.0
      %315 = vmatpush2.xpose.msra.mxu0 0.0
      %316 = vmatprep.subr.mxu0 0.0
      %317 = vmatpush2.xpose.msra.mxu0 0.0
      %318 = vmatprep.subr.mxu0 0.0
      %319 = vmatpush2.xpose.msra.mxu0 0.0
      %320 = vmatprep.subr.mxu0 0.0
      %321 = vmatpush2.xpose.msra.mxu0 0.0
      %322 = vmatprep.subr.mxu0 0.0
      %323 = vmatpush2.xpose.msra.mxu0 0.0
      %324 = vmatprep.mubr.f32.mxu0 0.0
      %325 = vmatmul.mubr.f32.gmra.mxu0 %v255
      %v326 = vpop.f32.mrf.mxu0
      %v327 = vadd.f32 0.0, %v326
      %v328 = vpop.f32.mrf.mxu0
      %329 = vdwg.mxu0
      %v330 = vstv %s46
      %v331 = vmul.f32 %v327, %v330
      %332 = vmatprep.subr.mxu0 0.0
      %333 = vmatpush1.xpose.msra.mxu0 0.0
      %334 = vmatprep.subr.mxu0 0.0
      %335 = vmatpush1.xpose.msra.mxu0 0.0
      %336 = vmatprep.subr.mxu0 0.0
      %337 = vmatpush1.xpose.msra.mxu0 0.0
      %338 = vmatprep.subr.mxu0 0.0
      %339 = vmatpush1.xpose.msra.mxu0 0.0
      %340 = vmatprep.subr.mxu0 0.0
      %341 = vmatpush1.xpose.msra.mxu0 0.0
      %342 = vmatprep.subr.mxu0 0.0
      %343 = vmatpush1.xpose.msra.mxu0 0.0
      %344 = vmatprep.subr.mxu0 0.0
      %345 = vmatpush1.xpose.msra.mxu0 0.0
      %346 = vmatprep.subr.mxu0 0.0
      %347 = vmatpush1.xpose.msra.mxu0 0.0
      %348 = vmatprep.subr.mxu0 0.0
      %349 = vmatpush1.xpose.msra.mxu0 0.0
      %350 = vmatprep.subr.mxu0 0.0
      %351 = vmatpush1.xpose.msra.mxu0 0.0
      %352 = vmatprep.subr.mxu0 0.0
      %353 = vmatpush1.xpose.msra.mxu0 0.0
      %354 = vmatprep.subr.mxu0 0.0
      %355 = vmatpush1.xpose.msra.mxu0 0.0
      %356 = vmatprep.subr.mxu0 0.0
      %357 = vmatpush1.xpose.msra.mxu0 0.0
      %358 = vmatprep.subr.mxu0 0.0
      %359 = vmatpush1.xpose.msra.mxu0 0.0
      %360 = vmatprep.subr.mxu0 0.0
      %361 = vmatpush1.xpose.msra.mxu0 0.0
      %362 = vmatprep.subr.mxu0 0.0
      %363 = vmatpush1.xpose.msra.mxu0 %v255
      %364 = vmatprep.subr.mxu0 0.0
      %365 = vmatpush2.xpose.msra.mxu0 0.0
      %366 = vmatprep.subr.mxu0 0.0
      %367 = vmatpush2.xpose.msra.mxu0 0.0
      %368 = vmatprep.subr.mxu0 0.0
      %369 = vmatpush2.xpose.msra.mxu0 0.0
      %370 = vmatprep.subr.mxu0 0.0
      %371 = vmatpush2.xpose.msra.mxu0 0.0
      %372 = vmatprep.subr.mxu0 0.0
      %373 = vmatpush2.xpose.msra.mxu0 0.0
      %374 = vmatprep.subr.mxu0 0.0
      %375 = vmatpush2.xpose.msra.mxu0 0.0
      %376 = vmatprep.subr.mxu0 0.0
      %377 = vmatpush2.xpose.msra.mxu0 0.0
      %378 = vmatprep.subr.mxu0 0.0
      %379 = vmatpush2.xpose.msra.mxu0 0.0
      %380 = vmatprep.subr.mxu0 0.0
      %381 = vmatpush2.xpose.msra.mxu0 0.0
      %382 = vmatprep.subr.mxu0 0.0
      %383 = vmatpush2.xpose.msra.mxu0 0.0
      %384 = vmatprep.subr.mxu0 0.0
      %385 = vmatpush2.xpose.msra.mxu0 0.0
      %386 = vmatprep.subr.mxu0 0.0
      %387 = vmatpush2.xpose.msra.mxu0 0.0
      %388 = vmatprep.subr.mxu0 0.0
      %389 = vmatpush2.xpose.msra.mxu0 0.0
      %390 = vmatprep.subr.mxu0 0.0
      %391 = vmatpush2.xpose.msra.mxu0 0.0
      %392 = vmatprep.subr.mxu0 0.0
      %393 = vmatpush2.xpose.msra.mxu0 0.0
      %394 = vmatprep.subr.mxu0 0.0
      %395 = vmatpush2.xpose.msra.mxu0 0.0
      %396 = vmatprep.mubr.f32.mxu0 0.0
      %397 = vmatmul.mubr.f32.gmra.mxu0 %v258
      %v398 = vpop.f32.mrf.mxu0
      %v399 = vadd.f32 0.0, %v398
      %v400 = vpop.f32.mrf.mxu0
      %401 = vdwg.mxu0
      %v402 = vmul.f32 %v399, %v330
      %v403 = vld [vmem:[%s7] sm:$0x3]
      %vm404 = vcmp.gt.f32.partialorder %v403, 0.5
      %vm405 = vcmask 9216
      %v406 = vsel %vm405, %v331, -inf
      %407 = vmax.xlane.f32.xlu0 %v406
      %v408 = vpop.xlane.xlu0 %407
      %v409 = vsub.f32 %v331, %v408
      %v410 = vmul.f32 %v409, 1.442695
      %v411 = vpow.pop %v410
      %v412 = vsel %vm405, %v411, 0.0
      %413 = vadd.xlane.f32.xlu0 %v412
      %v414 = vpop.xlane.xlu0 %413
      %v415 = vrcp.pop %v414
      %v416 = vmul.f32 %v411, %v415
      %v417 = vsel %vm404, 0.0, %v416
      %418 = vst.msk [vmem:[%s12] sm:$0x3] %vm405, %v417
      %v419 = vsel %vm405, %v402, -inf
      %420 = vmax.xlane.f32.xlu0 %v419
      %v421 = vpop.xlane.xlu0 %420
      %v422 = vsub.f32 %v402, %v421
      %v423 = vmul.f32 %v422, 1.442695
      %v424 = vpow.pop %v423
      %v425 = vsel %vm405, %v424, 0.0
      %426 = vadd.xlane.f32.xlu0 %v425
      %v427 = vpop.xlane.xlu0 %426
      %v428 = vrcp.pop %v427
      %v429 = vmul.f32 %v424, %v428
      %v430 = vsel %vm404, 0.0, %v429
      %431 = vst.msk [vmem:[%s13] sm:$0x3] %vm405, %v430
      %v432 = vmax.f32 %v331, 0.0
      %v433 = vadd.f32 %v432, 1.0
      %v434 = vrcp.pop %v433
      %v435 = vmul.f32 1.0, %v434
      %v436 = vadd.f32 %v435, 0.0
      %v437 = vadd.f32 %v433, 1.0
      %v438 = vrcp.pop %v437
      %v439 = vmul.f32 1.0, %v438
      %v440 = vadd.f32 %v436, %v439
      %v441 = vadd.f32 %v437, 1.0
      %v442 = vrcp.pop %v441
      %v443 = vmul.f32 1.0, %v442
      %v444 = vadd.f32 %v440, %v443
      %v445 = vadd.f32 %v441, 1.0
      %v446 = vrcp.pop %v445
      %v447 = vmul.f32 1.0, %v446
      %v448 = vmul.f32 %v447, %v447
      %v449 = vlog2.pop %v445
      %v450 = vmul.f32 %v449, 0.6931472
      %v451 = vmul.f32 %v447, 0.5
      %v452 = vsub.f32 %v450, %v451
      %v453 = vmul.f32 %v448, 0.083333336
      %v454 = vsub.f32 %v452, %v453
      %v455 = vmul.f32 %v448, %v448
      %v456 = vmul.f32 %v455, 0.008333334
      %v457 = vadd.f32 %v454, %v456
      %v458 = vmul.f32 %v455, %v448
      %v459 = vmul.f32 %v458, 0.003968254
      %v460 = vsub.f32 %v457, %v459
      %v461 = vsub.f32 %v460, %v444
      %v462 = vlog2.pop %v433
      %v463 = vmul.f32 %v462, 0.6931472
      %v464 = vadd.f32 %v463, 0.0
      %v465 = vlog2.pop %v437
      %v466 = vmul.f32 %v465, 0.6931472
      %v467 = vadd.f32 %v464, %v466
      %v468 = vlog2.pop %v441
      %v469 = vmul.f32 %v468, 0.6931472
      %v470 = vadd.f32 %v467, %v469
      %v471 = vmul.f32 %v447, 0.083333336
      %v472 = vmul.f32 %v447, %v448
      %v473 = vmul.f32 %v472, 0.0027777778
      %v474 = vsub.f32 %v471, %v473
      %v475 = vmul.f32 %v472, %v448
      %v476 = vmul.f32 %v475, 0.0007936508
      %v477 = vadd.f32 %v474, %v476
      %v478 = vsub.f32 %v445, 0.5
      %v479 = vmul.f32 %v478, %v450
      %v480 = vsub.f32 %v479, %v445
      %v481 = vadd.f32 %v480, 0.9189385
      %v482 = vadd.f32 %v481, %v477
      %v483 = vsub.f32 %v482, %v470
      %v484 = vsub.f32 1.0, %v403
      %v485 = vsel %vm405, %v433, 0.0
      %486 = vadd.xlane.f32.xlu0 %v485
      %v487 = vpop.xlane.xlu0 %486
      %v488 = vsel %vm405, %v403, 0.0
      %489 = vadd.xlane.f32.xlu0 %v488
      %v490 = vpop.xlane.xlu0 %489
      %v491 = vsub.f32 %v433, 1.0
      %v492 = vmul.f32 %v491, %v484
      %v493 = vadd.f32 %v492, 1.0
      %v494 = vsel %vm405, %v493, 0.0
      %495 = vadd.xlane.f32.xlu0 %v494
      %v496 = vpop.xlane.xlu0 %495
      %v497 = vsub.f32 0.0, %v403
      %v498 = vmul.f32 %v497, %v461
      %v499 = vmul.f32 %v491, %v461
      %v500 = vsub.f32 %v499, %v483
      %v501 = vmul.f32 %v484, %v500
      %v502 = vmul.f32 %v501, 0.001
      %v503 = vadd.f32 %v498, %v502
      %v504 = vsel %vm405, %v503, 0.0
      %505 = vadd.xlane.f32.xlu0 %v504
      %v506 = vpop.xlane.xlu0 %505
      %vm507 = vcmask 1024
      %508 = vst.msk [vmem:[#allocation2] sm:$0x3] %vm507, %v487
      %509 = vst.msk [vmem:[#allocation3] sm:$0x3] %vm507, %v490
      %510 = vst.msk [vmem:[#allocation4] sm:$0x3] %vm507, %v496
      %511 = vst.msk [vmem:[#allocation5] sm:$0x3] %vm507, %v506
      %v512 = vmax.f32 %v402, 0.0
      %v513 = vadd.f32 %v512, 1.0
      %v514 = vrcp.pop %v513
      %v515 = vmul.f32 1.0, %v514
      %v516 = vadd.f32 %v515, 0.0
      %v517 = vadd.f32 %v513, 1.0
      %v518 = vrcp.pop %v517
      %v519 = vmul.f32 1.0, %v518
      %v520 = vadd.f32 %v516, %v519
      %v521 = vadd.f32 %v517, 1.0
      %v522 = vrcp.pop %v521
      %v523 = vmul.f32 1.0, %v522
      %v524 = vadd.f32 %v520, %v523
      %v525 = vadd.f32 %v521, 1.0
      %v526 = vrcp.pop %v525
      %v527 = vmul.f32 1.0, %v526
      %v528 = vmul.f32 %v527, %v527
      %v529 = vlog2.pop %v525
      %v530 = vmul.f32 %v529, 0.6931472
      %v531 = vmul.f32 %v527, 0.5
      %v532 = vsub.f32 %v530, %v531
      %v533 = vmul.f32 %v528, 0.083333336
      %v534 = vsub.f32 %v532, %v533
      %v535 = vmul.f32 %v528, %v528
      %v536 = vmul.f32 %v535, 0.008333334
      %v537 = vadd.f32 %v534, %v536
      %v538 = vmul.f32 %v535, %v528
      %v539 = vmul.f32 %v538, 0.003968254
      %v540 = vsub.f32 %v537, %v539
      %v541 = vsub.f32 %v540, %v524
      %v542 = vlog2.pop %v513
      %v543 = vmul.f32 %v542, 0.6931472
      %v544 = vadd.f32 %v543, 0.0
      %v545 = vlog2.pop %v517
      %v546 = vmul.f32 %v545, 0.6931472
      %v547 = vadd.f32 %v544, %v546
      %v548 = vlog2.pop %v521
      %v549 = vmul.f32 %v548, 0.6931472
      %v550 = vadd.f32 %v547, %v549
      %v551 = vmul.f32 %v527, 0.083333336
      %v552 = vmul.f32 %v527, %v528
      %v553 = vmul.f32 %v552, 0.0027777778
      %v554 = vsub.f32 %v551, %v553
      %v555 = vmul.f32 %v552, %v528
      %v556 = vmul.f32 %v555, 0.0007936508
      %v557 = vadd.f32 %v554, %v556
      %v558 = vsub.f32 %v525, 0.5
      %v559 = vmul.f32 %v558, %v530
      %v560 = vsub.f32 %v559, %v525
      %v561 = vadd.f32 %v560, 0.9189385
      %v562 = vadd.f32 %v561, %v557
      %v563 = vsub.f32 %v562, %v550
      %v564 = vsel %vm405, %v513, 0.0
      %565 = vadd.xlane.f32.xlu0 %v564
      %v566 = vpop.xlane.xlu0 %565
      %v567 = vsub.f32 %v513, 1.0
      %v568 = vmul.f32 %v567, %v484
      %v569 = vadd.f32 %v568, 1.0
      %v570 = vsel %vm405, %v569, 0.0
      %571 = vadd.xlane.f32.xlu0 %v570
      %v572 = vpop.xlane.xlu0 %571
      %v573 = vmul.f32 %v497, %v541
      %v574 = vmul.f32 %v567, %v541
      %v575 = vsub.f32 %v574, %v563
      %v576 = vmul.f32 %v484, %v575
      %v577 = vmul.f32 %v576, 0.001
      %v578 = vadd.f32 %v573, %v577
      %v579 = vsel %vm405, %v578, 0.0
      %580 = vadd.xlane.f32.xlu0 %v579
      %v581 = vpop.xlane.xlu0 %580
      %582 = vst.msk [vmem:[#allocation6] sm:$0x3] %vm507, %v566
      %583 = vst.msk [vmem:[#allocation7] sm:$0x3] %vm507, %v490
      %584 = vst.msk [vmem:[#allocation8] sm:$0x3] %vm507, %v572
      %585 = vst.msk [vmem:[#allocation9] sm:$0x3] %vm507, %v581
    $region49: #{blip_retrieval_forward.6} parent=1 // pred_fallthru
      _
    %v586 = vld [vmem:[%s14] sm:$0x3]
    %v587 = vpack.c.bf16 %v586, %v586
    %v588 = vld [vmem:[%s15] sm:$0x3]
    %v589 = vpack.c.bf16 %v588, %v588
    %v590 = vld [vmem:[%s10] sm:$0x3]
    %v591 = vld [vmem:[%s8] sm:$0xf]
    %v592 = vld [vmem:[%s8 + $0x4] sm:$0xf]
    %v595 = vunpack.c.l.b16 %v591
    %v596 = vunpack.c.l.b16 %v592
    %v597 = vpack.c.b16 %v596, %v595
    %vm599 = vcmask 130048
    %v601 = vsel %vm599, %v587, 0
    %603 = vmatprep.subr.bf16.mxu0 0
    %604 = vmatpush1.bf16.msra.mxu0 0
    %605 = vmatprep.subr.bf16.mxu0 0
    %606 = vmatpush1.bf16.msra.mxu0 0
    %607 = vmatprep.subr.bf16.mxu0 0
    %608 = vmatpush1.bf16.msra.mxu0 0
    %609 = vmatprep.subr.bf16.mxu0 0
    %610 = vmatpush1.bf16.msra.mxu0 0
    %611 = vmatprep.subr.bf16.mxu0 0
    %612 = vmatpush1.bf16.msra.mxu0 0
    %613 = vmatprep.subr.bf16.mxu0 0
    %614 = vmatpush1.bf16.msra.mxu0 0
    %615 = vmatprep.subr.bf16.mxu0 0
    %616 = vmatpush1.bf16.msra.mxu0 0
    %617 = vmatprep.subr.bf16.mxu0 0
    %618 = vmatpush1.bf16.msra.mxu0 %v597
    %619 = vmatprep.subr.bf16.mxu0 0
    %620 = vmatpush2.bf16.msra.mxu0 0
    %621 = vmatprep.subr.bf16.mxu0 0
    %622 = vmatpush2.bf16.msra.mxu0 0
    %623 = vmatprep.subr.bf16.mxu0 0
    %624 = vmatpush2.bf16.msra.mxu0 0
    %625 = vmatprep.subr.bf16.mxu0 0
    %626 = vmatpush2.bf16.msra.mxu0 0
    %627 = vmatprep.subr.bf16.mxu0 0
    %628 = vmatpush2.bf16.msra.mxu0 0
    %629 = vmatprep.subr.bf16.mxu0 0
    %630 = vmatpush2.bf16.msra.mxu0 0
    %631 = vmatprep.subr.bf16.mxu0 0
    %632 = vmatpush2.bf16.msra.mxu0 0
    %633 = vmatprep.subr.bf16.mxu0 0
    %634 = vmatpush2.bf16.msra.mxu0 0
    %635 = vmatprep.mubr.bf16.mxu0 0
    %636 = vmatmul.mubr.bf16.gmra.mxu0 %v601
    %v637 = vpop.f32.mrf.mxu0
    %v638 = vadd.f32 0.0, %v637
    %v639 = vpop.f32.mrf.mxu0
    %v640 = vpop.f32.mrf.mxu0
    %v641 = vpop.f32.mrf.mxu0
    %642 = vdwg.mxu0
    %v643 = vstv %s46
    %v644 = vmul.f32 %v638, %v643
    %v645 = vld [vmem:[%s9] sm:$0xf]
    %v646 = vld [vmem:[%s9 + $0x4] sm:$0xf]
    %v649 = vunpack.c.l.b16 %v645
    %v650 = vunpack.c.l.b16 %v646
    %v651 = vpack.c.b16 %v650, %v649
    %v654 = vsel %vm599, %v589, 0
    %656 = vmatprep.subr.bf16.mxu0 0
    %657 = vmatpush1.bf16.msra.mxu0 0
    %658 = vmatprep.subr.bf16.mxu0 0
    %659 = vmatpush1.bf16.msra.mxu0 0
    %660 = vmatprep.subr.bf16.mxu0 0
    %661 = vmatpush1.bf16.msra.mxu0 0
    %662 = vmatprep.subr.bf16.mxu0 0
    %663 = vmatpush1.bf16.msra.mxu0 0
    %664 = vmatprep.subr.bf16.mxu0 0
    %665 = vmatpush1.bf16.msra.mxu0 0
    %666 = vmatprep.subr.bf16.mxu0 0
    %667 = vmatpush1.bf16.msra.mxu0 0
    %668 = vmatprep.subr.bf16.mxu0 0
    %669 = vmatpush1.bf16.msra.mxu0 0
    %670 = vmatprep.subr.bf16.mxu0 0
    %671 = vmatpush1.bf16.msra.mxu0 %v651
    %672 = vmatprep.subr.bf16.mxu0 0
    %673 = vmatpush2.bf16.msra.mxu0 0
    %674 = vmatprep.subr.bf16.mxu0 0
    %675 = vmatpush2.bf16.msra.mxu0 0
    %676 = vmatprep.subr.bf16.mxu0 0
    %677 = vmatpush2.bf16.msra.mxu0 0
    %678 = vmatprep.subr.bf16.mxu0 0
    %679 = vmatpush2.bf16.msra.mxu0 0
    %680 = vmatprep.subr.bf16.mxu0 0
    %681 = vmatpush2.bf16.msra.mxu0 0
    %682 = vmatprep.subr.bf16.mxu0 0
    %683 = vmatpush2.bf16.msra.mxu0 0
    %684 = vmatprep.subr.bf16.mxu0 0
    %685 = vmatpush2.bf16.msra.mxu0 0
    %686 = vmatprep.subr.bf16.mxu0 0
    %687 = vmatpush2.bf16.msra.mxu0 0
    %688 = vmatprep.mubr.bf16.mxu0 0
    %689 = vmatmul.mubr.bf16.gmra.mxu0 %v654
    %v690 = vpop.f32.mrf.mxu0
    %v691 = vadd.f32 0.0, %v690
    %v692 = vpop.f32.mrf.mxu0
    %v693 = vpop.f32.mrf.mxu0
    %v694 = vpop.f32.mrf.mxu0
    %695 = vdwg.mxu0
    %v696 = vmul.f32 %v691, %v643
    %v697 = vmax.f32 %v644, 0.0
    %v698 = vadd.f32 %v697, 1.0
    %v699 = vrcp.pop %v698
    %v700 = vmul.f32 1.0, %v699
    %v701 = vadd.f32 %v700, 0.0
    %v702 = vadd.f32 %v698, 1.0
    %v703 = vrcp.pop %v702
    %v704 = vmul.f32 1.0, %v703
    %v705 = vadd.f32 %v701, %v704
    %v706 = vadd.f32 %v702, 1.0
    %v707 = vrcp.pop %v706
    %v708 = vmul.f32 1.0, %v707
    %v709 = vadd.f32 %v705, %v708
    %v710 = vadd.f32 %v706, 1.0
    %v711 = vrcp.pop %v710
    %v712 = vmul.f32 1.0, %v711
    %v713 = vmul.f32 %v712, %v712
    %v714 = vlog2.pop %v710
    %v715 = vmul.f32 %v714, 0.6931472
    %v716 = vmul.f32 %v712, 0.5
    %v717 = vsub.f32 %v715, %v716
    %v718 = vmul.f32 %v713, 0.083333336
    %v719 = vsub.f32 %v717, %v718
    %v720 = vmul.f32 %v713, %v713
    %v721 = vmul.f32 %v720, 0.008333334
    %v722 = vadd.f32 %v719, %v721
    %v723 = vmul.f32 %v720, %v713
    %v724 = vmul.f32 %v723, 0.003968254
    %v725 = vsub.f32 %v722, %v724
    %v726 = vsub.f32 %v725, %v709
    %v727 = vlog2.pop %v698
    %v728 = vmul.f32 %v727, 0.6931472
    %v729 = vadd.f32 %v728, 0.0
    %v730 = vlog2.pop %v702
    %v731 = vmul.f32 %v730, 0.6931472
    %v732 = vadd.f32 %v729, %v731
    %v733 = vlog2.pop %v706
    %v734 = vmul.f32 %v733, 0.6931472
    %v735 = vadd.f32 %v732, %v734
    %v736 = vmul.f32 %v712, 0.083333336
    %v737 = vmul.f32 %v712, %v713
    %v738 = vmul.f32 %v737, 0.0027777778
    %v739 = vsub.f32 %v736, %v738
    %v740 = vmul.f32 %v737, %v713
    %v741 = vmul.f32 %v740, 0.0007936508
    %v742 = vadd.f32 %v739, %v741
    %v743 = vsub.f32 %v710, 0.5
    %v744 = vmul.f32 %v743, %v715
    %v745 = vsub.f32 %v744, %v710
    %v746 = vadd.f32 %v745, 0.9189385
    %v747 = vadd.f32 %v746, %v742
    %v748 = vsub.f32 %v747, %v735
    %v749 = vsub.f32 1.0, %v590
    %vm750 = vcmask 58368
    %v751 = vsel %vm750, %v698, 0.0
    %752 = vadd.xlane.f32.xlu0 %v751
    %v753 = vpop.xlane.xlu0 %752
    %v754 = vsel %vm750, %v590, 0.0
    %755 = vadd.xlane.f32.xlu0 %v754
    %v756 = vpop.xlane.xlu0 %755
    %v757 = vsub.f32 %v698, 1.0
    %v758 = vmul.f32 %v757, %v749
    %v759 = vadd.f32 %v758, 1.0
    %v760 = vsel %vm750, %v759, 0.0
    %761 = vadd.xlane.f32.xlu0 %v760
    %v762 = vpop.xlane.xlu0 %761
    %v763 = vsub.f32 0.0, %v590
    %v764 = vmul.f32 %v763, %v726
    %v765 = vmul.f32 %v757, %v726
    %v766 = vsub.f32 %v765, %v748
    %v767 = vmul.f32 %v749, %v766
    %v768 = vmul.f32 %v767, 0.001
    %v769 = vadd.f32 %v764, %v768
    %v770 = vsel %vm750, %v769, 0.0
    %771 = vadd.xlane.f32.xlu0 %v770
    %v772 = vpop.xlane.xlu0 %771
    %v773 = vld [vmem:[#allocation2] sm:$0x3]
    %v774 = vadd.f32 %v773, %v753
    %vm775 = vcmask 1024
    %776 = vst.msk [vmem:[#allocation2] sm:$0x3] %vm775, %v774
    %v777 = vld [vmem:[#allocation3] sm:$0x3]
    %v778 = vadd.f32 %v777, %v756
    %779 = vst.msk [vmem:[#allocation3] sm:$0x3] %vm775, %v778
    %v780 = vld [vmem:[#allocation4] sm:$0x3]
    %v781 = vadd.f32 %v780, %v762
    %782 = vst.msk [vmem:[#allocation4] sm:$0x3] %vm775, %v781
    %v783 = vld [vmem:[#allocation5] sm:$0x3]
    %v784 = vadd.f32 %v783, %v772
    %785 = vst.msk [vmem:[#allocation5] sm:$0x3] %vm775, %v784
    %v786 = vmax.f32 %v696, 0.0
    %v787 = vadd.f32 %v786, 1.0
    %v788 = vrcp.pop %v787
    %v789 = vmul.f32 1.0, %v788
    %v790 = vadd.f32 %v789, 0.0
    %v791 = vadd.f32 %v787, 1.0
    %v792 = vrcp.pop %v791
    %v793 = vmul.f32 1.0, %v792
    %v794 = vadd.f32 %v790, %v793
    %v795 = vadd.f32 %v791, 1.0
    %v796 = vrcp.pop %v795
    %v797 = vmul.f32 1.0, %v796
    %v798 = vadd.f32 %v794, %v797
    %v799 = vadd.f32 %v795, 1.0
    %v800 = vrcp.pop %v799
    %v801 = vmul.f32 1.0, %v800
    %v802 = vmul.f32 %v801, %v801
    %v803 = vlog2.pop %v799
    %v804 = vmul.f32 %v803, 0.6931472
    %v805 = vmul.f32 %v801, 0.5
    %v806 = vsub.f32 %v804, %v805
    %v807 = vmul.f32 %v802, 0.083333336
    %v808 = vsub.f32 %v806, %v807
    %v809 = vmul.f32 %v802, %v802
    %v810 = vmul.f32 %v809, 0.008333334
    %v811 = vadd.f32 %v808, %v810
    %v812 = vmul.f32 %v809, %v802
    %v813 = vmul.f32 %v812, 0.003968254
    %v814 = vsub.f32 %v811, %v813
    %v815 = vsub.f32 %v814, %v798
    %v816 = vlog2.pop %v787
    %v817 = vmul.f32 %v816, 0.6931472
    %v818 = vadd.f32 %v817, 0.0
    %v819 = vlog2.pop %v791
    %v820 = vmul.f32 %v819, 0.6931472
    %v821 = vadd.f32 %v818, %v820
    %v822 = vlog2.pop %v795
    %v823 = vmul.f32 %v822, 0.6931472
    %v824 = vadd.f32 %v821, %v823
    %v825 = vmul.f32 %v801, 0.083333336
    %v826 = vmul.f32 %v801, %v802
    %v827 = vmul.f32 %v826, 0.0027777778
    %v828 = vsub.f32 %v825, %v827
    %v829 = vmul.f32 %v826, %v802
    %v830 = vmul.f32 %v829, 0.0007936508
    %v831 = vadd.f32 %v828, %v830
    %v832 = vsub.f32 %v799, 0.5
    %v833 = vmul.f32 %v832, %v804
    %v834 = vsub.f32 %v833, %v799
    %v835 = vadd.f32 %v834, 0.9189385
    %v836 = vadd.f32 %v835, %v831
    %v837 = vsub.f32 %v836, %v824
    %v838 = vsel %vm750, %v787, 0.0
    %839 = vadd.xlane.f32.xlu0 %v838
    %v840 = vpop.xlane.xlu0 %839
    %v841 = vsub.f32 %v787, 1.0
    %v842 = vmul.f32 %v841, %v749
    %v843 = vadd.f32 %v842, 1.0
    %v844 = vsel %vm750, %v843, 0.0
    %845 = vadd.xlane.f32.xlu0 %v844
    %v846 = vpop.xlane.xlu0 %845
    %v847 = vmul.f32 %v763, %v815
    %v848 = vmul.f32 %v841, %v815
    %v849 = vsub.f32 %v848, %v837
    %v850 = vmul.f32 %v749, %v849
    %v851 = vmul.f32 %v850, 0.001
    %v852 = vadd.f32 %v847, %v851
    %v853 = vsel %vm750, %v852, 0.0
    %854 = vadd.xlane.f32.xlu0 %v853
    %v855 = vpop.xlane.xlu0 %854
    %v856 = vld [vmem:[#allocation6] sm:$0x3]
    %v857 = vadd.f32 %v856, %v840
    %858 = vst.msk [vmem:[#allocation6] sm:$0x3] %vm775, %v857
    %v859 = vld [vmem:[#allocation7] sm:$0x3]
    %v860 = vadd.f32 %v859, %v756
    %861 = vst.msk [vmem:[#allocation7] sm:$0x3] %vm775, %v860
    %v862 = vld [vmem:[#allocation8] sm:$0x3]
    %v863 = vadd.f32 %v862, %v846
    %864 = vst.msk [vmem:[#allocation8] sm:$0x3] %vm775, %v863
    %v865 = vld [vmem:[#allocation9] sm:$0x3]
    %v866 = vadd.f32 %v865, %v855
    %867 = vst.msk [vmem:[#allocation9] sm:$0x3] %vm775, %v866
    // Predicated region
    $region50: #{blip_retrieval_forward.6} parent=1 // pred_check
      %p868 = pneg %p47
    $region51: #{blip_retrieval_forward.6} parent=1 // pred_check_branch
      %870 = sbr.rel (%p868) target = $region53
    $region52: #{blip_retrieval_forward.6} parent=1 // pred_region
      %v871 = vld [vmem:[#allocation2] sm:$0x3]
      %v872 = vld [vmem:[#allocation3] sm:$0x3]
      %v873 = vld [vmem:[#allocation4] sm:$0x3]
      %v874 = vld [vmem:[#allocation5] sm:$0x3]
      %v875 = vrcp.pop %v871
      %v876 = vmul.f32 1.0, %v875
      %v877 = vadd.f32 %v876, 0.0
      %v878 = vadd.f32 %v871, 1.0
      %v879 = vrcp.pop %v878
      %v880 = vmul.f32 1.0, %v879
      %v881 = vadd.f32 %v877, %v880
      %v882 = vadd.f32 %v878, 1.0
      %v883 = vrcp.pop %v882
      %v884 = vmul.f32 1.0, %v883
      %v885 = vadd.f32 %v881, %v884
      %v886 = vadd.f32 %v882, 1.0
      %v887 = vrcp.pop %v886
      %v888 = vmul.f32 1.0, %v887
      %v889 = vmul.f32 %v888, %v888
      %v890 = vlog2.pop %v886
      %v891 = vmul.f32 %v890, 0.6931472
      %v892 = vmul.f32 %v888, 0.5
      %v893 = vsub.f32 %v891, %v892
      %v894 = vmul.f32 %v889, 0.083333336
      %v895 = vsub.f32 %v893, %v894
      %v896 = vmul.f32 %v889, %v889
      %v897 = vmul.f32 %v896, 0.008333334
      %v898 = vadd.f32 %v895, %v897
      %v899 = vmul.f32 %v896, %v889
      %v900 = vmul.f32 %v899, 0.003968254
      %v901 = vsub.f32 %v898, %v900
      %v902 = vsub.f32 %v901, %v885
      %v903 = vmul.f32 %v902, %v872
      %v904 = vadd.f32 %v903, %v874
      %v905 = vlog2.pop %v873
      %v906 = vmul.f32 %v905, 0.6931472
      %v907 = vadd.f32 %v906, 0.0
      %v908 = vadd.f32 %v873, 1.0
      %v909 = vlog2.pop %v908
      %v910 = vmul.f32 %v909, 0.6931472
      %v911 = vadd.f32 %v907, %v910
      %v912 = vadd.f32 %v908, 1.0
      %v913 = vlog2.pop %v912
      %v914 = vmul.f32 %v913, 0.6931472
      %v915 = vadd.f32 %v911, %v914
      %v916 = vadd.f32 %v912, 1.0
      %v917 = vrcp.pop %v916
      %v918 = vmul.f32 1.0, %v917
      %v919 = vmul.f32 %v918, %v918
      %v920 = vmul.f32 %v918, 0.083333336
      %v921 = vmul.f32 %v918, %v919
      %v922 = vmul.f32 %v921, 0.0027777778
      %v923 = vsub.f32 %v920, %v922
      %v924 = vmul.f32 %v921, %v919
      %v925 = vmul.f32 %v924, 0.0007936508
      %v926 = vadd.f32 %v923, %v925
      %v927 = vsub.f32 %v916, 0.5
      %v928 = vlog2.pop %v916
      %v929 = vmul.f32 %v928, 0.6931472
      %v930 = vmul.f32 %v927, %v929
      %v931 = vsub.f32 %v930, %v916
      %v932 = vadd.f32 %v931, 0.9189385
      %v933 = vadd.f32 %v932, %v926
      %v934 = vsub.f32 %v933, %v915
      %v935 = vsub.f32 %v934, 12.801827
      %v936 = vrcp.pop %v873
      %v937 = vmul.f32 1.0, %v936
      %v938 = vadd.f32 %v937, 0.0
      %v939 = vrcp.pop %v908
      %v940 = vmul.f32 1.0, %v939
      %v941 = vadd.f32 %v938, %v940
      %v942 = vrcp.pop %v912
      %v943 = vmul.f32 1.0, %v942
      %v944 = vadd.f32 %v941, %v943
      %v945 = vmul.f32 %v918, 0.5
      %v946 = vsub.f32 %v929, %v945
      %v947 = vmul.f32 %v919, 0.083333336
      %v948 = vsub.f32 %v946, %v947
      %v949 = vmul.f32 %v919, %v919
      %v950 = vmul.f32 %v949, 0.008333334
      %v951 = vadd.f32 %v948, %v950
      %v952 = vmul.f32 %v949, %v919
      %v953 = vmul.f32 %v952, 0.003968254
      %v954 = vsub.f32 %v951, %v953
      %v955 = vsub.f32 %v954, %v944
      %v956 = vsub.f32 %v873, 10.0
      %v957 = vmul.f32 %v955, %v956
      %v958 = vsub.f32 %v935, %v957
      %v959 = vmul.f32 %v958, 0.001
      %v960 = vadd.f32 %v904, %v959
      %v961 = vsel %vm775, %v960, 0.0
      %v962 = vrot.slane %v961, 4
      %v963 = vadd.f32 %v961, %v962
      %v964 = vrot.slane %v963, 2
      %v965 = vadd.f32 %v963, %v964
      %v966 = vrot.slane %v965, 1
      %v967 = vadd.f32 %v965, %v966
      %v968 = vmul.f32 %v967, 0.5
      %v969 = vld [vmem:[#allocation6] sm:$0x3]
      %v970 = vld [vmem:[#allocation7] sm:$0x3]
      %v971 = vld [vmem:[#allocation8] sm:$0x3]
      %v972 = vld [vmem:[#allocation9] sm:$0x3]
      %v973 = vrcp.pop %v969
      %v974 = vmul.f32 1.0, %v973
      %v975 = vadd.f32 %v974, 0.0
      %v976 = vadd.f32 %v969, 1.0
      %v977 = vrcp.pop %v976
      %v978 = vmul.f32 1.0, %v977
      %v979 = vadd.f32 %v975, %v978
      %v980 = vadd.f32 %v976, 1.0
      %v981 = vrcp.pop %v980
      %v982 = vmul.f32 1.0, %v981
      %v983 = vadd.f32 %v979, %v982
      %v984 = vadd.f32 %v980, 1.0
      %v985 = vrcp.pop %v984
      %v986 = vmul.f32 1.0, %v985
      %v987 = vmul.f32 %v986, %v986
      %v988 = vlog2.pop %v984
      %v989 = vmul.f32 %v988, 0.6931472
      %v990 = vmul.f32 %v986, 0.5
      %v991 = vsub.f32 %v989, %v990
      %v992 = vmul.f32 %v987, 0.083333336
      %v993 = vsub.f32 %v991, %v992
      %v994 = vmul.f32 %v987, %v987
      %v995 = vmul.f32 %v994, 0.008333334
      %v996 = vadd.f32 %v993, %v995
      %v997 = vmul.f32 %v994, %v987
      %v998 = vmul.f32 %v997, 0.003968254
      %v999 = vsub.f32 %v996, %v998
      %v1000 = vsub.f32 %v999, %v983
      %v1001 = vmul.f32 %v1000, %v970
      %v1002 = vadd.f32 %v1001, %v972
      %v1003 = vlog2.pop %v971
      %v1004 = vmul.f32 %v1003, 0.6931472
      %v1005 = vadd.f32 %v1004, 0.0
      %v1006 = vadd.f32 %v971, 1.0
      %v1007 = vlog2.pop %v1006
      %v1008 = vmul.f32 %v1007, 0.6931472
      %v1009 = vadd.f32 %v1005, %v1008
      %v1010 = vadd.f32 %v1006, 1.0
      %v1011 = vlog2.pop %v1010
      %v1012 = vmul.f32 %v1011, 0.6931472
      %v1013 = vadd.f32 %v1009, %v1012
      %v1014 = vadd.f32 %v1010, 1.0
      %v1015 = vrcp.pop %v1014
      %v1016 = vmul.f32 1.0, %v1015
      %v1017 = vmul.f32 %v1016, %v1016
      %v1018 = vmul.f32 %v1016, 0.083333336
      %v1019 = vmul.f32 %v1016, %v1017
      %v1020 = vmul.f32 %v1019, 0.0027777778
      %v1021 = vsub.f32 %v1018, %v1020
      %v1022 = vmul.f32 %v1019, %v1017
      %v1023 = vmul.f32 %v1022, 0.0007936508
      %v1024 = vadd.f32 %v1021, %v1023
      %v1025 = vsub.f32 %v1014, 0.5
      %v1026 = vlog2.pop %v1014
      %v1027 = vmul.f32 %v1026, 0.6931472
      %v1028 = vmul.f32 %v1025, %v1027
      %v1029 = vsub.f32 %v1028, %v1014
      %v1030 = vadd.f32 %v1029, 0.9189385
      %v1031 = vadd.f32 %v1030, %v1024
      %v1032 = vsub.f32 %v1031, %v1013
      %v1033 = vsub.f32 %v1032, 12.801827
      %v1034 = vrcp.pop %v971
      %v1035 = vmul.f32 1.0, %v1034
      %v1036 = vadd.f32 %v1035, 0.0
      %v1037 = vrcp.pop %v1006
      %v1038 = vmul.f32 1.0, %v1037
      %v1039 = vadd.f32 %v1036, %v1038
      %v1040 = vrcp.pop %v1010
      %v1041 = vmul.f32 1.0, %v1040
      %v1042 = vadd.f32 %v1039, %v1041
      %v1043 = vmul.f32 %v1016, 0.5
      %v1044 = vsub.f32 %v1027, %v1043
      %v1045 = vmul.f32 %v1017, 0.083333336
      %v1046 = vsub.f32 %v1044, %v1045
      %v1047 = vmul.f32 %v1017, %v1017
      %v1048 = vmul.f32 %v1047, 0.008333334
      %v1049 = vadd.f32 %v1046, %v1048
      %v1050 = vmul.f32 %v1047, %v1017
      %v1051 = vmul.f32 %v1050, 0.003968254
      %v1052 = vsub.f32 %v1049, %v1051
      %v1053 = vsub.f32 %v1052, %v1042
      %v1054 = vsub.f32 %v971, 10.0
      %v1055 = vmul.f32 %v1053, %v1054
      %v1056 = vsub.f32 %v1033, %v1055
      %v1057 = vmul.f32 %v1056, 0.001
      %v1058 = vadd.f32 %v1002, %v1057
      %v1059 = vsel %vm775, %v1058, 0.0
      %v1060 = vrot.slane %v1059, 4
      %v1061 = vadd.f32 %v1059, %v1060
      %v1062 = vrot.slane %v1061, 2
      %v1063 = vadd.f32 %v1061, %v1062
      %v1064 = vrot.slane %v1063, 1
      %v1065 = vadd.f32 %v1063, %v1064
      %v1066 = vmul.f32 %v1065, 0.5
      %v1067 = vadd.f32 %v968, %v1066
      %v1068 = vmul.f32 %v1067, 0.5
      %vm1069 = vcmask 0
      %1070 = vst.msk [vmem:[#allocation11] sm:$0x1] %vm1069, %v1068
    $region53: #{blip_retrieval_forward.6} parent=1 // pred_fallthru
      _
    // Predicated region
    $region54: #{blip_retrieval_forward.6} parent=1 // pred_check
      _
    $region55: #{blip_retrieval_forward.6} parent=1 // pred_check_branch
      %1072 = sbr.rel (0) target = $region57
    $region56: #{blip_retrieval_forward.6} parent=1 // pred_region
      %s1074 = ssub.s32 16, 16
      %1075 = vsyncadd [#allocation12], %s1074
      %s1077 = sshll.u32 [#allocation11], 4
      %s1078 = int_to_ptr.vmem [resolvable:$true] %s1077
      %1080 = dma.vmem_to_hbm [thread:$0]  %s1078, 16, %s11, [#allocation12]
    $region57: #{blip_retrieval_forward.6} parent=1 // pred_fallthru
      _
    // Predicated region
    $region58: #{blip_retrieval_forward.6} parent=1 // pred_check
      _
    $region59: #{blip_retrieval_forward.6} parent=1 // pred_check_branch
      %1082 = sbr.rel (0) target = $region61
    $region60: #{blip_retrieval_forward.6} parent=1 // pred_region
      _
    $region61: #{blip_retrieval_forward.6} parent=1 // pred_fallthru
      _
    // Predicated region
    $region62: #{blip_retrieval_forward.6} parent=1 // pred_check
      _
    $region63: #{blip_retrieval_forward.6} parent=1 // pred_check_branch
      %1084 = sbr.rel (0) target = $region65
    $region64: #{blip_retrieval_forward.6} parent=1 // pred_region
      _
    $region65: #{blip_retrieval_forward.6} parent=1 // pred_fallthru
      _
    // Predicated region
    $region66: #{blip_retrieval_forward.6} parent=1 // pred_check
      _
    $region67: #{blip_retrieval_forward.6} parent=1 // pred_check_branch
      %1086 = sbr.rel (0) target = $region69
    $region68: #{blip_retrieval_forward.6} parent=1 // pred_region
      _
    $region69: #{blip_retrieval_forward.6} parent=1 // pred_fallthru
      _
    // Predicated region
    $region70: #{blip_retrieval_forward.6} parent=1 // pred_check
      _
    $region71: #{blip_retrieval_forward.6} parent=1 // pred_check_branch
      %1088 = sbr.rel (0) target = $region73
    $region72: #{blip_retrieval_forward.6} parent=1 // pred_region
      _
    $region73: #{blip_retrieval_forward.6} parent=1 // pred_fallthru
      _
    // Predicated region
    $region74: #{blip_retrieval_forward.6} parent=1 // pred_check
      _
    $region75: #{blip_retrieval_forward.6} parent=1 // pred_check_branch
      %1090 = sbr.rel (0) target = $region77
    $region76: #{blip_retrieval_forward.6} parent=1 // pred_region
      %1091 = dma.done [#allocation12], 16
    $region77: #{blip_retrieval_forward.6} parent=1 // pred_fallthru
      _
    // Predicated region
    $region78: #{blip_retrieval_forward.6} parent=1 // pred_check
      _
    $region79: #{blip_retrieval_forward.6} parent=1 // pred_check_branch
      %1093 = sbr.rel (0) target = $region81
    $region80: #{blip_retrieval_forward.6} parent=1 // pred_region
      _
    $region81: #{blip_retrieval_forward.6} parent=1 // pred_fallthru
      _
    // Predicated region
    $region82: #{blip_retrieval_forward.6} parent=1 // pred_check
      _
    $region83: #{blip_retrieval_forward.6} parent=1 // pred_check_branch
      %1095 = sbr.rel (0) target = $region85
    $region84: #{blip_retrieval_forward.6} parent=1 // pred_region
      _
    $region85: #{blip_retrieval_forward.6} parent=1 // pred_fallthru
      _
    // Predicated region
    $region86: #{blip_retrieval_forward.6} parent=1 // pred_check
      _
    $region87: #{blip_retrieval_forward.6} parent=1 // pred_check_branch
      %1097 = sbr.rel (0) target = $region89
    $region88: #{blip_retrieval_forward.6} parent=1 // pred_region
      _
    $region89: #{blip_retrieval_forward.6} parent=1 // pred_fallthru
      _
    // Predicated region
    $region90: #{blip_retrieval_forward.6} parent=1 // pred_check
      _
    $region91: #{blip_retrieval_forward.6} parent=1 // pred_check_branch
      %1099 = sbr.rel (0) target = $region93
    $region92: #{blip_retrieval_forward.6} parent=1 // pred_region
      _
    $region93: #{blip_retrieval_forward.6} parent=1 // pred_fallthru
      _
    %1100 = vsyncpa [#allocation12], 1

// kernel: blip_retrieval_forward.7
$region0: #{blip_retrieval_forward.7}
  #allocation0 [shape = 'u32[]', space=smem, size = 0x4, offset = 0x4, fixed_abs, tag = 'smem constant byte address 0x4 - core index']
  #allocation1 [shape = 'u32[144,128]{1,0:T(1,128)}', space=vmem, size = 0x12000, scoped, tag = 'internal scratch']
  #allocation2 [shape = 'f32[8,32]{1,0:T(8,128)}', space=vmem, size = 0x1000, scoped, tag = 'scratch operand']
  %s0 = inlined_call_operand.vmem [shape: f32[8,192], index: 0, kind: input, shape index: {}]
  %s1 = inlined_call_operand.vmem [shape: f32[192,32], index: 1, kind: input, shape index: {}]
  %s2 = inlined_call_operand.vmem [shape: f32[1,32], index: 2, kind: input, shape index: {}]
  %s3 = inlined_call_operand.vmem [shape: f32[8,32], index: 3, kind: output, shape index: {}]
  %s4 = sld [smem:[#allocation0]]
  $region30: #{blip_retrieval_forward.7} parent=0
    _
  %s6 = ssub.s32 1, %s4
  %s7 = scalar_select 0, %s6, %s4
  // Predicated region
  $region2: #{blip_retrieval_forward.7} parent=0 // pred_check
    _
  $region3: #{blip_retrieval_forward.7} parent=0 // pred_check_branch
    %9 = sbr.rel (0) target = $region5
  $region4: #{blip_retrieval_forward.7} parent=0 // pred_region
    _
  $region5: #{blip_retrieval_forward.7} parent=0 // pred_fallthru
    _
  // Predicated region
  $region6: #{blip_retrieval_forward.7} parent=0 // pred_check
    _
  $region7: #{blip_retrieval_forward.7} parent=0 // pred_check_branch
    %11 = sbr.rel (0) target = $region9
  $region8: #{blip_retrieval_forward.7} parent=0 // pred_region
    _
  $region9: #{blip_retrieval_forward.7} parent=0 // pred_fallthru
    _
  // Predicated region
  $region10: #{blip_retrieval_forward.7} parent=0 // pred_check
    _
  $region11: #{blip_retrieval_forward.7} parent=0 // pred_check_branch
    %13 = sbr.rel (0) target = $region13
  $region12: #{blip_retrieval_forward.7} parent=0 // pred_region
    _
  $region13: #{blip_retrieval_forward.7} parent=0 // pred_fallthru
    _
  %p14 = scmp.eq.s32.totalorder 0, 0
  // Predicated region
  $region14: #{blip_retrieval_forward.7} parent=0 // pred_check
    %p15 = pneg %p14
  $region15: #{blip_retrieval_forward.7} parent=0 // pred_check_branch
    %17 = sbr.rel (%p15) target = $region17
  $region16: #{blip_retrieval_forward.7} parent=0 // pred_region
    %vm18 = vcmask 261120
    %19 = vst.msk [vmem:[#allocation2] sm:$0xff] %vm18, 0.0
  $region17: #{blip_retrieval_forward.7} parent=0 // pred_fallthru
    _
  %v20 = vld [vmem:[#allocation2] sm:$0xff]
  %v21 = vld [vmem:[%s0] sm:$0xff]
  %v22 = vld [vmem:[%s0 + $0x8] sm:$0xff]
  %v23 = vld [vmem:[%s1] sm:$0xff]
  %v24 = vld [vmem:[%s1 + $0x8] sm:$0xff]
  %v25 = vld [vmem:[%s1 + $0x10] sm:$0xff]
  %v26 = vld [vmem:[%s1 + $0x18] sm:$0xff]
  %v27 = vld [vmem:[%s1 + $0x20] sm:$0xff]
  %v28 = vld [vmem:[%s1 + $0x28] sm:$0xff]
  %v29 = vld [vmem:[%s1 + $0x30] sm:$0xff]
  %v30 = vld [vmem:[%s1 + $0x38] sm:$0xff]
  %v31 = vld [vmem:[%s1 + $0x40] sm:$0xff]
  %v32 = vld [vmem:[%s1 + $0x48] sm:$0xff]
  %v33 = vld [vmem:[%s1 + $0x50] sm:$0xff]
  %v34 = vld [vmem:[%s1 + $0x58] sm:$0xff]
  %v35 = vld [vmem:[%s1 + $0x60] sm:$0xff]
  %v36 = vld [vmem:[%s1 + $0x68] sm:$0xff]
  %v37 = vld [vmem:[%s1 + $0x70] sm:$0xff]
  %v38 = vld [vmem:[%s1 + $0x78] sm:$0xff]
  %v39 = vld [vmem:[%s1 + $0x80] sm:$0xff]
  %v40 = vld [vmem:[%s1 + $0x88] sm:$0xff]
  %v41 = vld [vmem:[%s1 + $0x90] sm:$0xff]
  %v42 = vld [vmem:[%s1 + $0x98] sm:$0xff]
  %v43 = vld [vmem:[%s1 + $0xa0] sm:$0xff]
  %v44 = vld [vmem:[%s1 + $0xa8] sm:$0xff]
  %v45 = vld [vmem:[%s1 + $0xb0] sm:$0xff]
  %v46 = vld [vmem:[%s1 + $0xb8] sm:$0xff]
  %vm47 = vcmask 523264
  %v49 = vsel %vm47, %v22, 0
  %51 = vmatprep.subr.mxu0 0.0
  %52 = vmatpush1.msra.mxu0 %v38
  %53 = vmatprep.subr.mxu0 0.0
  %54 = vmatpush1.msra.mxu0 %v37
  %55 = vmatprep.subr.mxu0 0.0
  %56 = vmatpush1.msra.mxu0 %v36
  %57 = vmatprep.subr.mxu0 0.0
  %58 = vmatpush1.msra.mxu0 %v35
  %59 = vmatprep.subr.mxu0 0.0
  %60 = vmatpush1.msra.mxu0 %v34
  %61 = vmatprep.subr.mxu0 0.0
  %62 = vmatpush1.msra.mxu0 %v33
  %63 = vmatprep.subr.mxu0 0.0
  %64 = vmatpush1.msra.mxu0 %v32
  %65 = vmatprep.subr.mxu0 0.0
  %66 = vmatpush1.msra.mxu0 %v31
  %67 = vmatprep.subr.mxu0 0.0
  %68 = vmatpush1.msra.mxu0 %v30
  %69 = vmatprep.subr.mxu0 0.0
  %70 = vmatpush1.msra.mxu0 %v29
  %71 = vmatprep.subr.mxu0 0.0
  %72 = vmatpush1.msra.mxu0 %v28
  %73 = vmatprep.subr.mxu0 0.0
  %74 = vmatpush1.msra.mxu0 %v27
  %75 = vmatprep.subr.mxu0 0.0
  %76 = vmatpush1.msra.mxu0 %v26
  %77 = vmatprep.subr.mxu0 0.0
  %78 = vmatpush1.msra.mxu0 %v25
  %79 = vmatprep.subr.mxu0 0.0
  %80 = vmatpush1.msra.mxu0 %v24
  %81 = vmatprep.subr.mxu0 0.0
  %82 = vmatpush1.msra.mxu0 %v23
  %83 = vmatprep.subr.mxu0 0.0
  %84 = vmatpush2.msra.mxu0 0.0
  %85 = vmatprep.subr.mxu0 0.0
  %86 = vmatpush2.msra.mxu0 0.0
  %87 = vmatprep.subr.mxu0 0.0
  %88 = vmatpush2.msra.mxu0 0.0
  %89 = vmatprep.subr.mxu0 0.0
  %90 = vmatpush2.msra.mxu0 0.0
  %91 = vmatprep.subr.mxu0 0.0
  %92 = vmatpush2.msra.mxu0 0.0
  %93 = vmatprep.subr.mxu0 0.0
  %94 = vmatpush2.msra.mxu0 0.0
  %95 = vmatprep.subr.mxu0 0.0
  %96 = vmatpush2.msra.mxu0 0.0
  %97 = vmatprep.subr.mxu0 0.0
  %98 = vmatpush2.msra.mxu0 0.0
  %99 = vmatprep.subr.mxu0 0.0
  %100 = vmatpush2.msra.mxu0 %v46
  %101 = vmatprep.subr.mxu0 0.0
  %102 = vmatpush2.msra.mxu0 %v45
  %103 = vmatprep.subr.mxu0 0.0
  %104 = vmatpush2.msra.mxu0 %v44
  %105 = vmatprep.subr.mxu0 0.0
  %106 = vmatpush2.msra.mxu0 %v43
  %107 = vmatprep.subr.mxu0 0.0
  %108 = vmatpush2.msra.mxu0 %v42
  %109 = vmatprep.subr.mxu0 0.0
  %110 = vmatpush2.msra.mxu0 %v41
  %111 = vmatprep.subr.mxu0 0.0
  %112 = vmatpush2.msra.mxu0 %v40
  %113 = vmatprep.subr.mxu0 0.0
  %114 = vmatpush2.msra.mxu0 %v39
  %115 = vmatprep.mubr.f32.mxu0 %v49
  %116 = vmatmul.mubr.f32.gmra.mxu0 %v21
  %v117 = vpop.f32.mrf.mxu0
  %v118 = vadd.f32 0.0, %v117
  %v119 = vpop.f32.mrf.mxu0
  %120 = vdwg.mxu0
  %v121 = vadd.f32 %v20, %v118
  %vm122 = vcmask 261120
  %123 = vst.msk [vmem:[#allocation2] sm:$0xff] %vm122, %v121
  // Predicated region
  $region18: #{blip_retrieval_forward.7} parent=0 // pred_check
    %p124 = pneg %p14
  $region19: #{blip_retrieval_forward.7} parent=0 // pred_check_branch
    %126 = sbr.rel (%p124) target = $region21
  $region20: #{blip_retrieval_forward.7} parent=0 // pred_region
    %v127 = vld [vmem:[#allocation2] sm:$0xff]
    %v128 = vld [vmem:[%s2] sm:$0x1]
    %v130 = vlaneseq
    %v131 = vshrl.u32 %v130, 7
    %v132 = vsub.s32 0, %v131
    %v133 = vrot.slane %v128, %v132
    %v135 = vadd.f32 %v127, %v133
    %136 = vst.msk [vmem:[%s3] sm:$0xff] %vm122, %v135
  $region21: #{blip_retrieval_forward.7} parent=0 // pred_fallthru
    _
  // Predicated region
  $region22: #{blip_retrieval_forward.7} parent=0 // pred_check
    _
  $region23: #{blip_retrieval_forward.7} parent=0 // pred_check_branch
    %138 = sbr.rel (0) target = $region25
  $region24: #{blip_retrieval_forward.7} parent=0 // pred_region
    _
  $region25: #{blip_retrieval_forward.7} parent=0 // pred_fallthru
    _
  // Predicated region
  $region26: #{blip_retrieval_forward.7} parent=0 // pred_check
    _
  $region27: #{blip_retrieval_forward.7} parent=0 // pred_check_branch
    %140 = sbr.rel (0) target = $region29
  $region28: #{blip_retrieval_forward.7} parent=0 // pred_region
    _
  $region29: #{blip_retrieval_forward.7} parent=0 // pred_fallthru
    _

// kernel: blip_retrieval_forward.8
$region0: #{blip_retrieval_forward.8}
  #allocation0 [shape = 'u32[]', space=smem, size = 0x4, offset = 0x4, fixed_abs, tag = 'smem constant byte address 0x4 - core index']
  #allocation1 [shape = 'u32[144,128]{1,0:T(1,128)}', space=vmem, size = 0x12000, scoped, tag = 'internal scratch']
  %s0 = inlined_call_operand.vmem [shape: f32[6,8,32], index: 0, kind: input, shape index: {}]
  %s1 = inlined_call_operand.vmem [shape: f32[6,8,1], index: 1, kind: input, shape index: {}]
  %s2 = inlined_call_operand.vmem [shape: f32[6,1,32], index: 2, kind: input, shape index: {}]
  %s3 = inlined_call_operand.vmem [shape: f32[32,32], index: 3, kind: input, shape index: {}]
  %s4 = inlined_call_operand.vmem [shape: f32[1,32], index: 4, kind: input, shape index: {}]
  %s5 = inlined_call_operand.vmem [shape: f32[32,32], index: 5, kind: input, shape index: {}]
  %s6 = inlined_call_operand.vmem [shape: f32[1,32], index: 6, kind: input, shape index: {}]
  %s7 = inlined_call_operand.vmem [shape: f32[6,8,32], index: 7, kind: output, shape index: {}]
  %s8 = sld [smem:[#allocation0]]
  $region61: #{blip_retrieval_forward.8} parent=0
    _
  %s10 = ssub.s32 1, %s8
  %s11 = scalar_select 0, %s10, %s8
  loop: start=0, step=1, limit=8
  $region2: #{blip_retrieval_forward.8} parent=0 // loop_pre_header
    _
  $region3: #{blip_retrieval_forward.8} parent=0 // loop_header
    %s13 = sphi 0, %s17
    %p14 = scmp.ge.s32.totalorder %s13, 8
    %s23 = sphi 0, %s25
    %s26 = sphi 0, %s23
    %s27 = sphi 0, %s26
    %s43 = sphi 0, %s27
    %s49 = sphi 0, %s51
    %s52 = sphi 0, %s49
    %s53 = sphi 0, %s52
    %s69 = sphi 0, %s53
    %s75 = sphi 0, %s77
    %s78 = sphi 0, %s75
    %s79 = sphi 0, %s78
    %s95 = sphi 0, %s79
    %s99 = sphi 0, %s99
    %s101 = sphi 0, %s99
    %s102 = sphi 0, %s101
    %s116 = sphi 0, %s102
    %s120 = sphi 0, %s120
    %s122 = sphi 0, %s120
    %s123 = sphi 0, %s122
    %s137 = sphi 0, %s123
    %s141 = sphi 0, %s141
    %s143 = sphi 0, %s141
    %s144 = sphi 0, %s143
    %s158 = sphi 0, %s144
    %s162 = sphi 0, %s162
    %s164 = sphi 0, %s162
    %s165 = sphi 0, %s164
    %s179 = sphi 0, %s165
    %s185 = sphi 0, %s187
    %s188 = sphi 0, %s185
    %s189 = sphi 0, %s188
    %s205 = sphi 0, %s189
  $region4: #{blip_retrieval_forward.8} parent=0 // loop_header_branch
    %16 = sbr.rel (%p14) target = $region8
  $region5: #{blip_retrieval_forward.8} parent=0 // loop_body
    %s18 = ssub.s32 %s13, 1
    %s19 = ssub.s32 %s13, 2
    %s20 = sadd.s32 %s13, 1
    %s21 = ssub.s32 %s13, %s20
    %p22 = scmp.eq.s32.totalorder %s21, 0
    %s24 = sadd.s32 %s23, 1
    %s25 = scalar_select %p22, %s23, %s24
    %p28 = pneg %p22
    %p29 = scmp.eq.s32.totalorder %s13, 5
    %p30 = por %p28, %p29
    %p31 = scmp.ne.s32.totalorder %s23, %s26
    %p32 = scmp.eq.s32.totalorder %s13, 0
    %p33 = por %p31, %p32
    %p34 = scmp.ne.s32.totalorder %s23, %s26
    %p35 = scmp.eq.s32.totalorder %s18, 5
    %p36 = por %p34, %p35
    %p37 = scmp.ne.s32.totalorder %s26, %s27
    %p38 = scmp.eq.s32.totalorder %s18, 0
    %p39 = por %p37, %p38
    %p40 = scmp.ne.s32.totalorder %s26, %s27
    %p41 = scmp.eq.s32.totalorder %s19, 5
    %p42 = por %p40, %p41
    %p44 = scmp.ne.s32.totalorder %s27, %s43
    %p45 = scmp.eq.s32.totalorder %s19, 0
    %p46 = por %p44, %p45
    %s47 = ssub.s32 %s13, %s20
    %p48 = scmp.eq.s32.totalorder %s47, 0
    %s50 = sadd.s32 %s49, 1
    %s51 = scalar_select %p48, %s49, %s50
    %p54 = pneg %p48
    %p55 = scmp.eq.s32.totalorder %s13, 5
    %p56 = por %p54, %p55
    %p57 = scmp.ne.s32.totalorder %s49, %s52
    %p58 = scmp.eq.s32.totalorder %s13, 0
    %p59 = por %p57, %p58
    %p60 = scmp.ne.s32.totalorder %s49, %s52
    %p61 = scmp.eq.s32.totalorder %s18, 5
    %p62 = por %p60, %p61
    %p63 = scmp.ne.s32.totalorder %s52, %s53
    %p64 = scmp.eq.s32.totalorder %s18, 0
    %p65 = por %p63, %p64
    %p66 = scmp.ne.s32.totalorder %s52, %s53
    %p67 = scmp.eq.s32.totalorder %s19, 5
    %p68 = por %p66, %p67
    %p70 = scmp.ne.s32.totalorder %s53, %s69
    %p71 = scmp.eq.s32.totalorder %s19, 0
    %p72 = por %p70, %p71
    %s73 = ssub.s32 %s13, %s20
    %p74 = scmp.eq.s32.totalorder %s73, 0
    %s76 = sadd.s32 %s75, 1
    %s77 = scalar_select %p74, %s75, %s76
    %p80 = pneg %p74
    %p81 = scmp.eq.s32.totalorder %s13, 5
    %p82 = por %p80, %p81
    %p83 = scmp.ne.s32.totalorder %s75, %s78
    %p84 = scmp.eq.s32.totalorder %s13, 0
    %p85 = por %p83, %p84
    %p86 = scmp.ne.s32.totalorder %s75, %s78
    %p87 = scmp.eq.s32.totalorder %s18, 5
    %p88 = por %p86, %p87
    %p89 = scmp.ne.s32.totalorder %s78, %s79
    %p90 = scmp.eq.s32.totalorder %s18, 0
    %p91 = por %p89, %p90
    %p92 = scmp.ne.s32.totalorder %s78, %s79
    %p93 = scmp.eq.s32.totalorder %s19, 5
    %p94 = por %p92, %p93
    %p96 = scmp.ne.s32.totalorder %s79, %s95
    %p97 = scmp.eq.s32.totalorder %s19, 0
    %p98 = por %p96, %p97
    %s100 = sadd.s32 %s99, 1
    %p103 = scmp.eq.s32.totalorder %s13, 5
    %p104 = scmp.ne.s32.totalorder %s99, %s101
    %p105 = scmp.eq.s32.totalorder %s13, 0
    %p106 = por %p104, %p105
    %p107 = scmp.ne.s32.totalorder %s99, %s101
    %p108 = scmp.eq.s32.totalorder %s18, 5
    %p109 = por %p107, %p108
    %p110 = scmp.ne.s32.totalorder %s101, %s102
    %p111 = scmp.eq.s32.totalorder %s18, 0
    %p112 = por %p110, %p111
    %p113 = scmp.ne.s32.totalorder %s101, %s102
    %p114 = scmp.eq.s32.totalorder %s19, 5
    %p115 = por %p113, %p114
    %p117 = scmp.ne.s32.totalorder %s102, %s116
    %p118 = scmp.eq.s32.totalorder %s19, 0
    %p119 = por %p117, %p118
    %s121 = sadd.s32 %s120, 1
    %p124 = scmp.eq.s32.totalorder %s13, 5
    %p125 = scmp.ne.s32.totalorder %s120, %s122
    %p126 = scmp.eq.s32.totalorder %s13, 0
    %p127 = por %p125, %p126
    %p128 = scmp.ne.s32.totalorder %s120, %s122
    %p129 = scmp.eq.s32.totalorder %s18, 5
    %p130 = por %p128, %p129
    %p131 = scmp.ne.s32.totalorder %s122, %s123
    %p132 = scmp.eq.s32.totalorder %s18, 0
    %p133 = por %p131, %p132
    %p134 = scmp.ne.s32.totalorder %s122, %s123
    %p135 = scmp.eq.s32.totalorder %s19, 5
    %p136 = por %p134, %p135
    %p138 = scmp.ne.s32.totalorder %s123, %s137
    %p139 = scmp.eq.s32.totalorder %s19, 0
    %p140 = por %p138, %p139
    %s142 = sadd.s32 %s141, 1
    %p145 = scmp.eq.s32.totalorder %s13, 5
    %p146 = scmp.ne.s32.totalorder %s141, %s143
    %p147 = scmp.eq.s32.totalorder %s13, 0
    %p148 = por %p146, %p147
    %p149 = scmp.ne.s32.totalorder %s141, %s143
    %p150 = scmp.eq.s32.totalorder %s18, 5
    %p151 = por %p149, %p150
    %p152 = scmp.ne.s32.totalorder %s143, %s144
    %p153 = scmp.eq.s32.totalorder %s18, 0
    %p154 = por %p152, %p153
    %p155 = scmp.ne.s32.totalorder %s143, %s144
    %p156 = scmp.eq.s32.totalorder %s19, 5
    %p157 = por %p155, %p156
    %p159 = scmp.ne.s32.totalorder %s144, %s158
    %p160 = scmp.eq.s32.totalorder %s19, 0
    %p161 = por %p159, %p160
    %s163 = sadd.s32 %s162, 1
    %p166 = scmp.eq.s32.totalorder %s13, 5
    %p167 = scmp.ne.s32.totalorder %s162, %s164
    %p168 = scmp.eq.s32.totalorder %s13, 0
    %p169 = por %p167, %p168
    %p170 = scmp.ne.s32.totalorder %s162, %s164
    %p171 = scmp.eq.s32.totalorder %s18, 5
    %p172 = por %p170, %p171
    %p173 = scmp.ne.s32.totalorder %s164, %s165
    %p174 = scmp.eq.s32.totalorder %s18, 0
    %p175 = por %p173, %p174
    %p176 = scmp.ne.s32.totalorder %s164, %s165
    %p177 = scmp.eq.s32.totalorder %s19, 5
    %p178 = por %p176, %p177
    %p180 = scmp.ne.s32.totalorder %s165, %s179
    %p181 = scmp.eq.s32.totalorder %s19, 0
    %p182 = por %p180, %p181
    %s183 = ssub.s32 %s13, %s20
    %p184 = scmp.eq.s32.totalorder %s183, 0
    %s186 = sadd.s32 %s185, 1
    %s187 = scalar_select %p184, %s185, %s186
    %p190 = pneg %p184
    %p191 = scmp.eq.s32.totalorder %s13, 5
    %p192 = por %p190, %p191
    %p193 = scmp.ne.s32.totalorder %s185, %s188
    %p194 = scmp.eq.s32.totalorder %s13, 0
    %p195 = por %p193, %p194
    %p196 = scmp.ne.s32.totalorder %s185, %s188
    %p197 = scmp.eq.s32.totalorder %s18, 5
    %p198 = por %p196, %p197
    %p199 = scmp.ne.s32.totalorder %s188, %s189
    %p200 = scmp.eq.s32.totalorder %s18, 0
    %p201 = por %p199, %p200
    %p202 = scmp.ne.s32.totalorder %s188, %s189
    %p203 = scmp.eq.s32.totalorder %s19, 5
    %p204 = por %p202, %p203
    %p206 = scmp.ne.s32.totalorder %s189, %s205
    %p207 = scmp.eq.s32.totalorder %s19, 0
    %p208 = por %p206, %p207
    %p209 = scmp.le.s32.totalorder 1, %s13
    %p210 = scmp.lt.s32.totalorder %s13, 7
    %p211 = pnand %p209, %p210
    %p212 = pneg %p211
    // Predicated region
    $region9: #{blip_retrieval_forward.8} parent=5 // pred_check
      _
    $region10: #{blip_retrieval_forward.8} parent=5 // pred_check_branch
      %214 = sbr.rel (%p211) target = $region12
    $region11: #{blip_retrieval_forward.8} parent=5 // pred_region
      %s215 = ssub.s32 %s13, 1
      // Predicated region
      $region13: #{blip_retrieval_forward.8} parent=11 // pred_check
        %p216 = pneg %p112
      $region14: #{blip_retrieval_forward.8} parent=11 // pred_check_branch
        %218 = sbr.rel (%p216) target = $region16
      $region15: #{blip_retrieval_forward.8} parent=11 // pred_region
        _
      $region16: #{blip_retrieval_forward.8} parent=11 // pred_fallthru
        _
      // Predicated region
      $region17: #{blip_retrieval_forward.8} parent=11 // pred_check
        %p219 = pneg %p133
      $region18: #{blip_retrieval_forward.8} parent=11 // pred_check_branch
        %221 = sbr.rel (%p219) target = $region20
      $region19: #{blip_retrieval_forward.8} parent=11 // pred_region
        _
      $region20: #{blip_retrieval_forward.8} parent=11 // pred_fallthru
        _
      // Predicated region
      $region21: #{blip_retrieval_forward.8} parent=11 // pred_check
        %p222 = pneg %p154
      $region22: #{blip_retrieval_forward.8} parent=11 // pred_check_branch
        %224 = sbr.rel (%p222) target = $region24
      $region23: #{blip_retrieval_forward.8} parent=11 // pred_region
        _
      $region24: #{blip_retrieval_forward.8} parent=11 // pred_fallthru
        _
      // Predicated region
      $region25: #{blip_retrieval_forward.8} parent=11 // pred_check
        %p225 = pneg %p175
      $region26: #{blip_retrieval_forward.8} parent=11 // pred_check_branch
        %227 = sbr.rel (%p225) target = $region28
      $region27: #{blip_retrieval_forward.8} parent=11 // pred_region
        _
      $region28: #{blip_retrieval_forward.8} parent=11 // pred_fallthru
        _
    $region12: #{blip_retrieval_forward.8} parent=5 // pred_fallthru
      _
    %p228 = scmp.lt.s32.totalorder %s13, 6
    // Predicated region
    $region29: #{blip_retrieval_forward.8} parent=5 // pred_check
      %p229 = pneg %p228
    $region30: #{blip_retrieval_forward.8} parent=5 // pred_check_branch
      %231 = sbr.rel (%p229) target = $region32
    $region31: #{blip_retrieval_forward.8} parent=5 // pred_region
      // Predicated region
      $region33: #{blip_retrieval_forward.8} parent=31 // pred_check
        %p232 = pneg %p33
      $region34: #{blip_retrieval_forward.8} parent=31 // pred_check_branch
        %234 = sbr.rel (%p232) target = $region36
      $region35: #{blip_retrieval_forward.8} parent=31 // pred_region
        %p235 = scmp.lt.s32.totalorder %s13, 5
        %s236 = scalar_select %p235, %s13, 5
        %s237 = smul.addr %s236, 8
        %s238 = scalar_lea.vmem %s0, %s237
      $region36: #{blip_retrieval_forward.8} parent=31 // pred_fallthru
        _
      // Predicated region
      $region37: #{blip_retrieval_forward.8} parent=31 // pred_check
        %p239 = pneg %p59
      $region38: #{blip_retrieval_forward.8} parent=31 // pred_check_branch
        %241 = sbr.rel (%p239) target = $region40
      $region39: #{blip_retrieval_forward.8} parent=31 // pred_region
        %p242 = scmp.lt.s32.totalorder %s13, 5
        %s243 = scalar_select %p242, %s13, 5
        %s244 = smul.addr %s243, 8
        %s245 = scalar_lea.vmem %s1, %s244
      $region40: #{blip_retrieval_forward.8} parent=31 // pred_fallthru
        _
      // Predicated region
      $region41: #{blip_retrieval_forward.8} parent=31 // pred_check
        %p246 = pneg %p85
      $region42: #{blip_retrieval_forward.8} parent=31 // pred_check_branch
        %248 = sbr.rel (%p246) target = $region44
      $region43: #{blip_retrieval_forward.8} parent=31 // pred_region
        %p249 = scmp.lt.s32.totalorder %s13, 5
        %s250 = scalar_select %p249, %s13, 5
        %s251 = scalar_lea.vmem %s2, %s250
      $region44: #{blip_retrieval_forward.8} parent=31 // pred_fallthru
        _
    $region32: #{blip_retrieval_forward.8} parent=5 // pred_fallthru
      _
    %p252 = scmp.le.s32.totalorder 1, %s13
    %p253 = scmp.lt.s32.totalorder %s13, 7
    %p254 = pnand %p252, %p253
    %p255 = pneg %p254
    // Predicated region
    $region45: #{blip_retrieval_forward.8} parent=5 // pred_check
      _
    $region46: #{blip_retrieval_forward.8} parent=5 // pred_check_branch
      %257 = sbr.rel (%p254) target = $region48
    $region47: #{blip_retrieval_forward.8} parent=5 // pred_region
      %s258 = ssub.s32 %s13, 1
      %p259 = scmp.lt.s32.totalorder %s18, 5
      %s260 = scalar_select %p259, %s18, 5
      %s261 = smul.addr %s260, 8
      %s262 = scalar_lea.vmem %s0, %s261
      %p263 = pneg %p39
      %p264 = pneg %p36
      %p265 = scmp.lt.s32.totalorder %s18, 5
      %s266 = scalar_select %p265, %s18, 5
      %s267 = smul.addr %s266, 8
      %s268 = scalar_lea.vmem %s1, %s267
      %p269 = pneg %p65
      %p270 = pneg %p62
      %p271 = scmp.lt.s32.totalorder %s18, 5
      %s272 = scalar_select %p271, %s18, 5
      %s273 = scalar_lea.vmem %s2, %s272
      %p274 = pneg %p91
      %p275 = pneg %p88
      %p276 = pneg %p112
      %p277 = pneg %p109
      %p278 = pneg %p133
      %p279 = pneg %p130
      %p280 = pneg %p154
      %p281 = pneg %p151
      %p282 = pneg %p175
      %p283 = pneg %p172
      %p284 = pneg %p201
      %p285 = pneg %p198
      %p286 = scmp.lt.s32.totalorder %s18, 5
      %s287 = scalar_select %p286, %s18, 5
      %s288 = smul.addr %s287, 8
      %s289 = scalar_lea.vmem %s7, %s288
      %p290 = scmp.lt.s32.totalorder %s18, 5
      %s291 = scalar_select %p290, %s18, 5
      %s292 = smul.addr %s291, 8
      %s293 = scalar_lea.vmem %s0, %s292
      %p294 = scmp.lt.s32.totalorder %s18, 5
      %s295 = scalar_select %p294, %s18, 5
      %s296 = smul.addr %s295, 8
      %s297 = scalar_lea.vmem %s1, %s296
      %p298 = scmp.lt.s32.totalorder %s18, 5
      %s299 = scalar_select %p298, %s18, 5
      %s300 = scalar_lea.vmem %s2, %s299
      %p301 = scmp.lt.s32.totalorder %s18, 5
      %s302 = scalar_select %p301, %s18, 5
      %s303 = smul.addr %s302, 8
      %s304 = scalar_lea.vmem %s7, %s303
      %v305 = vld [vmem:[%s293] sm:$0xff]
      %v306 = vld [vmem:[%s3] sm:$0xff]
      %v307 = vld [vmem:[%s3 + $0x8] sm:$0xff]
      %v308 = vld [vmem:[%s3 + $0x10] sm:$0xff]
      %v309 = vld [vmem:[%s3 + $0x18] sm:$0xff]
      %v310 = vld [vmem:[%s4] sm:$0x1]
      %v312 = vlaneseq
      %v313 = vshrl.u32 %v312, 7
      %v314 = vsub.s32 0, %v313
      %v315 = vrot.slane %v310, %v314
      %vm317 = vcmask 261120
      %v319 = vsel %vm317, %v305, 0
      %321 = vmatprep.subr.mxu0 0.0
      %322 = vmatpush1.msra.mxu0 0.0
      %323 = vmatprep.subr.mxu0 0.0
      %324 = vmatpush1.msra.mxu0 0.0
      %325 = vmatprep.subr.mxu0 0.0
      %326 = vmatpush1.msra.mxu0 0.0
      %327 = vmatprep.subr.mxu0 0.0
      %328 = vmatpush1.msra.mxu0 0.0
      %329 = vmatprep.subr.mxu0 0.0
      %330 = vmatpush1.msra.mxu0 0.0
      %331 = vmatprep.subr.mxu0 0.0
      %332 = vmatpush1.msra.mxu0 0.0
      %333 = vmatprep.subr.mxu0 0.0
      %334 = vmatpush1.msra.mxu0 0.0
      %335 = vmatprep.subr.mxu0 0.0
      %336 = vmatpush1.msra.mxu0 0.0
      %337 = vmatprep.subr.mxu0 0.0
      %338 = vmatpush1.msra.mxu0 0.0
      %339 = vmatprep.subr.mxu0 0.0
      %340 = vmatpush1.msra.mxu0 0.0
      %341 = vmatprep.subr.mxu0 0.0
      %342 = vmatpush1.msra.mxu0 0.0
      %343 = vmatprep.subr.mxu0 0.0
      %344 = vmatpush1.msra.mxu0 0.0
      %345 = vmatprep.subr.mxu0 0.0
      %346 = vmatpush1.msra.mxu0 %v309
      %347 = vmatprep.subr.mxu0 0.0
      %348 = vmatpush1.msra.mxu0 %v308
      %349 = vmatprep.subr.mxu0 0.0
      %350 = vmatpush1.msra.mxu0 %v307
      %351 = vmatprep.subr.mxu0 0.0
      %352 = vmatpush1.msra.mxu0 %v306
      %353 = vmatprep.subr.mxu0 0.0
      %354 = vmatpush2.msra.mxu0 0.0
      %355 = vmatprep.subr.mxu0 0.0
      %356 = vmatpush2.msra.mxu0 0.0
      %357 = vmatprep.subr.mxu0 0.0
      %358 = vmatpush2.msra.mxu0 0.0
      %359 = vmatprep.subr.mxu0 0.0
      %360 = vmatpush2.msra.mxu0 0.0
      %361 = vmatprep.subr.mxu0 0.0
      %362 = vmatpush2.msra.mxu0 0.0
      %363 = vmatprep.subr.mxu0 0.0
      %364 = vmatpush2.msra.mxu0 0.0
      %365 = vmatprep.subr.mxu0 0.0
      %366 = vmatpush2.msra.mxu0 0.0
      %367 = vmatprep.subr.mxu0 0.0
      %368 = vmatpush2.msra.mxu0 0.0
      %369 = vmatprep.subr.mxu0 0.0
      %370 = vmatpush2.msra.mxu0 0.0
      %371 = vmatprep.subr.mxu0 0.0
      %372 = vmatpush2.msra.mxu0 0.0
      %373 = vmatprep.subr.mxu0 0.0
      %374 = vmatpush2.msra.mxu0 0.0
      %375 = vmatprep.subr.mxu0 0.0
      %376 = vmatpush2.msra.mxu0 0.0
      %377 = vmatprep.subr.mxu0 0.0
      %378 = vmatpush2.msra.mxu0 0.0
      %379 = vmatprep.subr.mxu0 0.0
      %380 = vmatpush2.msra.mxu0 0.0
      %381 = vmatprep.subr.mxu0 0.0
      %382 = vmatpush2.msra.mxu0 0.0
      %383 = vmatprep.subr.mxu0 0.0
      %384 = vmatpush2.msra.mxu0 0.0
      %385 = vmatprep.mubr.f32.mxu0 0.0
      %386 = vmatmul.mubr.f32.gmra.mxu0 %v319
      %v387 = vpop.f32.mrf.mxu0
      %v388 = vadd.f32 %v315, %v387
      %v389 = vpop.f32.mrf.mxu0
      %390 = vdwg.mxu0
      %v391 = vld [vmem:[%s297] sm:$0xff]
      %393 = vset.pattern.permute.xlu0 0
      %394 = vperm.xlu0 %393, %v391
      %v395 = vpop.permute.xlu0 %394
      %v397 = vmul.f32 %v388, %v395
      %v398 = vld [vmem:[%s300] sm:$0x1]
      %v399 = vld [vmem:[%s5] sm:$0xff]
      %v400 = vld [vmem:[%s5 + $0x8] sm:$0xff]
      %v401 = vld [vmem:[%s5 + $0x10] sm:$0xff]
      %v402 = vld [vmem:[%s5 + $0x18] sm:$0xff]
      %v403 = vld [vmem:[%s6] sm:$0x1]
      %v405 = vsel %vm317, %v398, 0
      %407 = vmatprep.subr.mxu0 0.0
      %408 = vmatpush1.msra.mxu0 0.0
      %409 = vmatprep.subr.mxu0 0.0
      %410 = vmatpush1.msra.mxu0 0.0
      %411 = vmatprep.subr.mxu0 0.0
      %412 = vmatpush1.msra.mxu0 0.0
      %413 = vmatprep.subr.mxu0 0.0
      %414 = vmatpush1.msra.mxu0 0.0
      %415 = vmatprep.subr.mxu0 0.0
      %416 = vmatpush1.msra.mxu0 0.0
      %417 = vmatprep.subr.mxu0 0.0
      %418 = vmatpush1.msra.mxu0 0.0
      %419 = vmatprep.subr.mxu0 0.0
      %420 = vmatpush1.msra.mxu0 0.0
      %421 = vmatprep.subr.mxu0 0.0
      %422 = vmatpush1.msra.mxu0 0.0
      %423 = vmatprep.subr.mxu0 0.0
      %424 = vmatpush1.msra.mxu0 0.0
      %425 = vmatprep.subr.mxu0 0.0
      %426 = vmatpush1.msra.mxu0 0.0
      %427 = vmatprep.subr.mxu0 0.0
      %428 = vmatpush1.msra.mxu0 0.0
      %429 = vmatprep.subr.mxu0 0.0
      %430 = vmatpush1.msra.mxu0 0.0
      %431 = vmatprep.subr.mxu0 0.0
      %432 = vmatpush1.msra.mxu0 %v402
      %433 = vmatprep.subr.mxu0 0.0
      %434 = vmatpush1.msra.mxu0 %v401
      %435 = vmatprep.subr.mxu0 0.0
      %436 = vmatpush1.msra.mxu0 %v400
      %437 = vmatprep.subr.mxu0 0.0
      %438 = vmatpush1.msra.mxu0 %v399
      %439 = vmatprep.subr.mxu0 0.0
      %440 = vmatpush2.msra.mxu0 0.0
      %441 = vmatprep.subr.mxu0 0.0
      %442 = vmatpush2.msra.mxu0 0.0
      %443 = vmatprep.subr.mxu0 0.0
      %444 = vmatpush2.msra.mxu0 0.0
      %445 = vmatprep.subr.mxu0 0.0
      %446 = vmatpush2.msra.mxu0 0.0
      %447 = vmatprep.subr.mxu0 0.0
      %448 = vmatpush2.msra.mxu0 0.0
      %449 = vmatprep.subr.mxu0 0.0
      %450 = vmatpush2.msra.mxu0 0.0
      %451 = vmatprep.subr.mxu0 0.0
      %452 = vmatpush2.msra.mxu0 0.0
      %453 = vmatprep.subr.mxu0 0.0
      %454 = vmatpush2.msra.mxu0 0.0
      %455 = vmatprep.subr.mxu0 0.0
      %456 = vmatpush2.msra.mxu0 0.0
      %457 = vmatprep.subr.mxu0 0.0
      %458 = vmatpush2.msra.mxu0 0.0
      %459 = vmatprep.subr.mxu0 0.0
      %460 = vmatpush2.msra.mxu0 0.0
      %461 = vmatprep.subr.mxu0 0.0
      %462 = vmatpush2.msra.mxu0 0.0
      %463 = vmatprep.subr.mxu0 0.0
      %464 = vmatpush2.msra.mxu0 0.0
      %465 = vmatprep.subr.mxu0 0.0
      %466 = vmatpush2.msra.mxu0 0.0
      %467 = vmatprep.subr.mxu0 0.0
      %468 = vmatpush2.msra.mxu0 0.0
      %469 = vmatprep.subr.mxu0 0.0
      %470 = vmatpush2.msra.mxu0 0.0
      %471 = vmatprep.mubr.f32.mxu0 0.0
      %472 = vmatmul.mubr.f32.gmra.mxu0 %v405
      %v473 = vpop.f32.mrf.mxu0
      %v474 = vadd.f32 %v403, %v473
      %v475 = vpop.f32.mrf.mxu0
      %476 = vdwg.mxu0
      %v477 = vlaneseq
      %v478 = vshrl.u32 %v477, 7
      %v479 = vsub.s32 0, %v478
      %v480 = vrot.slane %v474, %v479
      %v481 = vadd.f32 %v397, %v480
      %482 = vst.msk [vmem:[%s304] sm:$0xff] %vm317, %v481
      %p483 = scmp.lt.s32.totalorder %s18, 5
      %s484 = scalar_select %p483, %s18, 5
      %s485 = smul.addr %s484, 8
      %s486 = scalar_lea.vmem %s7, %s485
      // Predicated region
      $region49: #{blip_retrieval_forward.8} parent=47 // pred_check
        %p487 = pneg %p198
      $region50: #{blip_retrieval_forward.8} parent=47 // pred_check_branch
        %489 = sbr.rel (%p487) target = $region52
      $region51: #{blip_retrieval_forward.8} parent=47 // pred_region
        _
      $region52: #{blip_retrieval_forward.8} parent=47 // pred_fallthru
        _
    $region48: #{blip_retrieval_forward.8} parent=5 // pred_fallthru
      _
    %p490 = scmp.le.s32.totalorder 2, %s13
    // Predicated region
    $region53: #{blip_retrieval_forward.8} parent=5 // pred_check
      %p491 = pneg %p490
    $region54: #{blip_retrieval_forward.8} parent=5 // pred_check_branch
      %493 = sbr.rel (%p491) target = $region56
    $region55: #{blip_retrieval_forward.8} parent=5 // pred_region
      %s494 = ssub.s32 %s13, 2
      // Predicated region
      $region57: #{blip_retrieval_forward.8} parent=55 // pred_check
        %p495 = pneg %p204
      $region58: #{blip_retrieval_forward.8} parent=55 // pred_check_branch
        %497 = sbr.rel (%p495) target = $region60
      $region59: #{blip_retrieval_forward.8} parent=55 // pred_region
        %p498 = scmp.lt.s32.totalorder %s19, 5
        %s499 = scalar_select %p498, %s19, 5
        %s500 = smul.addr %s499, 8
        %s501 = scalar_lea.vmem %s7, %s500
      $region60: #{blip_retrieval_forward.8} parent=55 // pred_fallthru
        _
    $region56: #{blip_retrieval_forward.8} parent=5 // pred_fallthru
      _
  $region6: #{blip_retrieval_forward.8} parent=0 // loop_footer
    %s17 = sadd.s32 1, %s13
  $region7: #{blip_retrieval_forward.8} parent=0 // loop_footer_branch
    %12 = sbr.rel target = $region3
  $region8: #{blip_retrieval_forward.8} parent=0 // loop_exit
    _

// kernel: blip_retrieval_forward.9
$region0: #{blip_retrieval_forward.9}
  #allocation0 [shape = 'u32[]', space=smem, size = 0x4, offset = 0x4, fixed_abs, tag = 'smem constant byte address 0x4 - core index']
  #allocation1 [shape = 'u32[144,128]{1,0:T(1,128)}', space=vmem, size = 0x12000, scoped, tag = 'internal scratch']
  %s0 = inlined_call_operand.vmem [shape: f32[6,32], index: 0, kind: input, shape index: {}]
  %s1 = inlined_call_operand.vmem [shape: f32[32,128], index: 1, kind: input, shape index: {}]
  %s2 = inlined_call_operand.vmem [shape: f32[1,128], index: 2, kind: input, shape index: {}]
  %s3 = inlined_call_operand.hbm [shape: f32[1,1], index: 3, kind: output, shape index: {}]
  %s4 = sld [smem:[#allocation0]]
  $region22: #{blip_retrieval_forward.9} parent=0
    _
  %s6 = ssub.s32 1, %s4
  %s7 = scalar_select 0, %s6, %s4
  $region1: #{blip_retrieval_forward.9} parent=0
    #allocation2 [shape = 'u8[512]{0}', space=vmem, size = 0x400, scoped, tag = 'output window, operand 0, single buffered']
    #allocation3 [shape = 's32[1]{0}', space=sflag, size = 0x4, scoped, tag = 'scoped memory for blip_retrieval_forward.9']
    %8 = vsyncpa [#allocation3], 0
    // Predicated region
    $region2: #{blip_retrieval_forward.9} parent=1 // pred_check
      _
    $region3: #{blip_retrieval_forward.9} parent=1 // pred_check_branch
      %10 = sbr.rel (0) target = $region5
    $region4: #{blip_retrieval_forward.9} parent=1 // pred_region
      _
    $region5: #{blip_retrieval_forward.9} parent=1 // pred_fallthru
      _
    // Predicated region
    $region6: #{blip_retrieval_forward.9} parent=1 // pred_check
      _
    $region7: #{blip_retrieval_forward.9} parent=1 // pred_check_branch
      %12 = sbr.rel (0) target = $region9
    $region8: #{blip_retrieval_forward.9} parent=1 // pred_region
      _
    $region9: #{blip_retrieval_forward.9} parent=1 // pred_fallthru
      _
    // Predicated region
    $region10: #{blip_retrieval_forward.9} parent=1 // pred_check
      _
    $region11: #{blip_retrieval_forward.9} parent=1 // pred_check_branch
      %14 = sbr.rel (0) target = $region13
    $region12: #{blip_retrieval_forward.9} parent=1 // pred_region
      _
    $region13: #{blip_retrieval_forward.9} parent=1 // pred_fallthru
      _
    %v15 = vld [vmem:[%s0] sm:$0x3f]
    %v16 = vld [vmem:[%s1] sm:$0xff]
    %v17 = vld [vmem:[%s1 + $0x8] sm:$0xff]
    %v18 = vld [vmem:[%s1 + $0x10] sm:$0xff]
    %v19 = vld [vmem:[%s1 + $0x18] sm:$0xff]
    %v20 = vld [vmem:[%s2] sm:$0x1]
    %v22 = vlaneseq
    %v23 = vshrl.u32 %v22, 7
    %v24 = vsub.s32 0, %v23
    %v25 = vrot.slane %v20, %v24
    %vm27 = vcmask 261120
    %v29 = vsel %vm27, %v15, 0
    %31 = vmatprep.subr.mxu0 0.0
    %32 = vmatpush1.msra.mxu0 0.0
    %33 = vmatprep.subr.mxu0 0.0
    %34 = vmatpush1.msra.mxu0 0.0
    %35 = vmatprep.subr.mxu0 0.0
    %36 = vmatpush1.msra.mxu0 0.0
    %37 = vmatprep.subr.mxu0 0.0
    %38 = vmatpush1.msra.mxu0 0.0
    %39 = vmatprep.subr.mxu0 0.0
    %40 = vmatpush1.msra.mxu0 0.0
    %41 = vmatprep.subr.mxu0 0.0
    %42 = vmatpush1.msra.mxu0 0.0
    %43 = vmatprep.subr.mxu0 0.0
    %44 = vmatpush1.msra.mxu0 0.0
    %45 = vmatprep.subr.mxu0 0.0
    %46 = vmatpush1.msra.mxu0 0.0
    %47 = vmatprep.subr.mxu0 0.0
    %48 = vmatpush1.msra.mxu0 0.0
    %49 = vmatprep.subr.mxu0 0.0
    %50 = vmatpush1.msra.mxu0 0.0
    %51 = vmatprep.subr.mxu0 0.0
    %52 = vmatpush1.msra.mxu0 0.0
    %53 = vmatprep.subr.mxu0 0.0
    %54 = vmatpush1.msra.mxu0 0.0
    %55 = vmatprep.subr.mxu0 0.0
    %56 = vmatpush1.msra.mxu0 %v19
    %57 = vmatprep.subr.mxu0 0.0
    %58 = vmatpush1.msra.mxu0 %v18
    %59 = vmatprep.subr.mxu0 0.0
    %60 = vmatpush1.msra.mxu0 %v17
    %61 = vmatprep.subr.mxu0 0.0
    %62 = vmatpush1.msra.mxu0 %v16
    %63 = vmatprep.subr.mxu0 0.0
    %64 = vmatpush2.msra.mxu0 0.0
    %65 = vmatprep.subr.mxu0 0.0
    %66 = vmatpush2.msra.mxu0 0.0
    %67 = vmatprep.subr.mxu0 0.0
    %68 = vmatpush2.msra.mxu0 0.0
    %69 = vmatprep.subr.mxu0 0.0
    %70 = vmatpush2.msra.mxu0 0.0
    %71 = vmatprep.subr.mxu0 0.0
    %72 = vmatpush2.msra.mxu0 0.0
    %73 = vmatprep.subr.mxu0 0.0
    %74 = vmatpush2.msra.mxu0 0.0
    %75 = vmatprep.subr.mxu0 0.0
    %76 = vmatpush2.msra.mxu0 0.0
    %77 = vmatprep.subr.mxu0 0.0
    %78 = vmatpush2.msra.mxu0 0.0
    %79 = vmatprep.subr.mxu0 0.0
    %80 = vmatpush2.msra.mxu0 0.0
    %81 = vmatprep.subr.mxu0 0.0
    %82 = vmatpush2.msra.mxu0 0.0
    %83 = vmatprep.subr.mxu0 0.0
    %84 = vmatpush2.msra.mxu0 0.0
    %85 = vmatprep.subr.mxu0 0.0
    %86 = vmatpush2.msra.mxu0 0.0
    %87 = vmatprep.subr.mxu0 0.0
    %88 = vmatpush2.msra.mxu0 0.0
    %89 = vmatprep.subr.mxu0 0.0
    %90 = vmatpush2.msra.mxu0 0.0
    %91 = vmatprep.subr.mxu0 0.0
    %92 = vmatpush2.msra.mxu0 0.0
    %93 = vmatprep.subr.mxu0 0.0
    %94 = vmatpush2.msra.mxu0 0.0
    %95 = vmatprep.mubr.f32.mxu0 0.0
    %96 = vmatmul.mubr.f32.gmra.mxu0 %v29
    %v97 = vpop.f32.mrf.mxu0
    %v98 = vadd.f32 %v25, %v97
    %v99 = vpop.f32.mrf.mxu0
    %100 = vdwg.mxu0
    %v101 = vlaneseq
    %v102 = vshrl.u32 %v101, 7
    %v103 = vlaneseq
    %v104 = vand.u32 %v103, 127
    %vm105 = vcmp.lt.s32.totalorder %v104, 2
    %v106 = vsel %vm105, %v98, -1e+30
    %vm107 = vcmp.lt.s32.totalorder %v102, 2
    %v108 = vsel %vm107, 1, 0
    %vm109 = vcmp.eq.s32.totalorder %v104, %v108
    %v110 = vsel %vm109, 1, 0
    %v111 = vcvt.s32.f32 %v110
    %vm112 = vcmask 1045504
    %v113 = vsel %vm112, %v106, -inf
    %114 = vmax.xlane.f32.xlu0 %v113
    %v115 = vpop.xlane.xlu0 %114
    %v116 = vsub.f32 %v106, %v115
    %v117 = vmul.f32 %v116, 1.442695
    %v118 = vpow.pop %v117
    %v119 = vsel %vm112, %v118, 0.0
    %120 = vadd.xlane.f32.xlu0 %v119
    %v121 = vpop.xlane.xlu0 %120
    %v122 = vlog2.pop %v121
    %v123 = vmul.f32 %v122, 0.6931472
    %v124 = vadd.f32 %v115, %v123
    %v125 = vmul.f32 %v111, %v106
    %v126 = vsel %vm112, %v125, 0.0
    %127 = vadd.xlane.f32.xlu0 %v126
    %v128 = vpop.xlane.xlu0 %127
    %v129 = vsub.f32 %v124, %v128
    %v130 = vsel %vm112, %v129, 0.0
    %v131 = vrot.slane %v130, 4
    %v132 = vadd.f32 %v130, %v131
    %v133 = vrot.slane %v132, 2
    %v134 = vadd.f32 %v132, %v133
    %v135 = vrot.slane %v134, 1
    %v136 = vadd.f32 %v134, %v135
    %v137 = vmul.f32 %v136, 0.16666667
    %vm138 = vcmask 0
    %139 = vst.msk [vmem:[#allocation2] sm:$0x1] %vm138, %v137
    // Predicated region
    $region14: #{blip_retrieval_forward.9} parent=1 // pred_check
      _
    $region15: #{blip_retrieval_forward.9} parent=1 // pred_check_branch
      %141 = sbr.rel (0) target = $region17
    $region16: #{blip_retrieval_forward.9} parent=1 // pred_region
      %s143 = ssub.s32 16, 16
      %144 = vsyncadd [#allocation3], %s143
      %s146 = sshll.u32 [#allocation2], 4
      %s147 = int_to_ptr.vmem [resolvable:$true] %s146
      %149 = dma.vmem_to_hbm [thread:$0]  %s147, 16, %s3, [#allocation3]
    $region17: #{blip_retrieval_forward.9} parent=1 // pred_fallthru
      _
    // Predicated region
    $region18: #{blip_retrieval_forward.9} parent=1 // pred_check
      _
    $region19: #{blip_retrieval_forward.9} parent=1 // pred_check_branch
      %151 = sbr.rel (0) target = $region21
    $region20: #{blip_retrieval_forward.9} parent=1 // pred_region
      %152 = dma.done [#allocation3], 16
    $region21: #{blip_retrieval_forward.9} parent=1 // pred_fallthru
      _
    %153 = vsyncpa [#allocation3], 1

</llo_original>
